<compile_context>
chip_gen: v6e
topology: v6e:2x2x1
jax: 0.10.0
libtpu: 0.0.40
codegen_flags: <defaults>
</compile_context>

<pallas_src>
import functools

import jax
import jax.numpy as jnp
from jax import lax
from jax.experimental import pallas as pl
from jax.experimental.pallas import tpu as pltpu


def _round_up(v, m):
    return (v + m - 1) // m * m


@functools.lru_cache(maxsize=None)
def _vmem_limit_bytes():
    """Explicit scoped-VMEM budget (defaults are only 16/32 MiB).

    ~100 MiB on v5e/v6e (128 MiB physical), ~48 MiB on v7x (64 MiB physical),
    leaving headroom for the double-buffered input/output blocks.
    """
    phys = 64 * 1024 * 1024  # conservative fallback (v7x physical VMEM)
    try:
        phys = int(pltpu.get_tpu_info().vmem_capacity_bytes)
    except Exception:
        pass
    return int(min(phys - 16 * 1024 * 1024, 100 * 1024 * 1024))


# --------------------------------------------------------------------------
# Fused kernel: one batch element per grid step, everything stays in VMEM.
# --------------------------------------------------------------------------
def _down_fused_kernel(x_ref, w1_ref, w2_ref, o_ref, f1_ref, f2_ref, *,
                       Hp, Wp, Cin, Cmid, P, compute_dtype):
    # x_ref : (1, Hp*Wp, 4*Cin)  per-batch block, 2x2 pool window on the lanes
    # w1_ref: (9, Cin, Cmid)     packed conv1 weights (tap-major), bf16
    # w2_ref: (9, Cmid, Cout)    packed conv2 weights, bf16
    # o_ref : (1, Hp*Wp, Cout)   per-batch output block
    # f1/f2 : zero-halo'd activation buffers, row stride == Wp, compute_dtype
    M = Hp * Wp
    data_lo = P + Wp            # flat row of pooled pixel (0, 0)
    data_hi = data_lo + M       # first bottom-halo row

    # ---- 1. MaxPool2d(2): the four pool taps live on the lane axis, so the
    #         pool is two lane-sliced maxes — no strided loads, no reshapes.
    x = x_ref[0]                                              # (M, 4*Cin)
    pooled = jnp.maximum(
        jnp.maximum(x[:, 0 * Cin:1 * Cin], x[:, 1 * Cin:2 * Cin]),
        jnp.maximum(x[:, 2 * Cin:3 * Cin], x[:, 3 * Cin:4 * Cin]))

    # ---- 2. Zero ONLY the halo head/tail rows (the data region is fully
    #         overwritten below), then one contiguous store of the pooled slab.
    f1_ref[0:data_lo, :] = jnp.zeros((data_lo, Cin), compute_dtype)
    f1_ref[data_hi:f1_ref.shape[0], :] = jnp.zeros(
        (f1_ref.shape[0] - data_hi, Cin), compute_dtype)
    f2_ref[0:data_lo, :] = jnp.zeros((data_lo, Cmid), compute_dtype)
    f2_ref[data_hi:f2_ref.shape[0], :] = jnp.zeros(
        (f2_ref.shape[0] - data_hi, Cmid), compute_dtype)
    f1_ref[data_lo:data_hi, :] = pooled.astype(compute_dtype)

    # Image-border column masks, built once from an (M, 1) iota (broadcast
    # over lanes inside the where).
    col = lax.broadcasted_iota(jnp.int32, (M, 1), 0) % Wp
    not_first_col = col != 0          # kills dx == 0 taps at x == 0
    not_last_col = col != (Wp - 1)    # kills dx == 2 taps at x == Wp - 1

    def conv3x3(src_ref, w_ref):
        """3x3 'SAME' conv as 9 accumulating tap matmuls (no im2col copy)."""
        acc = None
        for dy in range(3):
            for dx in range(3):
                # Row m of this contiguous slice is input pixel
                # (y + dy - 1, x + dx - 1) for output m = y*Wp + x; the
                # row-wrap at x==0 / x==Wp-1 is removed by the column mask.
                s = P + dy * Wp + (dx - 1)            # static offset
                patch = src_ref[s:s + M, :]           # (M, C) compute_dtype
                if dx == 0:
                    patch = jnp.where(not_first_col, patch, 0)
                elif dx == 2:
                    patch = jnp.where(not_last_col, patch, 0)
                d = jnp.dot(patch, w_ref[dy * 3 + dx],
                            preferred_element_type=jnp.float32)
                acc = d if acc is None else acc + d
        return acc                                    # (M, Cout) f32

    # ---- 3. conv1 + ReLU, written straight into f2's interior (one store).
    h1 = jnp.maximum(conv3x3(f1_ref, w1_ref), 0.0)
    f2_ref[data_lo:data_hi, :] = h1.astype(compute_dtype)

    # ---- 4. conv2 + ReLU: the only tensor that leaves VMEM.
    h2 = jnp.maximum(conv3x3(f2_ref, w2_ref), 0.0)
    o_ref[0] = h2.astype(o_ref.dtype)


# --------------------------------------------------------------------------
# Wrapper: Down.forward (NCHW in / NCHW out), weights pre-packed at setup.
# --------------------------------------------------------------------------
def down_forward(x_nchw, w1_packed, w2_packed, *, compute_dtype=jnp.bfloat16):
    N, Cin, H, W = x_nchw.shape
    assert H % 2 == 0 and W % 2 == 0, "MaxPool2d(2) requires even H, W"
    Hp, Wp = H // 2, W // 2
    M = Hp * Wp
    Cmid = w1_packed.shape[-1]
    Cout = w2_packed.shape[-1]
    assert w1_packed.shape == (9, Cin, Cmid)
    assert w2_packed.shape == (9, Cmid, Cout)

    # Front pad so the data region starts on a packed-sublane-tile boundary.
    P = (-Wp) % 16
    if P == 0:
        P = 16
    f_rows = _round_up(P + (Hp + 2) * Wp + 8, 8)   # halo'd buffer rows (+spill)

    # NCHW -> (N, Hp*Wp, 4*Cin): the 2x2 pool window folded into the lanes.
    # One transpose; the reshapes are free and the bf16 cast fuses into it.
    # TODO(synk): keep NHWC end-to-end across the UNet so this transpose (and
    # the output one) disappears from the per-block cost.
    xf = x_nchw.reshape(N, Cin, Hp, 2, Wp, 2)
    xf = jnp.transpose(xf, (0, 2, 4, 3, 5, 1))      # (N, Hp, Wp, 2, 2, Cin)
    xf = xf.reshape(N, M, 4 * Cin).astype(compute_dtype)

    kernel = functools.partial(_down_fused_kernel, Hp=Hp, Wp=Wp, Cin=Cin,
                               Cmid=Cmid, P=P, compute_dtype=compute_dtype)
    out = pl.pallas_call(
        kernel,
        out_shape=jax.ShapeDtypeStruct((N, M, Cout), x_nchw.dtype),
        grid=(N,),
        in_specs=[
            pl.BlockSpec((1, M, 4 * Cin), lambda n: (n, 0, 0)),
            pl.BlockSpec((9, Cin, Cmid), lambda n: (0, 0, 0)),   # resident
            pl.BlockSpec((9, Cmid, Cout), lambda n: (0, 0, 0)),  # resident
        ],
        out_specs=pl.BlockSpec((1, M, Cout), lambda n: (n, 0, 0)),
        scratch_shapes=[
            pltpu.VMEM((f_rows, Cin), compute_dtype),    # halo'd pooled act.
            pltpu.VMEM((f_rows, Cmid), compute_dtype),   # halo'd conv1 act.
        ],
        compiler_params=pltpu.CompilerParams(
            dimension_semantics=("parallel",),
            vmem_limit_bytes=_vmem_limit_bytes(),
        ),
        # TODO(synk): at real UNet sizes (Hp, Wp >= 128) add an Hp-tile grid
        # axis with a 2-row halo so f1/f2 and the f32 accumulators stay well
        # inside v7x's 64 MiB VMEM.
        # TODO(synk): at small channel counts (Cin < 32) pack W-groups into
        # the lane axis so the scratch/output minor dims are >= 128 lanes.
    )(xf, w1_packed, w2_packed)

    # (N, Hp*Wp, Cout) -> NCHW: free reshape + one output transpose.
    y = out.reshape(N, Hp, Wp, Cout)
    return jnp.transpose(y, (0, 3, 1, 2))


# Weight packing, done ONCE at model setup: HWIO (3,3,Cin,Cout) -> (9,Cin,Cout)
# in the MXU-native dtype.
def pack_conv3x3_weights(w_hwio, compute_dtype=jnp.bfloat16):
    kh, kw, cin, cout = w_hwio.shape
    assert kh == 3 and kw == 3
    return w_hwio.reshape(9, cin, cout).astype(compute_dtype)


# Pure-JAX reference (self-check only), matching the kernel's bf16
# quantization points so the comparison stays tight.
def _ref_forward(x_nchw, w1_hwio, w2_hwio, compute_dtype=jnp.bfloat16):
    f32 = jnp.float32
    q = lambda t: t.astype(compute_dtype).astype(f32)
    x = q(jnp.transpose(x_nchw, (0, 2, 3, 1)))
    x = lax.reduce_window(x, -jnp.inf, lax.max, (1, 2, 2, 1), (1, 2, 2, 1),
                          "VALID")
    dn = lax.conv_dimension_numbers(x.shape, w1_hwio.shape,
                                    ("NHWC", "HWIO", "NHWC"))
    h = jax.nn.relu(lax.conv_general_dilated(x, q(w1_hwio), (1, 1), "SAME",
                                             dimension_numbers=dn))
    y = jax.nn.relu(lax.conv_general_dilated(q(h), q(w2_hwio), (1, 1), "SAME",
                                             dimension_numbers=dn))
    return jnp.transpose(y, (0, 3, 1, 2)).astype(x_nchw.dtype)


if __name__ == "__main__":
    in_channels, out_channels = 4, 8
    mid_channels = out_channels            # DoubleConv default: mid = out
    N, H, W = 2, 16, 16

    key = jax.random.PRNGKey(0)
    kx, k1, k2 = jax.random.split(key, 3)
    x = jax.random.normal(kx, (N, in_channels, H, W), dtype=jnp.float32)
    # Conv weights, HWIO layout, no bias (bias=False in DoubleConv).
    w1 = jax.random.normal(k1, (3, 3, in_channels, mid_channels), jnp.float32) * 0.1
    w2 = jax.random.normal(k2, (3, 3, mid_channels, out_channels), jnp.float32) * 0.1

    # Hoisted to setup time: pack + cast weights once.
    w1p = pack_conv3x3_weights(w1)
    w2p = pack_conv3x3_weights(w2)

    fwd = jax.jit(down_forward)
    out = jax.block_until_ready(fwd(x, w1p, w2p))
    ref = jax.block_until_ready(_ref_forward(x, w1, w2))

    assert out.shape == (N, out_channels, H // 2, W // 2), out.shape
    err = float(jnp.max(jnp.abs(out - ref)))
    assert jnp.allclose(out, ref, atol=1e-2, rtol=1e-2), f"mismatch: {err}"
    print("KERNEL_OK")
</pallas_src>

<mosaic_0001>
module attributes {stable_mosaic.version = 11 : i64} {
  func.func @_down_fused_kernel(%arg0: i32, %arg1: memref<1x64x16xbf16, #tpu.memory_space<vmem>>, %arg2: memref<9x4x8xbf16, #tpu.memory_space<vmem>>, %arg3: memref<9x8x8xbf16, #tpu.memory_space<vmem>>, %arg4: memref<1x64x8xf32, #tpu.memory_space<vmem>>, %arg5: memref<96x4xbf16, #tpu.memory_space<vmem>>, %arg6: memref<96x8xbf16, #tpu.memory_space<vmem>>) attributes {dimension_semantics = [#tpu.dimension_semantics<parallel>], iteration_bounds = array<i64: 2>, scalar_prefetch = 0 : i64, scratch_operands = 2 : i64, tpu.core_type = #tpu.core_type<tc>, window_params = [{transform_indices = @transform_0, window_bounds = array<i64: 1, 64, 16>}, {pipeline_mode = #tpu.pipeline_mode<synchronous>, transform_indices = @transform_1, window_bounds = array<i64: 9, 4, 8>}, {pipeline_mode = #tpu.pipeline_mode<synchronous>, transform_indices = @transform_2, window_bounds = array<i64: 9, 8, 8>}, {transform_indices = @transform_3, window_bounds = array<i64: 1, 64, 8>}]} {
    %c0 = arith.constant 0 : index
    %c0_0 = arith.constant 0 : index
    %c0_1 = arith.constant 0 : index
    %0 = vector.load %arg1[%c0, %c0_0, %c0_1] : memref<1x64x16xbf16, #tpu.memory_space<vmem>>, vector<1x64x16xbf16>
    %1 = vector.shape_cast %0 : vector<1x64x16xbf16> to vector<64x16xbf16>
    %2 = vector.extract_strided_slice %1 {offsets = [0, 0], sizes = [64, 4], strides = [1, 1]} : vector<64x16xbf16> to vector<64x4xbf16>
    %3 = vector.extract_strided_slice %1 {offsets = [0, 4], sizes = [64, 4], strides = [1, 1]} : vector<64x16xbf16> to vector<64x4xbf16>
    %4 = arith.maximumf %2, %3 : vector<64x4xbf16>
    %5 = vector.extract_strided_slice %1 {offsets = [0, 8], sizes = [64, 4], strides = [1, 1]} : vector<64x16xbf16> to vector<64x4xbf16>
    %6 = vector.extract_strided_slice %1 {offsets = [0, 12], sizes = [64, 4], strides = [1, 1]} : vector<64x16xbf16> to vector<64x4xbf16>
    %7 = arith.maximumf %5, %6 : vector<64x4xbf16>
    %8 = arith.maximumf %4, %7 : vector<64x4xbf16>
    %cst = arith.constant 0.000000e+00 : bf16
    %9 = vector.broadcast %cst : bf16 to vector<16x4xbf16>
    %c0_2 = arith.constant 0 : index
    %c0_3 = arith.constant 0 : index
    %10 = vector.load %arg5[%c0_2, %c0_3] : memref<96x4xbf16, #tpu.memory_space<vmem>>, vector<16x4xbf16>
    tpu.vector_store %arg5[%c0_2, %c0_3], %9 {strides = array<i32>} : memref<96x4xbf16, #tpu.memory_space<vmem>>, vector<16x4xbf16>,
    %cst_4 = arith.constant 0.000000e+00 : bf16
    %11 = vector.broadcast %cst_4 : bf16 to vector<16x4xbf16>
    %c80 = arith.constant 80 : index
    %c0_5 = arith.constant 0 : index
    %12 = vector.load %arg5[%c80, %c0_5] : memref<96x4xbf16, #tpu.memory_space<vmem>>, vector<16x4xbf16>
    tpu.vector_store %arg5[%c80, %c0_5], %11 {strides = array<i32>} : memref<96x4xbf16, #tpu.memory_space<vmem>>, vector<16x4xbf16>,
    %cst_6 = arith.constant 0.000000e+00 : bf16
    %13 = vector.broadcast %cst_6 : bf16 to vector<16x8xbf16>
    %c0_7 = arith.constant 0 : index
    %c0_8 = arith.constant 0 : index
    %14 = vector.load %arg6[%c0_7, %c0_8] : memref<96x8xbf16, #tpu.memory_space<vmem>>, vector<16x8xbf16>
    tpu.vector_store %arg6[%c0_7, %c0_8], %13 {strides = array<i32>} : memref<96x8xbf16, #tpu.memory_space<vmem>>, vector<16x8xbf16>,
    %cst_9 = arith.constant 0.000000e+00 : bf16
    %15 = vector.broadcast %cst_9 : bf16 to vector<16x8xbf16>
    %c80_10 = arith.constant 80 : index
    %c0_11 = arith.constant 0 : index
    %16 = vector.load %arg6[%c80_10, %c0_11] : memref<96x8xbf16, #tpu.memory_space<vmem>>, vector<16x8xbf16>
    tpu.vector_store %arg6[%c80_10, %c0_11], %15 {strides = array<i32>} : memref<96x8xbf16, #tpu.memory_space<vmem>>, vector<16x8xbf16>,
    %c16 = arith.constant 16 : index
    %c0_12 = arith.constant 0 : index
    %17 = vector.load %arg5[%c16, %c0_12] : memref<96x4xbf16, #tpu.memory_space<vmem>>, vector<64x4xbf16>
    tpu.vector_store %arg5[%c16, %c0_12], %8 {strides = array<i32>} : memref<96x4xbf16, #tpu.memory_space<vmem>>, vector<64x4xbf16>,
    %18 = tpu.iota {dimensions = array<i32: 0>} : vector<64x1xi32>
    %c8_i32 = arith.constant 8 : i32
    %c0_i32 = arith.constant 0 : i32
    %19 = arith.cmpi eq, %c8_i32, %c0_i32 : i32
    %c1_i32 = arith.constant 1 : i32
    %20 = arith.select %19, %c1_i32, %c8_i32 : i32
    %21 = vector.broadcast %20 : i32 to vector<64x1xi32>
    %22 = arith.remsi %18, %21 : vector<64x1xi32>
    %c0_i32_13 = arith.constant 0 : i32
    %23 = vector.broadcast %c0_i32_13 : i32 to vector<64x1xi32>
    %24 = arith.cmpi ne, %22, %23 : vector<64x1xi32>
    %c0_i32_14 = arith.constant 0 : i32
    %25 = vector.broadcast %c0_i32_14 : i32 to vector<64x1xi32>
    %26 = arith.cmpi slt, %22, %25 : vector<64x1xi32>
    %c0_i32_15 = arith.constant 0 : i32
    %27 = arith.cmpi slt, %20, %c0_i32_15 : i32
    %28 = vector.broadcast %27 : i1 to vector<64x1xi1>
    %29 = vector.broadcast %28 : vector<64x1xi1> to vector<64x1xi1>
    %30 = arith.xori %26, %29 : vector<64x1xi1>
    %31 = arith.andi %30, %24 : vector<64x1xi1>
    %32 = vector.broadcast %20 : i32 to vector<64x1xi32>
    %33 = arith.addi %22, %32 : vector<64x1xi32>
    %34 = arith.select %31, %33, %22 : vector<64x1xi1>, vector<64x1xi32>
    %c0_i32_16 = arith.constant 0 : i32
    %35 = vector.broadcast %c0_i32_16 : i32 to vector<64x1xi32>
    %36 = arith.cmpi ne, %34, %35 : vector<64x1xi32>
    %c7_i32 = arith.constant 7 : i32
    %37 = vector.broadcast %c7_i32 : i32 to vector<64x1xi32>
    %38 = arith.cmpi ne, %34, %37 : vector<64x1xi32>
    %c7 = arith.constant 7 : index
    %c0_17 = arith.constant 0 : index
    %39 = vector.load %arg5[%c7, %c0_17] : memref<96x4xbf16, #tpu.memory_space<vmem>>, vector<64x4xbf16>
    %c0_i32_18 = arith.constant 0 : i32
    %40 = arith.sitofp %c0_i32_18 : i32 to bf16
    %41 = vector.shape_cast %36 : vector<64x1xi1> to vector<64x1xi1>
    %42 = vector.broadcast %41 : vector<64x1xi1> to vector<64x4xi1>
    %43 = vector.broadcast %40 : bf16 to vector<64x4xbf16>
    %44 = arith.select %42, %39, %43 : vector<64x4xi1>, vector<64x4xbf16>
    %c0_19 = arith.constant 0 : index
    %c0_20 = arith.constant 0 : index
    %c0_21 = arith.constant 0 : index
    %45 = vector.load %arg2[%c0_19, %c0_20, %c0_21] : memref<9x4x8xbf16, #tpu.memory_space<vmem>>, vector<1x4x8xbf16>
    %46 = vector.shape_cast %45 : vector<1x4x8xbf16> to vector<4x8xbf16>
    %cst_22 = arith.constant dense<0.000000e+00> : vector<64x8xf32>
    %47 = tpu.matmul %44, %46, %cst_22 {dimension_numbers = #tpu.dot_dimension_numbers<[1], [0], [0], [1], [0, 0, 1, 1], [], []>} : vector<64x4xbf16>, vector<4x8xbf16>, vector<64x8xf32> -> vector<64x8xf32>
    %c8 = arith.constant 8 : index
    %c0_23 = arith.constant 0 : index
    %48 = vector.load %arg5[%c8, %c0_23] : memref<96x4xbf16, #tpu.memory_space<vmem>>, vector<64x4xbf16>
    %c1 = arith.constant 1 : index
    %c0_24 = arith.constant 0 : index
    %c0_25 = arith.constant 0 : index
    %49 = vector.load %arg2[%c1, %c0_24, %c0_25] : memref<9x4x8xbf16, #tpu.memory_space<vmem>>, vector<1x4x8xbf16>
    %50 = vector.shape_cast %49 : vector<1x4x8xbf16> to vector<4x8xbf16>
    %cst_26 = arith.constant dense<0.000000e+00> : vector<64x8xf32>
    %51 = tpu.matmul %48, %50, %cst_26 {dimension_numbers = #tpu.dot_dimension_numbers<[1], [0], [0], [1], [0, 0, 1, 1], [], []>} : vector<64x4xbf16>, vector<4x8xbf16>, vector<64x8xf32> -> vector<64x8xf32>
    %52 = arith.addf %47, %51 : vector<64x8xf32>
    %c9 = arith.constant 9 : index
    %c0_27 = arith.constant 0 : index
    %53 = vector.load %arg5[%c9, %c0_27] : memref<96x4xbf16, #tpu.memory_space<vmem>>, vector<64x4xbf16>
    %c0_i32_28 = arith.constant 0 : i32
    %54 = arith.sitofp %c0_i32_28 : i32 to bf16
    %55 = vector.shape_cast %38 : vector<64x1xi1> to vector<64x1xi1>
    %56 = vector.broadcast %55 : vector<64x1xi1> to vector<64x4xi1>
    %57 = vector.broadcast %54 : bf16 to vector<64x4xbf16>
    %58 = arith.select %56, %53, %57 : vector<64x4xi1>, vector<64x4xbf16>
    %c2 = arith.constant 2 : index
    %c0_29 = arith.constant 0 : index
    %c0_30 = arith.constant 0 : index
    %59 = vector.load %arg2[%c2, %c0_29, %c0_30] : memref<9x4x8xbf16, #tpu.memory_space<vmem>>, vector<1x4x8xbf16>
    %60 = vector.shape_cast %59 : vector<1x4x8xbf16> to vector<4x8xbf16>
    %cst_31 = arith.constant dense<0.000000e+00> : vector<64x8xf32>
    %61 = tpu.matmul %58, %60, %cst_31 {dimension_numbers = #tpu.dot_dimension_numbers<[1], [0], [0], [1], [0, 0, 1, 1], [], []>} : vector<64x4xbf16>, vector<4x8xbf16>, vector<64x8xf32> -> vector<64x8xf32>
    %62 = arith.addf %52, %61 : vector<64x8xf32>
    %c15 = arith.constant 15 : index
    %c0_32 = arith.constant 0 : index
    %63 = vector.load %arg5[%c15, %c0_32] : memref<96x4xbf16, #tpu.memory_space<vmem>>, vector<64x4xbf16>
    %c0_i32_33 = arith.constant 0 : i32
    %64 = arith.sitofp %c0_i32_33 : i32 to bf16
    %65 = vector.shape_cast %36 : vector<64x1xi1> to vector<64x1xi1>
    %66 = vector.broadcast %65 : vector<64x1xi1> to vector<64x4xi1>
    %67 = vector.broadcast %64 : bf16 to vector<64x4xbf16>
    %68 = arith.select %66, %63, %67 : vector<64x4xi1>, vector<64x4xbf16>
    %c3 = arith.constant 3 : index
    %c0_34 = arith.constant 0 : index
    %c0_35 = arith.constant 0 : index
    %69 = vector.load %arg2[%c3, %c0_34, %c0_35] : memref<9x4x8xbf16, #tpu.memory_space<vmem>>, vector<1x4x8xbf16>
    %70 = vector.shape_cast %69 : vector<1x4x8xbf16> to vector<4x8xbf16>
    %cst_36 = arith.constant dense<0.000000e+00> : vector<64x8xf32>
    %71 = tpu.matmul %68, %70, %cst_36 {dimension_numbers = #tpu.dot_dimension_numbers<[1], [0], [0], [1], [0, 0, 1, 1], [], []>} : vector<64x4xbf16>, vector<4x8xbf16>, vector<64x8xf32> -> vector<64x8xf32>
    %72 = arith.addf %62, %71 : vector<64x8xf32>
    %c16_37 = arith.constant 16 : index
    %c0_38 = arith.constant 0 : index
    %73 = vector.load %arg5[%c16_37, %c0_38] : memref<96x4xbf16, #tpu.memory_space<vmem>>, vector<64x4xbf16>
    %c4 = arith.constant 4 : index
    %c0_39 = arith.constant 0 : index
    %c0_40 = arith.constant 0 : index
    %74 = vector.load %arg2[%c4, %c0_39, %c0_40] : memref<9x4x8xbf16, #tpu.memory_space<vmem>>, vector<1x4x8xbf16>
    %75 = vector.shape_cast %74 : vector<1x4x8xbf16> to vector<4x8xbf16>
    %cst_41 = arith.constant dense<0.000000e+00> : vector<64x8xf32>
    %76 = tpu.matmul %73, %75, %cst_41 {dimension_numbers = #tpu.dot_dimension_numbers<[1], [0], [0], [1], [0, 0, 1, 1], [], []>} : vector<64x4xbf16>, vector<4x8xbf16>, vector<64x8xf32> -> vector<64x8xf32>
    %77 = arith.addf %72, %76 : vector<64x8xf32>
    %c17 = arith.constant 17 : index
    %c0_42 = arith.constant 0 : index
    %78 = vector.load %arg5[%c17, %c0_42] : memref<96x4xbf16, #tpu.memory_space<vmem>>, vector<64x4xbf16>
    %c0_i32_43 = arith.constant 0 : i32
    %79 = arith.sitofp %c0_i32_43 : i32 to bf16
    %80 = vector.shape_cast %38 : vector<64x1xi1> to vector<64x1xi1>
    %81 = vector.broadcast %80 : vector<64x1xi1> to vector<64x4xi1>
    %82 = vector.broadcast %79 : bf16 to vector<64x4xbf16>
    %83 = arith.select %81, %78, %82 : vector<64x4xi1>, vector<64x4xbf16>
    %c5 = arith.constant 5 : index
    %c0_44 = arith.constant 0 : index
    %c0_45 = arith.constant 0 : index
    %84 = vector.load %arg2[%c5, %c0_44, %c0_45] : memref<9x4x8xbf16, #tpu.memory_space<vmem>>, vector<1x4x8xbf16>
    %85 = vector.shape_cast %84 : vector<1x4x8xbf16> to vector<4x8xbf16>
    %cst_46 = arith.constant dense<0.000000e+00> : vector<64x8xf32>
    %86 = tpu.matmul %83, %85, %cst_46 {dimension_numbers = #tpu.dot_dimension_numbers<[1], [0], [0], [1], [0, 0, 1, 1], [], []>} : vector<64x4xbf16>, vector<4x8xbf16>, vector<64x8xf32> -> vector<64x8xf32>
    %87 = arith.addf %77, %86 : vector<64x8xf32>
    %c23 = arith.constant 23 : index
    %c0_47 = arith.constant 0 : index
    %88 = vector.load %arg5[%c23, %c0_47] : memref<96x4xbf16, #tpu.memory_space<vmem>>, vector<64x4xbf16>
    %c0_i32_48 = arith.constant 0 : i32
    %89 = arith.sitofp %c0_i32_48 : i32 to bf16
    %90 = vector.shape_cast %36 : vector<64x1xi1> to vector<64x1xi1>
    %91 = vector.broadcast %90 : vector<64x1xi1> to vector<64x4xi1>
    %92 = vector.broadcast %89 : bf16 to vector<64x4xbf16>
    %93 = arith.select %91, %88, %92 : vector<64x4xi1>, vector<64x4xbf16>
    %c6 = arith.constant 6 : index
    %c0_49 = arith.constant 0 : index
    %c0_50 = arith.constant 0 : index
    %94 = vector.load %arg2[%c6, %c0_49, %c0_50] : memref<9x4x8xbf16, #tpu.memory_space<vmem>>, vector<1x4x8xbf16>
    %95 = vector.shape_cast %94 : vector<1x4x8xbf16> to vector<4x8xbf16>
    %cst_51 = arith.constant dense<0.000000e+00> : vector<64x8xf32>
    %96 = tpu.matmul %93, %95, %cst_51 {dimension_numbers = #tpu.dot_dimension_numbers<[1], [0], [0], [1], [0, 0, 1, 1], [], []>} : vector<64x4xbf16>, vector<4x8xbf16>, vector<64x8xf32> -> vector<64x8xf32>
    %97 = arith.addf %87, %96 : vector<64x8xf32>
    %c24 = arith.constant 24 : index
    %c0_52 = arith.constant 0 : index
    %98 = vector.load %arg5[%c24, %c0_52] : memref<96x4xbf16, #tpu.memory_space<vmem>>, vector<64x4xbf16>
    %c7_53 = arith.constant 7 : index
    %c0_54 = arith.constant 0 : index
    %c0_55 = arith.constant 0 : index
    %99 = vector.load %arg2[%c7_53, %c0_54, %c0_55] : memref<9x4x8xbf16, #tpu.memory_space<vmem>>, vector<1x4x8xbf16>
    %100 = vector.shape_cast %99 : vector<1x4x8xbf16> to vector<4x8xbf16>
    %cst_56 = arith.constant dense<0.000000e+00> : vector<64x8xf32>
    %101 = tpu.matmul %98, %100, %cst_56 {dimension_numbers = #tpu.dot_dimension_numbers<[1], [0], [0], [1], [0, 0, 1, 1], [], []>} : vector<64x4xbf16>, vector<4x8xbf16>, vector<64x8xf32> -> vector<64x8xf32>
    %102 = arith.addf %97, %101 : vector<64x8xf32>
    %c25 = arith.constant 25 : index
    %c0_57 = arith.constant 0 : index
    %103 = vector.load %arg5[%c25, %c0_57] : memref<96x4xbf16, #tpu.memory_space<vmem>>, vector<64x4xbf16>
    %c0_i32_58 = arith.constant 0 : i32
    %104 = arith.sitofp %c0_i32_58 : i32 to bf16
    %105 = vector.shape_cast %38 : vector<64x1xi1> to vector<64x1xi1>
    %106 = vector.broadcast %105 : vector<64x1xi1> to vector<64x4xi1>
    %107 = vector.broadcast %104 : bf16 to vector<64x4xbf16>
    %108 = arith.select %106, %103, %107 : vector<64x4xi1>, vector<64x4xbf16>
    %c8_59 = arith.constant 8 : index
    %c0_60 = arith.constant 0 : index
    %c0_61 = arith.constant 0 : index
    %109 = vector.load %arg2[%c8_59, %c0_60, %c0_61] : memref<9x4x8xbf16, #tpu.memory_space<vmem>>, vector<1x4x8xbf16>
    %110 = vector.shape_cast %109 : vector<1x4x8xbf16> to vector<4x8xbf16>
    %cst_62 = arith.constant dense<0.000000e+00> : vector<64x8xf32>
    %111 = tpu.matmul %108, %110, %cst_62 {dimension_numbers = #tpu.dot_dimension_numbers<[1], [0], [0], [1], [0, 0, 1, 1], [], []>} : vector<64x4xbf16>, vector<4x8xbf16>, vector<64x8xf32> -> vector<64x8xf32>
    %112 = arith.addf %102, %111 : vector<64x8xf32>
    %cst_63 = arith.constant 0.000000e+00 : f32
    %113 = vector.broadcast %cst_63 : f32 to vector<64x8xf32>
    %114 = arith.maximumf %112, %113 : vector<64x8xf32>
    %115 = arith.truncf %114 : vector<64x8xf32> to vector<64x8xbf16>
    %c16_64 = arith.constant 16 : index
    %c0_65 = arith.constant 0 : index
    %116 = vector.load %arg6[%c16_64, %c0_65] : memref<96x8xbf16, #tpu.memory_space<vmem>>, vector<64x8xbf16>
    tpu.vector_store %arg6[%c16_64, %c0_65], %115 {strides = array<i32>} : memref<96x8xbf16, #tpu.memory_space<vmem>>, vector<64x8xbf16>,
    %c7_66 = arith.constant 7 : index
    %c0_67 = arith.constant 0 : index
    %117 = vector.load %arg6[%c7_66, %c0_67] : memref<96x8xbf16, #tpu.memory_space<vmem>>, vector<64x8xbf16>
    %c0_i32_68 = arith.constant 0 : i32
    %118 = arith.sitofp %c0_i32_68 : i32 to bf16
    %119 = vector.shape_cast %36 : vector<64x1xi1> to vector<64x1xi1>
    %120 = vector.broadcast %119 : vector<64x1xi1> to vector<64x8xi1>
    %121 = vector.broadcast %118 : bf16 to vector<64x8xbf16>
    %122 = arith.select %120, %117, %121 : vector<64x8xi1>, vector<64x8xbf16>
    %c0_69 = arith.constant 0 : index
    %c0_70 = arith.constant 0 : index
    %c0_71 = arith.constant 0 : index
    %123 = vector.load %arg3[%c0_69, %c0_70, %c0_71] : memref<9x8x8xbf16, #tpu.memory_space<vmem>>, vector<1x8x8xbf16>
    %124 = vector.shape_cast %123 : vector<1x8x8xbf16> to vector<8x8xbf16>
    %cst_72 = arith.constant dense<0.000000e+00> : vector<64x8xf32>
    %125 = tpu.matmul %122, %124, %cst_72 {dimension_numbers = #tpu.dot_dimension_numbers<[1], [0], [0], [1], [0, 0, 1, 1], [], []>} : vector<64x8xbf16>, vector<8x8xbf16>, vector<64x8xf32> -> vector<64x8xf32>
    %c8_73 = arith.constant 8 : index
    %c0_74 = arith.constant 0 : index
    %126 = vector.load %arg6[%c8_73, %c0_74] : memref<96x8xbf16, #tpu.memory_space<vmem>>, vector<64x8xbf16>
    %c1_75 = arith.constant 1 : index
    %c0_76 = arith.constant 0 : index
    %c0_77 = arith.constant 0 : index
    %127 = vector.load %arg3[%c1_75, %c0_76, %c0_77] : memref<9x8x8xbf16, #tpu.memory_space<vmem>>, vector<1x8x8xbf16>
    %128 = vector.shape_cast %127 : vector<1x8x8xbf16> to vector<8x8xbf16>
    %cst_78 = arith.constant dense<0.000000e+00> : vector<64x8xf32>
    %129 = tpu.matmul %126, %128, %cst_78 {dimension_numbers = #tpu.dot_dimension_numbers<[1], [0], [0], [1], [0, 0, 1, 1], [], []>} : vector<64x8xbf16>, vector<8x8xbf16>, vector<64x8xf32> -> vector<64x8xf32>
    %130 = arith.addf %125, %129 : vector<64x8xf32>
    %c9_79 = arith.constant 9 : index
    %c0_80 = arith.constant 0 : index
    %131 = vector.load %arg6[%c9_79, %c0_80] : memref<96x8xbf16, #tpu.memory_space<vmem>>, vector<64x8xbf16>
    %c0_i32_81 = arith.constant 0 : i32
    %132 = arith.sitofp %c0_i32_81 : i32 to bf16
    %133 = vector.shape_cast %38 : vector<64x1xi1> to vector<64x1xi1>
    %134 = vector.broadcast %133 : vector<64x1xi1> to vector<64x8xi1>
    %135 = vector.broadcast %132 : bf16 to vector<64x8xbf16>
    %136 = arith.select %134, %131, %135 : vector<64x8xi1>, vector<64x8xbf16>
    %c2_82 = arith.constant 2 : index
    %c0_83 = arith.constant 0 : index
    %c0_84 = arith.constant 0 : index
    %137 = vector.load %arg3[%c2_82, %c0_83, %c0_84] : memref<9x8x8xbf16, #tpu.memory_space<vmem>>, vector<1x8x8xbf16>
    %138 = vector.shape_cast %137 : vector<1x8x8xbf16> to vector<8x8xbf16>
    %cst_85 = arith.constant dense<0.000000e+00> : vector<64x8xf32>
    %139 = tpu.matmul %136, %138, %cst_85 {dimension_numbers = #tpu.dot_dimension_numbers<[1], [0], [0], [1], [0, 0, 1, 1], [], []>} : vector<64x8xbf16>, vector<8x8xbf16>, vector<64x8xf32> -> vector<64x8xf32>
    %140 = arith.addf %130, %139 : vector<64x8xf32>
    %c15_86 = arith.constant 15 : index
    %c0_87 = arith.constant 0 : index
    %141 = vector.load %arg6[%c15_86, %c0_87] : memref<96x8xbf16, #tpu.memory_space<vmem>>, vector<64x8xbf16>
    %c0_i32_88 = arith.constant 0 : i32
    %142 = arith.sitofp %c0_i32_88 : i32 to bf16
    %143 = vector.shape_cast %36 : vector<64x1xi1> to vector<64x1xi1>
    %144 = vector.broadcast %143 : vector<64x1xi1> to vector<64x8xi1>
    %145 = vector.broadcast %142 : bf16 to vector<64x8xbf16>
    %146 = arith.select %144, %141, %145 : vector<64x8xi1>, vector<64x8xbf16>
    %c3_89 = arith.constant 3 : index
    %c0_90 = arith.constant 0 : index
    %c0_91 = arith.constant 0 : index
    %147 = vector.load %arg3[%c3_89, %c0_90, %c0_91] : memref<9x8x8xbf16, #tpu.memory_space<vmem>>, vector<1x8x8xbf16>
    %148 = vector.shape_cast %147 : vector<1x8x8xbf16> to vector<8x8xbf16>
    %cst_92 = arith.constant dense<0.000000e+00> : vector<64x8xf32>
    %149 = tpu.matmul %146, %148, %cst_92 {dimension_numbers = #tpu.dot_dimension_numbers<[1], [0], [0], [1], [0, 0, 1, 1], [], []>} : vector<64x8xbf16>, vector<8x8xbf16>, vector<64x8xf32> -> vector<64x8xf32>
    %150 = arith.addf %140, %149 : vector<64x8xf32>
    %c16_93 = arith.constant 16 : index
    %c0_94 = arith.constant 0 : index
    %151 = vector.load %arg6[%c16_93, %c0_94] : memref<96x8xbf16, #tpu.memory_space<vmem>>, vector<64x8xbf16>
    %c4_95 = arith.constant 4 : index
    %c0_96 = arith.constant 0 : index
    %c0_97 = arith.constant 0 : index
    %152 = vector.load %arg3[%c4_95, %c0_96, %c0_97] : memref<9x8x8xbf16, #tpu.memory_space<vmem>>, vector<1x8x8xbf16>
    %153 = vector.shape_cast %152 : vector<1x8x8xbf16> to vector<8x8xbf16>
    %cst_98 = arith.constant dense<0.000000e+00> : vector<64x8xf32>
    %154 = tpu.matmul %151, %153, %cst_98 {dimension_numbers = #tpu.dot_dimension_numbers<[1], [0], [0], [1], [0, 0, 1, 1], [], []>} : vector<64x8xbf16>, vector<8x8xbf16>, vector<64x8xf32> -> vector<64x8xf32>
    %155 = arith.addf %150, %154 : vector<64x8xf32>
    %c17_99 = arith.constant 17 : index
    %c0_100 = arith.constant 0 : index
    %156 = vector.load %arg6[%c17_99, %c0_100] : memref<96x8xbf16, #tpu.memory_space<vmem>>, vector<64x8xbf16>
    %c0_i32_101 = arith.constant 0 : i32
    %157 = arith.sitofp %c0_i32_101 : i32 to bf16
    %158 = vector.shape_cast %38 : vector<64x1xi1> to vector<64x1xi1>
    %159 = vector.broadcast %158 : vector<64x1xi1> to vector<64x8xi1>
    %160 = vector.broadcast %157 : bf16 to vector<64x8xbf16>
    %161 = arith.select %159, %156, %160 : vector<64x8xi1>, vector<64x8xbf16>
    %c5_102 = arith.constant 5 : index
    %c0_103 = arith.constant 0 : index
    %c0_104 = arith.constant 0 : index
    %162 = vector.load %arg3[%c5_102, %c0_103, %c0_104] : memref<9x8x8xbf16, #tpu.memory_space<vmem>>, vector<1x8x8xbf16>
    %163 = vector.shape_cast %162 : vector<1x8x8xbf16> to vector<8x8xbf16>
    %cst_105 = arith.constant dense<0.000000e+00> : vector<64x8xf32>
    %164 = tpu.matmul %161, %163, %cst_105 {dimension_numbers = #tpu.dot_dimension_numbers<[1], [0], [0], [1], [0, 0, 1, 1], [], []>} : vector<64x8xbf16>, vector<8x8xbf16>, vector<64x8xf32> -> vector<64x8xf32>
    %165 = arith.addf %155, %164 : vector<64x8xf32>
    %c23_106 = arith.constant 23 : index
    %c0_107 = arith.constant 0 : index
    %166 = vector.load %arg6[%c23_106, %c0_107] : memref<96x8xbf16, #tpu.memory_space<vmem>>, vector<64x8xbf16>
    %c0_i32_108 = arith.constant 0 : i32
    %167 = arith.sitofp %c0_i32_108 : i32 to bf16
    %168 = vector.shape_cast %36 : vector<64x1xi1> to vector<64x1xi1>
    %169 = vector.broadcast %168 : vector<64x1xi1> to vector<64x8xi1>
    %170 = vector.broadcast %167 : bf16 to vector<64x8xbf16>
    %171 = arith.select %169, %166, %170 : vector<64x8xi1>, vector<64x8xbf16>
    %c6_109 = arith.constant 6 : index
    %c0_110 = arith.constant 0 : index
    %c0_111 = arith.constant 0 : index
    %172 = vector.load %arg3[%c6_109, %c0_110, %c0_111] : memref<9x8x8xbf16, #tpu.memory_space<vmem>>, vector<1x8x8xbf16>
    %173 = vector.shape_cast %172 : vector<1x8x8xbf16> to vector<8x8xbf16>
    %cst_112 = arith.constant dense<0.000000e+00> : vector<64x8xf32>
    %174 = tpu.matmul %171, %173, %cst_112 {dimension_numbers = #tpu.dot_dimension_numbers<[1], [0], [0], [1], [0, 0, 1, 1], [], []>} : vector<64x8xbf16>, vector<8x8xbf16>, vector<64x8xf32> -> vector<64x8xf32>
    %175 = arith.addf %165, %174 : vector<64x8xf32>
    %c24_113 = arith.constant 24 : index
    %c0_114 = arith.constant 0 : index
    %176 = vector.load %arg6[%c24_113, %c0_114] : memref<96x8xbf16, #tpu.memory_space<vmem>>, vector<64x8xbf16>
    %c7_115 = arith.constant 7 : index
    %c0_116 = arith.constant 0 : index
    %c0_117 = arith.constant 0 : index
    %177 = vector.load %arg3[%c7_115, %c0_116, %c0_117] : memref<9x8x8xbf16, #tpu.memory_space<vmem>>, vector<1x8x8xbf16>
    %178 = vector.shape_cast %177 : vector<1x8x8xbf16> to vector<8x8xbf16>
    %cst_118 = arith.constant dense<0.000000e+00> : vector<64x8xf32>
    %179 = tpu.matmul %176, %178, %cst_118 {dimension_numbers = #tpu.dot_dimension_numbers<[1], [0], [0], [1], [0, 0, 1, 1], [], []>} : vector<64x8xbf16>, vector<8x8xbf16>, vector<64x8xf32> -> vector<64x8xf32>
    %180 = arith.addf %175, %179 : vector<64x8xf32>
    %c25_119 = arith.constant 25 : index
    %c0_120 = arith.constant 0 : index
    %181 = vector.load %arg6[%c25_119, %c0_120] : memref<96x8xbf16, #tpu.memory_space<vmem>>, vector<64x8xbf16>
    %c0_i32_121 = arith.constant 0 : i32
    %182 = arith.sitofp %c0_i32_121 : i32 to bf16
    %183 = vector.shape_cast %38 : vector<64x1xi1> to vector<64x1xi1>
    %184 = vector.broadcast %183 : vector<64x1xi1> to vector<64x8xi1>
    %185 = vector.broadcast %182 : bf16 to vector<64x8xbf16>
    %186 = arith.select %184, %181, %185 : vector<64x8xi1>, vector<64x8xbf16>
    %c8_122 = arith.constant 8 : index
    %c0_123 = arith.constant 0 : index
    %c0_124 = arith.constant 0 : index
    %187 = vector.load %arg3[%c8_122, %c0_123, %c0_124] : memref<9x8x8xbf16, #tpu.memory_space<vmem>>, vector<1x8x8xbf16>
    %188 = vector.shape_cast %187 : vector<1x8x8xbf16> to vector<8x8xbf16>
    %cst_125 = arith.constant dense<0.000000e+00> : vector<64x8xf32>
    %189 = tpu.matmul %186, %188, %cst_125 {dimension_numbers = #tpu.dot_dimension_numbers<[1], [0], [0], [1], [0, 0, 1, 1], [], []>} : vector<64x8xbf16>, vector<8x8xbf16>, vector<64x8xf32> -> vector<64x8xf32>
    %190 = arith.addf %180, %189 : vector<64x8xf32>
    %cst_126 = arith.constant 0.000000e+00 : f32
    %191 = vector.broadcast %cst_126 : f32 to vector<64x8xf32>
    %192 = arith.maximumf %190, %191 : vector<64x8xf32>
    %c0_127 = arith.constant 0 : index
    %c0_128 = arith.constant 0 : index
    %c0_129 = arith.constant 0 : index
    %193 = vector.load %arg4[%c0_127, %c0_128, %c0_129] : memref<1x64x8xf32, #tpu.memory_space<vmem>>, vector<1x64x8xf32>
    %194 = vector.shape_cast %193 : vector<1x64x8xf32> to vector<64x8xf32>
    %195 = vector.shape_cast %192 : vector<64x8xf32> to vector<1x64x8xf32>
    tpu.vector_store %arg4[%c0_127, %c0_128, %c0_129], %195 {strides = array<i32>} : memref<1x64x8xf32, #tpu.memory_space<vmem>>, vector<1x64x8xf32>,
    return
  }
  func.func @transform_0(%arg0: i32) -> (i32, i32, i32) {
    %c0_i32 = arith.constant 0 : i32
    %c0_i32_0 = arith.constant 0 : i32
    %c0_i32_1 = arith.constant 0 : i32
    return %arg0, %c0_i32, %c0_i32_0 : i32, i32, i32
  }
  func.func @transform_1(%arg0: i32) -> (i32, i32, i32) {
    %c0_i32 = arith.constant 0 : i32
    %c0_i32_0 = arith.constant 0 : i32
    %c0_i32_1 = arith.constant 0 : i32
    %c0_i32_2 = arith.constant 0 : i32
    return %c0_i32, %c0_i32_0, %c0_i32_1 : i32, i32, i32
  }
  func.func @transform_2(%arg0: i32) -> (i32, i32, i32) {
    %c0_i32 = arith.constant 0 : i32
    %c0_i32_0 = arith.constant 0 : i32
    %c0_i32_1 = arith.constant 0 : i32
    %c0_i32_2 = arith.constant 0 : i32
    return %c0_i32, %c0_i32_0, %c0_i32_1 : i32, i32, i32
  }
  func.func @transform_3(%arg0: i32) -> (i32, i32, i32) {
    %c0_i32 = arith.constant 0 : i32
    %c0_i32_0 = arith.constant 0 : i32
    %c0_i32_1 = arith.constant 0 : i32
    return %arg0, %c0_i32, %c0_i32_0 : i32, i32, i32
  }
}

</mosaic_0001>

<llo_original>
// kernel: down_forward.1
$region0: #{down_forward.1}
  #allocation0 [shape = 'u32[]', space=smem, size = 0x4, offset = 0x4, fixed_abs, tag = 'smem constant byte address 0x4 - core index']
  #allocation1 [shape = 'u32[144,128]{1,0:T(1,128)}', space=vmem, size = 0x12000, scoped, tag = 'internal scratch']
  #allocation2 [shape = 'bf16[96,4]{1,0:T(8,128)(2,1)}', space=vmem, size = 0x6000, scoped, tag = 'scratch operand']
  #allocation3 [shape = 'bf16[96,8]{1,0:T(8,128)(2,1)}', space=vmem, size = 0x6000, scoped, tag = 'scratch operand']
  %s0 = inlined_call_operand.vmem [shape: bf16[2,64,16], index: 0, kind: input, shape index: {}]
  %s1 = inlined_call_operand.vmem [shape: bf16[9,4,8], index: 1, kind: input, shape index: {}]
  %s2 = inlined_call_operand.vmem [shape: bf16[9,8,8], index: 2, kind: input, shape index: {}]
  %s3 = inlined_call_operand.vmem [shape: f32[2,64,8], index: 3, kind: output, shape index: {}]
  %s4 = sld [smem:[#allocation0]]
  $region45: #{down_forward.1} parent=0
    _
  %s6 = ssub.s32 1, %s4
  %s7 = scalar_select 0, %s6, %s4
  loop: start=0, step=1, limit=4
  $region2: #{down_forward.1} parent=0 // loop_pre_header
    _
  $region3: #{down_forward.1} parent=0 // loop_header
    %s9 = sphi 0, %s13
    %p10 = scmp.ge.s32.totalorder %s9, 4
    %s19 = sphi 0, %s21
    %s22 = sphi 0, %s19
    %s23 = sphi 0, %s22
    %s39 = sphi 0, %s23
    %s43 = sphi 0, %s43
    %s45 = sphi 0, %s43
    %s46 = sphi 0, %s45
    %s60 = sphi 0, %s46
    %s64 = sphi 0, %s64
    %s66 = sphi 0, %s64
    %s67 = sphi 0, %s66
    %s81 = sphi 0, %s67
    %s87 = sphi 0, %s89
    %s90 = sphi 0, %s87
    %s91 = sphi 0, %s90
    %s107 = sphi 0, %s91
  $region4: #{down_forward.1} parent=0 // loop_header_branch
    %12 = sbr.rel (%p10) target = $region8
  $region5: #{down_forward.1} parent=0 // loop_body
    %s14 = ssub.s32 %s9, 1
    %s15 = ssub.s32 %s9, 2
    %s16 = sadd.s32 %s9, 1
    %s17 = ssub.s32 %s9, %s16
    %p18 = scmp.eq.s32.totalorder %s17, 0
    %s20 = sadd.s32 %s19, 1
    %s21 = scalar_select %p18, %s19, %s20
    %p24 = pneg %p18
    %p25 = scmp.eq.s32.totalorder %s9, 1
    %p26 = por %p24, %p25
    %p27 = scmp.ne.s32.totalorder %s19, %s22
    %p28 = scmp.eq.s32.totalorder %s9, 0
    %p29 = por %p27, %p28
    %p30 = scmp.ne.s32.totalorder %s19, %s22
    %p31 = scmp.eq.s32.totalorder %s14, 1
    %p32 = por %p30, %p31
    %p33 = scmp.ne.s32.totalorder %s22, %s23
    %p34 = scmp.eq.s32.totalorder %s14, 0
    %p35 = por %p33, %p34
    %p36 = scmp.ne.s32.totalorder %s22, %s23
    %p37 = scmp.eq.s32.totalorder %s15, 1
    %p38 = por %p36, %p37
    %p40 = scmp.ne.s32.totalorder %s23, %s39
    %p41 = scmp.eq.s32.totalorder %s15, 0
    %p42 = por %p40, %p41
    %s44 = sadd.s32 %s43, 1
    %p47 = scmp.eq.s32.totalorder %s9, 1
    %p48 = scmp.ne.s32.totalorder %s43, %s45
    %p49 = scmp.eq.s32.totalorder %s9, 0
    %p50 = por %p48, %p49
    %p51 = scmp.ne.s32.totalorder %s43, %s45
    %p52 = scmp.eq.s32.totalorder %s14, 1
    %p53 = por %p51, %p52
    %p54 = scmp.ne.s32.totalorder %s45, %s46
    %p55 = scmp.eq.s32.totalorder %s14, 0
    %p56 = por %p54, %p55
    %p57 = scmp.ne.s32.totalorder %s45, %s46
    %p58 = scmp.eq.s32.totalorder %s15, 1
    %p59 = por %p57, %p58
    %p61 = scmp.ne.s32.totalorder %s46, %s60
    %p62 = scmp.eq.s32.totalorder %s15, 0
    %p63 = por %p61, %p62
    %s65 = sadd.s32 %s64, 1
    %p68 = scmp.eq.s32.totalorder %s9, 1
    %p69 = scmp.ne.s32.totalorder %s64, %s66
    %p70 = scmp.eq.s32.totalorder %s9, 0
    %p71 = por %p69, %p70
    %p72 = scmp.ne.s32.totalorder %s64, %s66
    %p73 = scmp.eq.s32.totalorder %s14, 1
    %p74 = por %p72, %p73
    %p75 = scmp.ne.s32.totalorder %s66, %s67
    %p76 = scmp.eq.s32.totalorder %s14, 0
    %p77 = por %p75, %p76
    %p78 = scmp.ne.s32.totalorder %s66, %s67
    %p79 = scmp.eq.s32.totalorder %s15, 1
    %p80 = por %p78, %p79
    %p82 = scmp.ne.s32.totalorder %s67, %s81
    %p83 = scmp.eq.s32.totalorder %s15, 0
    %p84 = por %p82, %p83
    %s85 = ssub.s32 %s9, %s16
    %p86 = scmp.eq.s32.totalorder %s85, 0
    %s88 = sadd.s32 %s87, 1
    %s89 = scalar_select %p86, %s87, %s88
    %p92 = pneg %p86
    %p93 = scmp.eq.s32.totalorder %s9, 1
    %p94 = por %p92, %p93
    %p95 = scmp.ne.s32.totalorder %s87, %s90
    %p96 = scmp.eq.s32.totalorder %s9, 0
    %p97 = por %p95, %p96
    %p98 = scmp.ne.s32.totalorder %s87, %s90
    %p99 = scmp.eq.s32.totalorder %s14, 1
    %p100 = por %p98, %p99
    %p101 = scmp.ne.s32.totalorder %s90, %s91
    %p102 = scmp.eq.s32.totalorder %s14, 0
    %p103 = por %p101, %p102
    %p104 = scmp.ne.s32.totalorder %s90, %s91
    %p105 = scmp.eq.s32.totalorder %s15, 1
    %p106 = por %p104, %p105
    %p108 = scmp.ne.s32.totalorder %s91, %s107
    %p109 = scmp.eq.s32.totalorder %s15, 0
    %p110 = por %p108, %p109
    %p111 = scmp.le.s32.totalorder 1, %s9
    %p112 = scmp.lt.s32.totalorder %s9, 3
    %p113 = pnand %p111, %p112
    %p114 = pneg %p113
    // Predicated region
    $region9: #{down_forward.1} parent=5 // pred_check
      _
    $region10: #{down_forward.1} parent=5 // pred_check_branch
      %116 = sbr.rel (%p113) target = $region12
    $region11: #{down_forward.1} parent=5 // pred_region
      %s117 = ssub.s32 %s9, 1
      // Predicated region
      $region13: #{down_forward.1} parent=11 // pred_check
        %p118 = pneg %p56
      $region14: #{down_forward.1} parent=11 // pred_check_branch
        %120 = sbr.rel (%p118) target = $region16
      $region15: #{down_forward.1} parent=11 // pred_region
        _
      $region16: #{down_forward.1} parent=11 // pred_fallthru
        _
      // Predicated region
      $region17: #{down_forward.1} parent=11 // pred_check
        %p121 = pneg %p77
      $region18: #{down_forward.1} parent=11 // pred_check_branch
        %123 = sbr.rel (%p121) target = $region20
      $region19: #{down_forward.1} parent=11 // pred_region
        _
      $region20: #{down_forward.1} parent=11 // pred_fallthru
        _
    $region12: #{down_forward.1} parent=5 // pred_fallthru
      _
    %p124 = scmp.lt.s32.totalorder %s9, 2
    // Predicated region
    $region21: #{down_forward.1} parent=5 // pred_check
      %p125 = pneg %p124
    $region22: #{down_forward.1} parent=5 // pred_check_branch
      %127 = sbr.rel (%p125) target = $region24
    $region23: #{down_forward.1} parent=5 // pred_region
      // Predicated region
      $region25: #{down_forward.1} parent=23 // pred_check
        %p128 = pneg %p29
      $region26: #{down_forward.1} parent=23 // pred_check_branch
        %130 = sbr.rel (%p128) target = $region28
      $region27: #{down_forward.1} parent=23 // pred_region
        %p131 = scmp.lt.s32.totalorder %s9, 1
        %s132 = scalar_select %p131, %s9, 1
        %s133 = smul.addr %s132, 8
        %s134 = smul.addr %s133, 4
        %s135 = scalar_lea.vmem %s0, %s134
      $region28: #{down_forward.1} parent=23 // pred_fallthru
        _
    $region24: #{down_forward.1} parent=5 // pred_fallthru
      _
    %p136 = scmp.le.s32.totalorder 1, %s9
    %p137 = scmp.lt.s32.totalorder %s9, 3
    %p138 = pnand %p136, %p137
    %p139 = pneg %p138
    // Predicated region
    $region29: #{down_forward.1} parent=5 // pred_check
      _
    $region30: #{down_forward.1} parent=5 // pred_check_branch
      %141 = sbr.rel (%p138) target = $region32
    $region31: #{down_forward.1} parent=5 // pred_region
      %s142 = ssub.s32 %s9, 1
      %p143 = scmp.lt.s32.totalorder %s14, 1
      %s144 = scalar_select %p143, %s14, 1
      %s145 = smul.addr %s144, 8
      %s146 = smul.addr %s145, 4
      %s147 = scalar_lea.vmem %s0, %s146
      %p148 = pneg %p35
      %p149 = pneg %p32
      %p150 = pneg %p56
      %p151 = pneg %p53
      %p152 = pneg %p77
      %p153 = pneg %p74
      %p154 = pneg %p103
      %p155 = pneg %p100
      %p156 = scmp.lt.s32.totalorder %s14, 1
      %s157 = scalar_select %p156, %s14, 1
      %s158 = smul.addr %s157, 8
      %s159 = smul.addr %s158, 8
      %s160 = scalar_lea.vmem %s3, %s159
      %p161 = scmp.lt.s32.totalorder %s14, 1
      %s162 = scalar_select %p161, %s14, 1
      %s163 = smul.addr %s162, 8
      %s164 = smul.addr %s163, 4
      %s165 = scalar_lea.vmem %s0, %s164
      %p166 = scmp.lt.s32.totalorder %s14, 1
      %s167 = scalar_select %p166, %s14, 1
      %s168 = smul.addr %s167, 8
      %s169 = smul.addr %s168, 8
      %s170 = scalar_lea.vmem %s3, %s169
      %v174 = vld [vmem:[%s165] sm:$0xf]
      %v175 = vld [vmem:[%s165 + $0x4] sm:$0xf]
      %v176 = vld [vmem:[%s165 + $0x8] sm:$0xf]
      %v177 = vld [vmem:[%s165 + $0xc] sm:$0xf]
      %v178 = vld [vmem:[%s165 + $0x10] sm:$0xf]
      %v179 = vld [vmem:[%s165 + $0x14] sm:$0xf]
      %v180 = vld [vmem:[%s165 + $0x18] sm:$0xf]
      %v181 = vld [vmem:[%s165 + $0x1c] sm:$0xf]
      %190 = vrot.lane.b32.xlu0 %v174, 124
      %v191 = vpop.permute.xlu0 %190
      %192 = vrot.lane.b32.xlu0 %v175, 124
      %v193 = vpop.permute.xlu0 %192
      %194 = vrot.lane.b32.xlu0 %v176, 124
      %v195 = vpop.permute.xlu0 %194
      %196 = vrot.lane.b32.xlu0 %v177, 124
      %v197 = vpop.permute.xlu0 %196
      %198 = vrot.lane.b32.xlu0 %v178, 124
      %v199 = vpop.permute.xlu0 %198
      %200 = vrot.lane.b32.xlu0 %v179, 124
      %v201 = vpop.permute.xlu0 %200
      %202 = vrot.lane.b32.xlu0 %v180, 124
      %v203 = vpop.permute.xlu0 %202
      %204 = vrot.lane.b32.xlu0 %v181, 124
      %v205 = vpop.permute.xlu0 %204
      %v214 = vmax.bf16 %v174, %v191
      %v215 = vmax.bf16 %v175, %v193
      %v216 = vmax.bf16 %v176, %v195
      %v217 = vmax.bf16 %v177, %v197
      %v218 = vmax.bf16 %v178, %v199
      %v219 = vmax.bf16 %v179, %v201
      %v220 = vmax.bf16 %v180, %v203
      %v221 = vmax.bf16 %v181, %v205
      %230 = vrot.lane.b32.xlu0 %v214, 120
      %v231 = vpop.permute.xlu0 %230
      %232 = vrot.lane.b32.xlu0 %v215, 120
      %v233 = vpop.permute.xlu0 %232
      %234 = vrot.lane.b32.xlu0 %v216, 120
      %v235 = vpop.permute.xlu0 %234
      %236 = vrot.lane.b32.xlu0 %v217, 120
      %v237 = vpop.permute.xlu0 %236
      %238 = vrot.lane.b32.xlu0 %v218, 120
      %v239 = vpop.permute.xlu0 %238
      %240 = vrot.lane.b32.xlu0 %v219, 120
      %v241 = vpop.permute.xlu0 %240
      %242 = vrot.lane.b32.xlu0 %v220, 120
      %v243 = vpop.permute.xlu0 %242
      %244 = vrot.lane.b32.xlu0 %v221, 120
      %v245 = vpop.permute.xlu0 %244
      %v254 = vmax.bf16 %v214, %v231
      %v255 = vmax.bf16 %v215, %v233
      %v256 = vmax.bf16 %v216, %v235
      %v257 = vmax.bf16 %v217, %v237
      %v258 = vmax.bf16 %v218, %v239
      %v259 = vmax.bf16 %v219, %v241
      %v260 = vmax.bf16 %v220, %v243
      %v261 = vmax.bf16 %v221, %v245
      %vm262 = vcmask 27648
      %263 = vst.msk [vmem:[#allocation2] sm:$0xf] %vm262, 0
      %264 = vst.msk [vmem:[#allocation2 + $0x4] sm:$0xf] %vm262, 0
      %265 = vst.msk [vmem:[#allocation2 + $0x28] sm:$0xf] %vm262, 0
      %266 = vst.msk [vmem:[#allocation2 + $0x2c] sm:$0xf] %vm262, 0
      %vm267 = vcmask 60416
      %268 = vst.msk [vmem:[#allocation3] sm:$0xf] %vm267, 0
      %269 = vst.msk [vmem:[#allocation3 + $0x4] sm:$0xf] %vm267, 0
      %270 = vst.msk [vmem:[#allocation3 + $0x28] sm:$0xf] %vm267, 0
      %271 = vst.msk [vmem:[#allocation3 + $0x2c] sm:$0xf] %vm267, 0
      %272 = vst.msk [vmem:[#allocation2 + $0x8] sm:$0xf] %vm262, %v254
      %273 = vst.msk [vmem:[#allocation2 + $0xc] sm:$0xf] %vm262, %v255
      %274 = vst.msk [vmem:[#allocation2 + $0x10] sm:$0xf] %vm262, %v256
      %275 = vst.msk [vmem:[#allocation2 + $0x14] sm:$0xf] %vm262, %v257
      %276 = vst.msk [vmem:[#allocation2 + $0x18] sm:$0xf] %vm262, %v258
      %277 = vst.msk [vmem:[#allocation2 + $0x1c] sm:$0xf] %vm262, %v259
      %278 = vst.msk [vmem:[#allocation2 + $0x20] sm:$0xf] %vm262, %v260
      %279 = vst.msk [vmem:[#allocation2 + $0x24] sm:$0xf] %vm262, %v261
      %v280 = vlaneseq
      %v281 = vshrl.u32 %v280, 7
      %v282 = vadd.s32 %v281, 8
      %v283 = vadd.s32 %v281, 16
      %v284 = vadd.s32 %v281, 24
      %v285 = vadd.s32 %v281, 32
      %v286 = vadd.s32 %v281, 40
      %v287 = vadd.s32 %v281, 48
      %v288 = vadd.s32 %v281, 56
      %vm289 = vcmp.lt.s32.totalorder %v281, 0
      %v290 = vsub.s32 0, %v281
      %v291 = vsel %vm289, %v290, %v281
      %v292 = vshrl.u32 %v291, 3
      %v293 = vand.u32 %v291, 7
      %v294 = vsub.s32 0, %v293
      %v295 = vsel %vm289, %v294, %v293
      %vm296 = vcmp.lt.s32.totalorder %v282, 0
      %v297 = vsub.s32 0, %v282
      %v298 = vsel %vm296, %v297, %v282
      %v299 = vshrl.u32 %v298, 3
      %v300 = vand.u32 %v298, 7
      %v301 = vsub.s32 0, %v300
      %v302 = vsel %vm296, %v301, %v300
      %vm303 = vcmp.lt.s32.totalorder %v283, 0
      %v304 = vsub.s32 0, %v283
      %v305 = vsel %vm303, %v304, %v283
      %v306 = vshrl.u32 %v305, 3
      %v307 = vand.u32 %v305, 7
      %v308 = vsub.s32 0, %v307
      %v309 = vsel %vm303, %v308, %v307
      %vm310 = vcmp.lt.s32.totalorder %v284, 0
      %v311 = vsub.s32 0, %v284
      %v312 = vsel %vm310, %v311, %v284
      %v313 = vshrl.u32 %v312, 3
      %v314 = vand.u32 %v312, 7
      %v315 = vsub.s32 0, %v314
      %v316 = vsel %vm310, %v315, %v314
      %vm317 = vcmp.lt.s32.totalorder %v285, 0
      %v318 = vsub.s32 0, %v285
      %v319 = vsel %vm317, %v318, %v285
      %v320 = vshrl.u32 %v319, 3
      %v321 = vand.u32 %v319, 7
      %v322 = vsub.s32 0, %v321
      %v323 = vsel %vm317, %v322, %v321
      %vm324 = vcmp.lt.s32.totalorder %v286, 0
      %v325 = vsub.s32 0, %v286
      %v326 = vsel %vm324, %v325, %v286
      %v327 = vshrl.u32 %v326, 3
      %v328 = vand.u32 %v326, 7
      %v329 = vsub.s32 0, %v328
      %v330 = vsel %vm324, %v329, %v328
      %vm331 = vcmp.lt.s32.totalorder %v287, 0
      %v332 = vsub.s32 0, %v287
      %v333 = vsel %vm331, %v332, %v287
      %v334 = vshrl.u32 %v333, 3
      %v335 = vand.u32 %v333, 7
      %v336 = vsub.s32 0, %v335
      %v337 = vsel %vm331, %v336, %v335
      %vm338 = vcmp.lt.s32.totalorder %v288, 0
      %v339 = vsub.s32 0, %v288
      %v340 = vsel %vm338, %v339, %v288
      %v341 = vshrl.u32 %v340, 3
      %v342 = vand.u32 %v340, 7
      %v343 = vsub.s32 0, %v342
      %v344 = vsel %vm338, %v343, %v342
      %vm345 = vcmp.ne.s32.totalorder %v295, 0
      %vm346 = vcmp.ne.s32.totalorder %v302, 0
      %vm347 = vcmp.ne.s32.totalorder %v309, 0
      %vm348 = vcmp.ne.s32.totalorder %v316, 0
      %vm349 = vcmp.ne.s32.totalorder %v323, 0
      %vm350 = vcmp.ne.s32.totalorder %v330, 0
      %vm351 = vcmp.ne.s32.totalorder %v337, 0
      %vm352 = vcmp.ne.s32.totalorder %v344, 0
      %vm353 = vcmp.lt.s32.totalorder %v295, 0
      %vm354 = vcmp.lt.s32.totalorder %v302, 0
      %vm355 = vcmp.lt.s32.totalorder %v309, 0
      %vm356 = vcmp.lt.s32.totalorder %v316, 0
      %vm357 = vcmp.lt.s32.totalorder %v323, 0
      %vm358 = vcmp.lt.s32.totalorder %v330, 0
      %vm359 = vcmp.lt.s32.totalorder %v337, 0
      %vm360 = vcmp.lt.s32.totalorder %v344, 0
      %vm361 = vmand %vm353, %vm345
      %vm362 = vmand %vm354, %vm346
      %vm363 = vmand %vm355, %vm347
      %vm364 = vmand %vm356, %vm348
      %vm365 = vmand %vm357, %vm349
      %vm366 = vmand %vm358, %vm350
      %vm367 = vmand %vm359, %vm351
      %vm368 = vmand %vm360, %vm352
      %v369 = vadd.s32 %v295, 8
      %v370 = vadd.s32 %v302, 8
      %v371 = vadd.s32 %v309, 8
      %v372 = vadd.s32 %v316, 8
      %v373 = vadd.s32 %v323, 8
      %v374 = vadd.s32 %v330, 8
      %v375 = vadd.s32 %v337, 8
      %v376 = vadd.s32 %v344, 8
      %v377 = vsel %vm361, %v369, %v295
      %v378 = vsel %vm362, %v370, %v302
      %v379 = vsel %vm363, %v371, %v309
      %v380 = vsel %vm364, %v372, %v316
      %v381 = vsel %vm365, %v373, %v323
      %v382 = vsel %vm366, %v374, %v330
      %v383 = vsel %vm367, %v375, %v337
      %v384 = vsel %vm368, %v376, %v344
      %vm385 = vcmp.ne.s32.totalorder %v377, 0
      %vm386 = vcmp.ne.s32.totalorder %v378, 0
      %vm387 = vcmp.ne.s32.totalorder %v379, 0
      %vm388 = vcmp.ne.s32.totalorder %v380, 0
      %vm389 = vcmp.ne.s32.totalorder %v381, 0
      %vm390 = vcmp.ne.s32.totalorder %v382, 0
      %vm391 = vcmp.ne.s32.totalorder %v383, 0
      %vm392 = vcmp.ne.s32.totalorder %v384, 0
      %vm393 = vcmp.ne.s32.totalorder %v377, 7
      %vm394 = vcmp.ne.s32.totalorder %v378, 7
      %vm395 = vcmp.ne.s32.totalorder %v379, 7
      %vm396 = vcmp.ne.s32.totalorder %v380, 7
      %vm397 = vcmp.ne.s32.totalorder %v381, 7
      %vm398 = vcmp.ne.s32.totalorder %v382, 7
      %vm399 = vcmp.ne.s32.totalorder %v383, 7
      %vm400 = vcmp.ne.s32.totalorder %v384, 7
      %v401 = vld [vmem:[#allocation2] sm:$0x8]
      %v402 = vld [vmem:[#allocation2 + $0x4] sm:$0xf]
      %v403 = vld [vmem:[#allocation2 + $0x8] sm:$0xf]
      %v404 = vld [vmem:[#allocation2 + $0xc] sm:$0xf]
      %v405 = vld [vmem:[#allocation2 + $0x10] sm:$0xf]
      %v406 = vld [vmem:[#allocation2 + $0x14] sm:$0xf]
      %v407 = vld [vmem:[#allocation2 + $0x18] sm:$0xf]
      %v408 = vld [vmem:[#allocation2 + $0x1c] sm:$0xf]
      %v409 = vld [vmem:[#allocation2 + $0x20] sm:$0xf]
      %v410 = vsel %vm385, 1, 0
      %v411 = vsel %vm386, 1, 0
      %v412 = vsel %vm387, 1, 0
      %v413 = vsel %vm388, 1, 0
      %v414 = vsel %vm389, 1, 0
      %v415 = vsel %vm390, 1, 0
      %v416 = vsel %vm391, 1, 0
      %v417 = vsel %vm392, 1, 0
      %vm418 = vcmp.eq.s32.totalorder %v410, 1
      %vm419 = vcmp.eq.s32.totalorder %v411, 1
      %vm420 = vcmp.eq.s32.totalorder %v412, 1
      %vm421 = vcmp.eq.s32.totalorder %v413, 1
      %vm422 = vcmp.eq.s32.totalorder %v414, 1
      %vm423 = vcmp.eq.s32.totalorder %v415, 1
      %vm424 = vcmp.eq.s32.totalorder %v416, 1
      %vm425 = vcmp.eq.s32.totalorder %v417, 1
      %vm426 = vmpackc.low %vm418, %vm418
      %vm427 = vmpackc.low %vm419, %vm419
      %vm428 = vmpackc.low %vm420, %vm420
      %vm429 = vmpackc.low %vm421, %vm421
      %vm430 = vmpackc.low %vm422, %vm422
      %vm431 = vmpackc.low %vm423, %vm423
      %vm432 = vmpackc.low %vm424, %vm424
      %vm433 = vmpackc.low %vm425, %vm425
      %v434 = vsel %vm426, 65537, 0
      %v435 = vsel %vm427, 65537, 0
      %v436 = vsel %vm428, 65537, 0
      %v437 = vsel %vm429, 65537, 0
      %v438 = vsel %vm430, 65537, 0
      %v439 = vsel %vm431, 65537, 0
      %v440 = vsel %vm432, 65537, 0
      %v441 = vsel %vm433, 65537, 0
      %vm442 = vsmask.f32 3328
      %vm443 = vsmask.f32 7440
      %vm444 = vmor %vm442, %vm443
      %v446 = vshll.u32 %v434, 16
      %v448 = vrot.slane %v446, 5
      %v449 = vshrl.u32 %v434, 16
      %v451 = vrot.slane %v449, 4
      %v452 = vor.u32 %v451, %v448
      %v453 = vrot.slane %v452, 4
      %v455 = vshll.u32 %v435, 16
      %v457 = vrot.slane %v455, 5
      %v458 = vsel %vm444, %v453, %v457
      %v459 = vshrl.u32 %v435, 16
      %v461 = vrot.slane %v459, 4
      %v462 = vor.u32 %v461, %v457
      %v463 = vrot.slane %v462, 4
      %v465 = vshll.u32 %v436, 16
      %v467 = vrot.slane %v465, 5
      %v468 = vsel %vm444, %v463, %v467
      %v469 = vshrl.u32 %v436, 16
      %v471 = vrot.slane %v469, 4
      %v472 = vor.u32 %v471, %v467
      %v473 = vrot.slane %v472, 4
      %v475 = vshll.u32 %v437, 16
      %v477 = vrot.slane %v475, 5
      %v478 = vsel %vm444, %v473, %v477
      %v479 = vshrl.u32 %v437, 16
      %v481 = vrot.slane %v479, 4
      %v482 = vor.u32 %v481, %v477
      %v483 = vrot.slane %v482, 4
      %v485 = vshll.u32 %v438, 16
      %v487 = vrot.slane %v485, 5
      %v488 = vsel %vm444, %v483, %v487
      %v489 = vshrl.u32 %v438, 16
      %v491 = vrot.slane %v489, 4
      %v492 = vor.u32 %v491, %v487
      %v493 = vrot.slane %v492, 4
      %v495 = vshll.u32 %v439, 16
      %v497 = vrot.slane %v495, 5
      %v498 = vsel %vm444, %v493, %v497
      %v499 = vshrl.u32 %v439, 16
      %v501 = vrot.slane %v499, 4
      %v502 = vor.u32 %v501, %v497
      %v503 = vrot.slane %v502, 4
      %v505 = vshll.u32 %v440, 16
      %v507 = vrot.slane %v505, 5
      %v508 = vsel %vm444, %v503, %v507
      %v509 = vshrl.u32 %v440, 16
      %v511 = vrot.slane %v509, 4
      %v512 = vor.u32 %v511, %v507
      %v513 = vrot.slane %v512, 4
      %v515 = vshll.u32 %v441, 16
      %v517 = vrot.slane %v515, 5
      %v518 = vsel %vm444, %v513, %v517
      %v519 = vshrl.u32 %v441, 16
      %v521 = vrot.slane %v519, 4
      %v522 = vor.u32 %v521, %v517
      %v523 = vrot.slane %v522, 4
      %vm524 = vcmp.ne.s16.totalorder %v448, 0
      %vm525 = vcmp.ne.s16.totalorder %v458, 0
      %vm526 = vcmp.ne.s16.totalorder %v468, 0
      %vm527 = vcmp.ne.s16.totalorder %v478, 0
      %vm528 = vcmp.ne.s16.totalorder %v488, 0
      %vm529 = vcmp.ne.s16.totalorder %v498, 0
      %vm530 = vcmp.ne.s16.totalorder %v508, 0
      %vm531 = vcmp.ne.s16.totalorder %v518, 0
      %vm532 = vcmp.ne.s16.totalorder %v523, 0
      %v533 = vsel %vm524, %v401, 0
      %v534 = vsel %vm525, %v402, 0
      %v535 = vsel %vm526, %v403, 0
      %v536 = vsel %vm527, %v404, 0
      %v537 = vsel %vm528, %v405, 0
      %v538 = vsel %vm529, %v406, 0
      %v539 = vsel %vm530, %v407, 0
      %v540 = vsel %vm531, %v408, 0
      %v541 = vsel %vm532, %v409, 0
      %v542 = vld [vmem:[%s1] sm:$0x3]
      %s543 = scalar_lea.vmem %s1, 2
      %v544 = vld [vmem:[%s543] sm:$0x3]
      %v553 = vunpack.c.l.b16 %v402
      %v554 = vunpack.c.l.b16 %v403
      %v555 = vunpack.c.l.b16 %v404
      %v556 = vunpack.c.l.b16 %v405
      %v557 = vunpack.c.l.b16 %v406
      %v558 = vunpack.c.l.b16 %v407
      %v559 = vunpack.c.l.b16 %v408
      %v560 = vunpack.c.l.b16 %v409
      %v561 = vpack.c.b16 %v554, %v553
      %v562 = vpack.c.b16 %v556, %v555
      %v563 = vpack.c.b16 %v558, %v557
      %v564 = vpack.c.b16 %v560, %v559
      %vm565 = vcmask 31744
      %v567 = vsel %vm565, %v561, 0
      %v570 = vsel %vm565, %v562, 0
      %v573 = vsel %vm565, %v563, 0
      %v576 = vsel %vm565, %v564, 0
      %vm578 = vcmask 1041408
      %v580 = vsel %vm578, %v544, 0
      %582 = vmatprep.subr.bf16.mxu0 0
      %583 = vmatpush1.bf16.msra.mxu0 0
      %584 = vmatprep.subr.bf16.mxu0 0
      %585 = vmatpush1.bf16.msra.mxu0 0
      %586 = vmatprep.subr.bf16.mxu0 0
      %587 = vmatpush1.bf16.msra.mxu0 0
      %588 = vmatprep.subr.bf16.mxu0 0
      %589 = vmatpush1.bf16.msra.mxu0 0
      %590 = vmatprep.subr.bf16.mxu0 0
      %591 = vmatpush1.bf16.msra.mxu0 0
      %592 = vmatprep.subr.bf16.mxu0 0
      %593 = vmatpush1.bf16.msra.mxu0 0
      %594 = vmatprep.subr.bf16.mxu0 0
      %595 = vmatpush1.bf16.msra.mxu0 0
      %596 = vmatprep.subr.bf16.mxu0 0
      %597 = vmatpush1.bf16.msra.mxu0 %v580
      %598 = vmatprep.subr.bf16.mxu0 0
      %599 = vmatpush2.bf16.msra.mxu0 0
      %600 = vmatprep.subr.bf16.mxu0 0
      %601 = vmatpush2.bf16.msra.mxu0 0
      %602 = vmatprep.subr.bf16.mxu0 0
      %603 = vmatpush2.bf16.msra.mxu0 0
      %604 = vmatprep.subr.bf16.mxu0 0
      %605 = vmatpush2.bf16.msra.mxu0 0
      %606 = vmatprep.subr.bf16.mxu0 0
      %607 = vmatpush2.bf16.msra.mxu0 0
      %608 = vmatprep.subr.bf16.mxu0 0
      %609 = vmatpush2.bf16.msra.mxu0 0
      %610 = vmatprep.subr.bf16.mxu0 0
      %611 = vmatpush2.bf16.msra.mxu0 0
      %612 = vmatprep.subr.bf16.mxu0 0
      %613 = vmatpush2.bf16.msra.mxu0 0
      %614 = vmatprep.mubr.bf16.mxu0 0
      %615 = vmatmul.mubr.bf16.gmra.mxu0 %v567
      %v616 = vpop.f32.mrf.mxu0
      %v617 = vadd.f32 0.0, %v616
      %v618 = vpop.f32.mrf.mxu0
      %v619 = vpop.f32.mrf.mxu0
      %v620 = vadd.f32 0.0, %v619
      %v621 = vpop.f32.mrf.mxu0
      %622 = vmatprep.mubr.bf16.mxu0 0
      %623 = vmatmul.mubr.bf16.gmra.mxu0 %v570
      %v624 = vpop.f32.mrf.mxu0
      %v625 = vadd.f32 0.0, %v624
      %v626 = vpop.f32.mrf.mxu0
      %v627 = vpop.f32.mrf.mxu0
      %v628 = vadd.f32 0.0, %v627
      %v629 = vpop.f32.mrf.mxu0
      %630 = vmatprep.mubr.bf16.mxu0 0
      %631 = vmatmul.mubr.bf16.gmra.mxu0 %v573
      %v632 = vpop.f32.mrf.mxu0
      %v633 = vadd.f32 0.0, %v632
      %v634 = vpop.f32.mrf.mxu0
      %v635 = vpop.f32.mrf.mxu0
      %v636 = vadd.f32 0.0, %v635
      %v637 = vpop.f32.mrf.mxu0
      %638 = vmatprep.mubr.bf16.mxu0 0
      %639 = vmatmul.mubr.bf16.gmra.mxu0 %v576
      %v640 = vpop.f32.mrf.mxu0
      %v641 = vadd.f32 0.0, %v640
      %v642 = vpop.f32.mrf.mxu0
      %v643 = vpop.f32.mrf.mxu0
      %v644 = vadd.f32 0.0, %v643
      %v645 = vpop.f32.mrf.mxu0
      %646 = vdwg.mxu0
      %v656 = vunpack.c.l.b16 %v533
      %v657 = vunpack.c.l.b16 %v534
      %v658 = vunpack.c.l.b16 %v535
      %v659 = vunpack.c.l.b16 %v536
      %v660 = vunpack.c.l.b16 %v537
      %v661 = vunpack.c.l.b16 %v538
      %v662 = vunpack.c.l.b16 %v539
      %v663 = vunpack.c.l.b16 %v540
      %v664 = vunpack.c.l.b16 %v541
      %v665 = vpack.c.b16 %v657, %v656
      %v666 = vpack.c.b16 %v659, %v658
      %v667 = vpack.c.b16 %v661, %v660
      %v668 = vpack.c.b16 %v663, %v662
      %v669 = vpack.c.b16 %v664, %v664
      %vm670 = vsmask.f32 4352
      %v672 = vshrl.u32 %v665, 16
      %v674 = vrot.slane %v672, 3
      %v675 = vshll.u32 %v665, 16
      %v677 = vrot.slane %v675, 4
      %v678 = vor.u32 %v674, %v677
      %v680 = vshrl.u32 %v666, 16
      %v682 = vrot.slane %v680, 3
      %v683 = vshll.u32 %v666, 16
      %v685 = vrot.slane %v683, 4
      %v686 = vor.u32 %v682, %v685
      %v687 = vsel %vm670, %v678, %v686
      %v689 = vshrl.u32 %v667, 16
      %v691 = vrot.slane %v689, 3
      %v692 = vshll.u32 %v667, 16
      %v694 = vrot.slane %v692, 4
      %v695 = vor.u32 %v691, %v694
      %v696 = vsel %vm670, %v686, %v695
      %v698 = vshrl.u32 %v668, 16
      %v700 = vrot.slane %v698, 3
      %v701 = vshll.u32 %v668, 16
      %v703 = vrot.slane %v701, 4
      %v704 = vor.u32 %v700, %v703
      %v705 = vsel %vm670, %v695, %v704
      %v707 = vshrl.u32 %v669, 16
      %v709 = vrot.slane %v707, 3
      %v710 = vshll.u32 %v669, 16
      %v712 = vrot.slane %v710, 4
      %v713 = vor.u32 %v709, %v712
      %v714 = vsel %vm670, %v704, %v713
      %v716 = vsel %vm565, %v687, 0
      %v719 = vsel %vm565, %v696, 0
      %v722 = vsel %vm565, %v705, 0
      %v725 = vsel %vm565, %v714, 0
      %v728 = vsel %vm578, %v542, 0
      %730 = vmatprep.subr.bf16.mxu0 0
      %731 = vmatpush1.bf16.msra.mxu0 0
      %732 = vmatprep.subr.bf16.mxu0 0
      %733 = vmatpush1.bf16.msra.mxu0 0
      %734 = vmatprep.subr.bf16.mxu0 0
      %735 = vmatpush1.bf16.msra.mxu0 0
      %736 = vmatprep.subr.bf16.mxu0 0
      %737 = vmatpush1.bf16.msra.mxu0 0
      %738 = vmatprep.subr.bf16.mxu0 0
      %739 = vmatpush1.bf16.msra.mxu0 0
      %740 = vmatprep.subr.bf16.mxu0 0
      %741 = vmatpush1.bf16.msra.mxu0 0
      %742 = vmatprep.subr.bf16.mxu0 0
      %743 = vmatpush1.bf16.msra.mxu0 0
      %744 = vmatprep.subr.bf16.mxu0 0
      %745 = vmatpush1.bf16.msra.mxu0 %v728
      %746 = vmatprep.subr.bf16.mxu0 0
      %747 = vmatpush2.bf16.msra.mxu0 0
      %748 = vmatprep.subr.bf16.mxu0 0
      %749 = vmatpush2.bf16.msra.mxu0 0
      %750 = vmatprep.subr.bf16.mxu0 0
      %751 = vmatpush2.bf16.msra.mxu0 0
      %752 = vmatprep.subr.bf16.mxu0 0
      %753 = vmatpush2.bf16.msra.mxu0 0
      %754 = vmatprep.subr.bf16.mxu0 0
      %755 = vmatpush2.bf16.msra.mxu0 0
      %756 = vmatprep.subr.bf16.mxu0 0
      %757 = vmatpush2.bf16.msra.mxu0 0
      %758 = vmatprep.subr.bf16.mxu0 0
      %759 = vmatpush2.bf16.msra.mxu0 0
      %760 = vmatprep.subr.bf16.mxu0 0
      %761 = vmatpush2.bf16.msra.mxu0 0
      %762 = vmatprep.mubr.bf16.mxu0 0
      %763 = vmatmul.mubr.bf16.gmra.mxu0 %v716
      %v764 = vpop.f32.mrf.mxu0
      %v765 = vadd.f32 %v617, %v764
      %v766 = vpop.f32.mrf.mxu0
      %v767 = vpop.f32.mrf.mxu0
      %v768 = vadd.f32 %v620, %v767
      %v769 = vpop.f32.mrf.mxu0
      %770 = vmatprep.mubr.bf16.mxu0 0
      %771 = vmatmul.mubr.bf16.gmra.mxu0 %v719
      %v772 = vpop.f32.mrf.mxu0
      %v773 = vadd.f32 %v625, %v772
      %v774 = vpop.f32.mrf.mxu0
      %v775 = vpop.f32.mrf.mxu0
      %v776 = vadd.f32 %v628, %v775
      %v777 = vpop.f32.mrf.mxu0
      %778 = vmatprep.mubr.bf16.mxu0 0
      %779 = vmatmul.mubr.bf16.gmra.mxu0 %v722
      %v780 = vpop.f32.mrf.mxu0
      %v781 = vadd.f32 %v633, %v780
      %v782 = vpop.f32.mrf.mxu0
      %v783 = vpop.f32.mrf.mxu0
      %v784 = vadd.f32 %v636, %v783
      %v785 = vpop.f32.mrf.mxu0
      %786 = vmatprep.mubr.bf16.mxu0 0
      %787 = vmatmul.mubr.bf16.gmra.mxu0 %v725
      %v788 = vpop.f32.mrf.mxu0
      %v789 = vadd.f32 %v641, %v788
      %v790 = vpop.f32.mrf.mxu0
      %v791 = vpop.f32.mrf.mxu0
      %v792 = vadd.f32 %v644, %v791
      %v793 = vpop.f32.mrf.mxu0
      %794 = vdwg.mxu0
      %v795 = vld [vmem:[#allocation2 + $0x4] sm:$0xf]
      %v796 = vld [vmem:[#allocation2 + $0x8] sm:$0xf]
      %v797 = vld [vmem:[#allocation2 + $0xc] sm:$0xf]
      %v798 = vld [vmem:[#allocation2 + $0x10] sm:$0xf]
      %v799 = vld [vmem:[#allocation2 + $0x14] sm:$0xf]
      %v800 = vld [vmem:[#allocation2 + $0x18] sm:$0xf]
      %v801 = vld [vmem:[#allocation2 + $0x1c] sm:$0xf]
      %v802 = vld [vmem:[#allocation2 + $0x20] sm:$0xf]
      %v803 = vld [vmem:[#allocation2 + $0x24] sm:$0x1]
      %v804 = vsel %vm393, 1, 0
      %v805 = vsel %vm394, 1, 0
      %v806 = vsel %vm395, 1, 0
      %v807 = vsel %vm396, 1, 0
      %v808 = vsel %vm397, 1, 0
      %v809 = vsel %vm398, 1, 0
      %v810 = vsel %vm399, 1, 0
      %v811 = vsel %vm400, 1, 0
      %vm812 = vcmp.eq.s32.totalorder %v804, 1
      %vm813 = vcmp.eq.s32.totalorder %v805, 1
      %vm814 = vcmp.eq.s32.totalorder %v806, 1
      %vm815 = vcmp.eq.s32.totalorder %v807, 1
      %vm816 = vcmp.eq.s32.totalorder %v808, 1
      %vm817 = vcmp.eq.s32.totalorder %v809, 1
      %vm818 = vcmp.eq.s32.totalorder %v810, 1
      %vm819 = vcmp.eq.s32.totalorder %v811, 1
      %vm820 = vmpackc.low %vm812, %vm812
      %vm821 = vmpackc.low %vm813, %vm813
      %vm822 = vmpackc.low %vm814, %vm814
      %vm823 = vmpackc.low %vm815, %vm815
      %vm824 = vmpackc.low %vm816, %vm816
      %vm825 = vmpackc.low %vm817, %vm817
      %vm826 = vmpackc.low %vm818, %vm818
      %vm827 = vmpackc.low %vm819, %vm819
      %v828 = vsel %vm820, 65537, 0
      %v829 = vsel %vm821, 65537, 0
      %v830 = vsel %vm822, 65537, 0
      %v831 = vsel %vm823, 65537, 0
      %v832 = vsel %vm824, 65537, 0
      %v833 = vsel %vm825, 65537, 0
      %v834 = vsel %vm826, 65537, 0
      %v835 = vsel %vm827, 65537, 0
      %vm836 = vsmask.f32 256
      %vm837 = vsmask.f32 4368
      %vm838 = vmor %vm836, %vm837
      %v840 = vshrl.u32 %v828, 16
      %v842 = vrot.slane %v840, 7
      %v843 = vshll.u32 %v828, 16
      %v845 = vor.u32 %v842, %v843
      %v846 = vrot.slane %v842, 4
      %v848 = vshrl.u32 %v829, 16
      %v850 = vrot.slane %v848, 7
      %v851 = vshll.u32 %v829, 16
      %v853 = vor.u32 %v850, %v851
      %v854 = vsel %vm838, %v846, %v853
      %v855 = vrot.slane %v850, 4
      %v857 = vshrl.u32 %v830, 16
      %v859 = vrot.slane %v857, 7
      %v860 = vshll.u32 %v830, 16
      %v862 = vor.u32 %v859, %v860
      %v863 = vsel %vm838, %v855, %v862
      %v864 = vrot.slane %v859, 4
      %v866 = vshrl.u32 %v831, 16
      %v868 = vrot.slane %v866, 7
      %v869 = vshll.u32 %v831, 16
      %v871 = vor.u32 %v868, %v869
      %v872 = vsel %vm838, %v864, %v871
      %v873 = vrot.slane %v868, 4
      %v875 = vshrl.u32 %v832, 16
      %v877 = vrot.slane %v875, 7
      %v878 = vshll.u32 %v832, 16
      %v880 = vor.u32 %v877, %v878
      %v881 = vsel %vm838, %v873, %v880
      %v882 = vrot.slane %v877, 4
      %v884 = vshrl.u32 %v833, 16
      %v886 = vrot.slane %v884, 7
      %v887 = vshll.u32 %v833, 16
      %v889 = vor.u32 %v886, %v887
      %v890 = vsel %vm838, %v882, %v889
      %v891 = vrot.slane %v886, 4
      %v893 = vshrl.u32 %v834, 16
      %v895 = vrot.slane %v893, 7
      %v896 = vshll.u32 %v834, 16
      %v898 = vor.u32 %v895, %v896
      %v899 = vsel %vm838, %v891, %v898
      %v900 = vrot.slane %v895, 4
      %v902 = vshrl.u32 %v835, 16
      %v904 = vrot.slane %v902, 7
      %v905 = vshll.u32 %v835, 16
      %v907 = vor.u32 %v904, %v905
      %v908 = vsel %vm838, %v900, %v907
      %v909 = vrot.slane %v904, 4
      %vm910 = vcmp.ne.s16.totalorder %v845, 0
      %vm911 = vcmp.ne.s16.totalorder %v854, 0
      %vm912 = vcmp.ne.s16.totalorder %v863, 0
      %vm913 = vcmp.ne.s16.totalorder %v872, 0
      %vm914 = vcmp.ne.s16.totalorder %v881, 0
      %vm915 = vcmp.ne.s16.totalorder %v890, 0
      %vm916 = vcmp.ne.s16.totalorder %v899, 0
      %vm917 = vcmp.ne.s16.totalorder %v908, 0
      %vm918 = vcmp.ne.s16.totalorder %v909, 0
      %v919 = vsel %vm910, %v795, 0
      %v920 = vsel %vm911, %v796, 0
      %v921 = vsel %vm912, %v797, 0
      %v922 = vsel %vm913, %v798, 0
      %v923 = vsel %vm914, %v799, 0
      %v924 = vsel %vm915, %v800, 0
      %v925 = vsel %vm916, %v801, 0
      %v926 = vsel %vm917, %v802, 0
      %v927 = vsel %vm918, %v803, 0
      %s928 = scalar_lea.vmem %s1, 4
      %v929 = vld [vmem:[%s928] sm:$0x3]
      %v939 = vunpack.c.l.b16 %v919
      %v940 = vunpack.c.l.b16 %v920
      %v941 = vunpack.c.l.b16 %v921
      %v942 = vunpack.c.l.b16 %v922
      %v943 = vunpack.c.l.b16 %v923
      %v944 = vunpack.c.l.b16 %v924
      %v945 = vunpack.c.l.b16 %v925
      %v946 = vunpack.c.l.b16 %v926
      %v947 = vunpack.c.l.b16 %v927
      %v948 = vpack.c.b16 %v940, %v939
      %v949 = vpack.c.b16 %v942, %v941
      %v950 = vpack.c.b16 %v944, %v943
      %v951 = vpack.c.b16 %v946, %v945
      %v952 = vpack.c.b16 %v947, %v947
      %vm953 = vsmask.f32 7424
      %v955 = vshrl.u32 %v948, 16
      %v957 = vshll.u32 %v948, 16
      %v959 = vrot.slane %v957, 1
      %v960 = vor.u32 %v955, %v959
      %v962 = vshll.u32 %v949, 16
      %v964 = vrot.slane %v962, 1
      %v965 = vsel %vm953, %v960, %v964
      %v966 = vshrl.u32 %v949, 16
      %v968 = vor.u32 %v966, %v964
      %v970 = vshll.u32 %v950, 16
      %v972 = vrot.slane %v970, 1
      %v973 = vsel %vm953, %v968, %v972
      %v974 = vshrl.u32 %v950, 16
      %v976 = vor.u32 %v974, %v972
      %v978 = vshll.u32 %v951, 16
      %v980 = vrot.slane %v978, 1
      %v981 = vsel %vm953, %v976, %v980
      %v982 = vshrl.u32 %v951, 16
      %v984 = vor.u32 %v982, %v980
      %v986 = vshll.u32 %v952, 16
      %v988 = vrot.slane %v986, 1
      %v989 = vsel %vm953, %v984, %v988
      %v991 = vsel %vm565, %v965, 0
      %v994 = vsel %vm565, %v973, 0
      %v997 = vsel %vm565, %v981, 0
      %v1000 = vsel %vm565, %v989, 0
      %v1003 = vsel %vm578, %v929, 0
      %1005 = vmatprep.subr.bf16.mxu0 0
      %1006 = vmatpush1.bf16.msra.mxu0 0
      %1007 = vmatprep.subr.bf16.mxu0 0
      %1008 = vmatpush1.bf16.msra.mxu0 0
      %1009 = vmatprep.subr.bf16.mxu0 0
      %1010 = vmatpush1.bf16.msra.mxu0 0
      %1011 = vmatprep.subr.bf16.mxu0 0
      %1012 = vmatpush1.bf16.msra.mxu0 0
      %1013 = vmatprep.subr.bf16.mxu0 0
      %1014 = vmatpush1.bf16.msra.mxu0 0
      %1015 = vmatprep.subr.bf16.mxu0 0
      %1016 = vmatpush1.bf16.msra.mxu0 0
      %1017 = vmatprep.subr.bf16.mxu0 0
      %1018 = vmatpush1.bf16.msra.mxu0 0
      %1019 = vmatprep.subr.bf16.mxu0 0
      %1020 = vmatpush1.bf16.msra.mxu0 %v1003
      %1021 = vmatprep.subr.bf16.mxu0 0
      %1022 = vmatpush2.bf16.msra.mxu0 0
      %1023 = vmatprep.subr.bf16.mxu0 0
      %1024 = vmatpush2.bf16.msra.mxu0 0
      %1025 = vmatprep.subr.bf16.mxu0 0
      %1026 = vmatpush2.bf16.msra.mxu0 0
      %1027 = vmatprep.subr.bf16.mxu0 0
      %1028 = vmatpush2.bf16.msra.mxu0 0
      %1029 = vmatprep.subr.bf16.mxu0 0
      %1030 = vmatpush2.bf16.msra.mxu0 0
      %1031 = vmatprep.subr.bf16.mxu0 0
      %1032 = vmatpush2.bf16.msra.mxu0 0
      %1033 = vmatprep.subr.bf16.mxu0 0
      %1034 = vmatpush2.bf16.msra.mxu0 0
      %1035 = vmatprep.subr.bf16.mxu0 0
      %1036 = vmatpush2.bf16.msra.mxu0 0
      %1037 = vmatprep.mubr.bf16.mxu0 0
      %1038 = vmatmul.mubr.bf16.gmra.mxu0 %v991
      %v1039 = vpop.f32.mrf.mxu0
      %v1040 = vadd.f32 0.0, %v1039
      %v1041 = vpop.f32.mrf.mxu0
      %v1042 = vpop.f32.mrf.mxu0
      %v1043 = vadd.f32 0.0, %v1042
      %v1044 = vpop.f32.mrf.mxu0
      %1045 = vmatprep.mubr.bf16.mxu0 0
      %1046 = vmatmul.mubr.bf16.gmra.mxu0 %v994
      %v1047 = vpop.f32.mrf.mxu0
      %v1048 = vadd.f32 0.0, %v1047
      %v1049 = vpop.f32.mrf.mxu0
      %v1050 = vpop.f32.mrf.mxu0
      %v1051 = vadd.f32 0.0, %v1050
      %v1052 = vpop.f32.mrf.mxu0
      %1053 = vmatprep.mubr.bf16.mxu0 0
      %1054 = vmatmul.mubr.bf16.gmra.mxu0 %v997
      %v1055 = vpop.f32.mrf.mxu0
      %v1056 = vadd.f32 0.0, %v1055
      %v1057 = vpop.f32.mrf.mxu0
      %v1058 = vpop.f32.mrf.mxu0
      %v1059 = vadd.f32 0.0, %v1058
      %v1060 = vpop.f32.mrf.mxu0
      %1061 = vmatprep.mubr.bf16.mxu0 0
      %1062 = vmatmul.mubr.bf16.gmra.mxu0 %v1000
      %v1063 = vpop.f32.mrf.mxu0
      %v1064 = vadd.f32 0.0, %v1063
      %v1065 = vpop.f32.mrf.mxu0
      %v1066 = vpop.f32.mrf.mxu0
      %v1067 = vadd.f32 0.0, %v1066
      %v1068 = vpop.f32.mrf.mxu0
      %1069 = vdwg.mxu0
      %v1070 = vadd.f32 %v765, %v1040
      %v1071 = vadd.f32 %v768, %v1043
      %v1072 = vadd.f32 %v773, %v1048
      %v1073 = vadd.f32 %v776, %v1051
      %v1074 = vadd.f32 %v781, %v1056
      %v1075 = vadd.f32 %v784, %v1059
      %v1076 = vadd.f32 %v789, %v1064
      %v1077 = vadd.f32 %v792, %v1067
      %v1078 = vld [vmem:[#allocation2 + $0x4] sm:$0x8]
      %v1079 = vld [vmem:[#allocation2 + $0x24] sm:$0xf]
      %v1080 = vsel %vm524, %v1078, 0
      %v1081 = vsel %vm525, %v796, 0
      %v1082 = vsel %vm526, %v797, 0
      %v1083 = vsel %vm527, %v798, 0
      %v1084 = vsel %vm528, %v799, 0
      %v1085 = vsel %vm529, %v800, 0
      %v1086 = vsel %vm530, %v801, 0
      %v1087 = vsel %vm531, %v802, 0
      %v1088 = vsel %vm532, %v1079, 0
      %s1089 = scalar_lea.vmem %s1, 6
      %v1090 = vld [vmem:[%s1089] sm:$0x3]
      %v1100 = vunpack.c.l.b16 %v1080
      %v1101 = vunpack.c.l.b16 %v1081
      %v1102 = vunpack.c.l.b16 %v1082
      %v1103 = vunpack.c.l.b16 %v1083
      %v1104 = vunpack.c.l.b16 %v1084
      %v1105 = vunpack.c.l.b16 %v1085
      %v1106 = vunpack.c.l.b16 %v1086
      %v1107 = vunpack.c.l.b16 %v1087
      %v1108 = vunpack.c.l.b16 %v1088
      %v1109 = vpack.c.b16 %v1101, %v1100
      %v1110 = vpack.c.b16 %v1103, %v1102
      %v1111 = vpack.c.b16 %v1105, %v1104
      %v1112 = vpack.c.b16 %v1107, %v1106
      %v1113 = vpack.c.b16 %v1108, %v1108
      %v1115 = vshrl.u32 %v1109, 16
      %v1117 = vrot.slane %v1115, 3
      %v1118 = vshll.u32 %v1109, 16
      %v1120 = vrot.slane %v1118, 4
      %v1121 = vor.u32 %v1117, %v1120
      %v1123 = vshrl.u32 %v1110, 16
      %v1125 = vrot.slane %v1123, 3
      %v1126 = vshll.u32 %v1110, 16
      %v1128 = vrot.slane %v1126, 4
      %v1129 = vor.u32 %v1125, %v1128
      %v1130 = vsel %vm670, %v1121, %v1129
      %v1132 = vshrl.u32 %v1111, 16
      %v1134 = vrot.slane %v1132, 3
      %v1135 = vshll.u32 %v1111, 16
      %v1137 = vrot.slane %v1135, 4
      %v1138 = vor.u32 %v1134, %v1137
      %v1139 = vsel %vm670, %v1129, %v1138
      %v1141 = vshrl.u32 %v1112, 16
      %v1143 = vrot.slane %v1141, 3
      %v1144 = vshll.u32 %v1112, 16
      %v1146 = vrot.slane %v1144, 4
      %v1147 = vor.u32 %v1143, %v1146
      %v1148 = vsel %vm670, %v1138, %v1147
      %v1150 = vshrl.u32 %v1113, 16
      %v1152 = vrot.slane %v1150, 3
      %v1153 = vshll.u32 %v1113, 16
      %v1155 = vrot.slane %v1153, 4
      %v1156 = vor.u32 %v1152, %v1155
      %v1157 = vsel %vm670, %v1147, %v1156
      %v1159 = vsel %vm565, %v1130, 0
      %v1162 = vsel %vm565, %v1139, 0
      %v1165 = vsel %vm565, %v1148, 0
      %v1168 = vsel %vm565, %v1157, 0
      %v1171 = vsel %vm578, %v1090, 0
      %1173 = vmatprep.subr.bf16.mxu0 0
      %1174 = vmatpush1.bf16.msra.mxu0 0
      %1175 = vmatprep.subr.bf16.mxu0 0
      %1176 = vmatpush1.bf16.msra.mxu0 0
      %1177 = vmatprep.subr.bf16.mxu0 0
      %1178 = vmatpush1.bf16.msra.mxu0 0
      %1179 = vmatprep.subr.bf16.mxu0 0
      %1180 = vmatpush1.bf16.msra.mxu0 0
      %1181 = vmatprep.subr.bf16.mxu0 0
      %1182 = vmatpush1.bf16.msra.mxu0 0
      %1183 = vmatprep.subr.bf16.mxu0 0
      %1184 = vmatpush1.bf16.msra.mxu0 0
      %1185 = vmatprep.subr.bf16.mxu0 0
      %1186 = vmatpush1.bf16.msra.mxu0 0
      %1187 = vmatprep.subr.bf16.mxu0 0
      %1188 = vmatpush1.bf16.msra.mxu0 %v1171
      %1189 = vmatprep.subr.bf16.mxu0 0
      %1190 = vmatpush2.bf16.msra.mxu0 0
      %1191 = vmatprep.subr.bf16.mxu0 0
      %1192 = vmatpush2.bf16.msra.mxu0 0
      %1193 = vmatprep.subr.bf16.mxu0 0
      %1194 = vmatpush2.bf16.msra.mxu0 0
      %1195 = vmatprep.subr.bf16.mxu0 0
      %1196 = vmatpush2.bf16.msra.mxu0 0
      %1197 = vmatprep.subr.bf16.mxu0 0
      %1198 = vmatpush2.bf16.msra.mxu0 0
      %1199 = vmatprep.subr.bf16.mxu0 0
      %1200 = vmatpush2.bf16.msra.mxu0 0
      %1201 = vmatprep.subr.bf16.mxu0 0
      %1202 = vmatpush2.bf16.msra.mxu0 0
      %1203 = vmatprep.subr.bf16.mxu0 0
      %1204 = vmatpush2.bf16.msra.mxu0 0
      %1205 = vmatprep.mubr.bf16.mxu0 0
      %1206 = vmatmul.mubr.bf16.gmra.mxu0 %v1159
      %v1207 = vpop.f32.mrf.mxu0
      %v1208 = vadd.f32 0.0, %v1207
      %v1209 = vpop.f32.mrf.mxu0
      %v1210 = vpop.f32.mrf.mxu0
      %v1211 = vadd.f32 0.0, %v1210
      %v1212 = vpop.f32.mrf.mxu0
      %1213 = vmatprep.mubr.bf16.mxu0 0
      %1214 = vmatmul.mubr.bf16.gmra.mxu0 %v1162
      %v1215 = vpop.f32.mrf.mxu0
      %v1216 = vadd.f32 0.0, %v1215
      %v1217 = vpop.f32.mrf.mxu0
      %v1218 = vpop.f32.mrf.mxu0
      %v1219 = vadd.f32 0.0, %v1218
      %v1220 = vpop.f32.mrf.mxu0
      %1221 = vmatprep.mubr.bf16.mxu0 0
      %1222 = vmatmul.mubr.bf16.gmra.mxu0 %v1165
      %v1223 = vpop.f32.mrf.mxu0
      %v1224 = vadd.f32 0.0, %v1223
      %v1225 = vpop.f32.mrf.mxu0
      %v1226 = vpop.f32.mrf.mxu0
      %v1227 = vadd.f32 0.0, %v1226
      %v1228 = vpop.f32.mrf.mxu0
      %1229 = vmatprep.mubr.bf16.mxu0 0
      %1230 = vmatmul.mubr.bf16.gmra.mxu0 %v1168
      %v1231 = vpop.f32.mrf.mxu0
      %v1232 = vadd.f32 0.0, %v1231
      %v1233 = vpop.f32.mrf.mxu0
      %v1234 = vpop.f32.mrf.mxu0
      %v1235 = vadd.f32 0.0, %v1234
      %v1236 = vpop.f32.mrf.mxu0
      %1237 = vdwg.mxu0
      %v1238 = vadd.f32 %v1070, %v1208
      %v1239 = vadd.f32 %v1071, %v1211
      %v1240 = vadd.f32 %v1072, %v1216
      %v1241 = vadd.f32 %v1073, %v1219
      %v1242 = vadd.f32 %v1074, %v1224
      %v1243 = vadd.f32 %v1075, %v1227
      %v1244 = vadd.f32 %v1076, %v1232
      %v1245 = vadd.f32 %v1077, %v1235
      %s1246 = scalar_lea.vmem %s1, 8
      %v1247 = vld [vmem:[%s1246] sm:$0x3]
      %v1256 = vunpack.c.l.b16 %v796
      %v1257 = vunpack.c.l.b16 %v797
      %v1258 = vunpack.c.l.b16 %v798
      %v1259 = vunpack.c.l.b16 %v799
      %v1260 = vunpack.c.l.b16 %v800
      %v1261 = vunpack.c.l.b16 %v801
      %v1262 = vunpack.c.l.b16 %v802
      %v1263 = vunpack.c.l.b16 %v1079
      %v1264 = vpack.c.b16 %v1257, %v1256
      %v1265 = vpack.c.b16 %v1259, %v1258
      %v1266 = vpack.c.b16 %v1261, %v1260
      %v1267 = vpack.c.b16 %v1263, %v1262
      %v1269 = vsel %vm565, %v1264, 0
      %v1272 = vsel %vm565, %v1265, 0
      %v1275 = vsel %vm565, %v1266, 0
      %v1278 = vsel %vm565, %v1267, 0
      %v1281 = vsel %vm578, %v1247, 0
      %1283 = vmatprep.subr.bf16.mxu0 0
      %1284 = vmatpush1.bf16.msra.mxu0 0
      %1285 = vmatprep.subr.bf16.mxu0 0
      %1286 = vmatpush1.bf16.msra.mxu0 0
      %1287 = vmatprep.subr.bf16.mxu0 0
      %1288 = vmatpush1.bf16.msra.mxu0 0
      %1289 = vmatprep.subr.bf16.mxu0 0
      %1290 = vmatpush1.bf16.msra.mxu0 0
      %1291 = vmatprep.subr.bf16.mxu0 0
      %1292 = vmatpush1.bf16.msra.mxu0 0
      %1293 = vmatprep.subr.bf16.mxu0 0
      %1294 = vmatpush1.bf16.msra.mxu0 0
      %1295 = vmatprep.subr.bf16.mxu0 0
      %1296 = vmatpush1.bf16.msra.mxu0 0
      %1297 = vmatprep.subr.bf16.mxu0 0
      %1298 = vmatpush1.bf16.msra.mxu0 %v1281
      %1299 = vmatprep.subr.bf16.mxu0 0
      %1300 = vmatpush2.bf16.msra.mxu0 0
      %1301 = vmatprep.subr.bf16.mxu0 0
      %1302 = vmatpush2.bf16.msra.mxu0 0
      %1303 = vmatprep.subr.bf16.mxu0 0
      %1304 = vmatpush2.bf16.msra.mxu0 0
      %1305 = vmatprep.subr.bf16.mxu0 0
      %1306 = vmatpush2.bf16.msra.mxu0 0
      %1307 = vmatprep.subr.bf16.mxu0 0
      %1308 = vmatpush2.bf16.msra.mxu0 0
      %1309 = vmatprep.subr.bf16.mxu0 0
      %1310 = vmatpush2.bf16.msra.mxu0 0
      %1311 = vmatprep.subr.bf16.mxu0 0
      %1312 = vmatpush2.bf16.msra.mxu0 0
      %1313 = vmatprep.subr.bf16.mxu0 0
      %1314 = vmatpush2.bf16.msra.mxu0 0
      %1315 = vmatprep.mubr.bf16.mxu0 0
      %1316 = vmatmul.mubr.bf16.gmra.mxu0 %v1269
      %v1317 = vpop.f32.mrf.mxu0
      %v1318 = vadd.f32 0.0, %v1317
      %v1319 = vpop.f32.mrf.mxu0
      %v1320 = vpop.f32.mrf.mxu0
      %v1321 = vadd.f32 0.0, %v1320
      %v1322 = vpop.f32.mrf.mxu0
      %1323 = vmatprep.mubr.bf16.mxu0 0
      %1324 = vmatmul.mubr.bf16.gmra.mxu0 %v1272
      %v1325 = vpop.f32.mrf.mxu0
      %v1326 = vadd.f32 0.0, %v1325
      %v1327 = vpop.f32.mrf.mxu0
      %v1328 = vpop.f32.mrf.mxu0
      %v1329 = vadd.f32 0.0, %v1328
      %v1330 = vpop.f32.mrf.mxu0
      %1331 = vmatprep.mubr.bf16.mxu0 0
      %1332 = vmatmul.mubr.bf16.gmra.mxu0 %v1275
      %v1333 = vpop.f32.mrf.mxu0
      %v1334 = vadd.f32 0.0, %v1333
      %v1335 = vpop.f32.mrf.mxu0
      %v1336 = vpop.f32.mrf.mxu0
      %v1337 = vadd.f32 0.0, %v1336
      %v1338 = vpop.f32.mrf.mxu0
      %1339 = vmatprep.mubr.bf16.mxu0 0
      %1340 = vmatmul.mubr.bf16.gmra.mxu0 %v1278
      %v1341 = vpop.f32.mrf.mxu0
      %v1342 = vadd.f32 0.0, %v1341
      %v1343 = vpop.f32.mrf.mxu0
      %v1344 = vpop.f32.mrf.mxu0
      %v1345 = vadd.f32 0.0, %v1344
      %v1346 = vpop.f32.mrf.mxu0
      %1347 = vdwg.mxu0
      %v1348 = vadd.f32 %v1238, %v1318
      %v1349 = vadd.f32 %v1239, %v1321
      %v1350 = vadd.f32 %v1240, %v1326
      %v1351 = vadd.f32 %v1241, %v1329
      %v1352 = vadd.f32 %v1242, %v1334
      %v1353 = vadd.f32 %v1243, %v1337
      %v1354 = vadd.f32 %v1244, %v1342
      %v1355 = vadd.f32 %v1245, %v1345
      %v1356 = vld [vmem:[#allocation2 + $0x8] sm:$0xf]
      %v1357 = vld [vmem:[#allocation2 + $0xc] sm:$0xf]
      %v1358 = vld [vmem:[#allocation2 + $0x10] sm:$0xf]
      %v1359 = vld [vmem:[#allocation2 + $0x14] sm:$0xf]
      %v1360 = vld [vmem:[#allocation2 + $0x18] sm:$0xf]
      %v1361 = vld [vmem:[#allocation2 + $0x1c] sm:$0xf]
      %v1362 = vld [vmem:[#allocation2 + $0x20] sm:$0xf]
      %v1363 = vld [vmem:[#allocation2 + $0x24] sm:$0xf]
      %v1364 = vld [vmem:[#allocation2 + $0x28] sm:$0x1]
      %v1365 = vsel %vm910, %v1356, 0
      %v1366 = vsel %vm911, %v1357, 0
      %v1367 = vsel %vm912, %v1358, 0
      %v1368 = vsel %vm913, %v1359, 0
      %v1369 = vsel %vm914, %v1360, 0
      %v1370 = vsel %vm915, %v1361, 0
      %v1371 = vsel %vm916, %v1362, 0
      %v1372 = vsel %vm917, %v1363, 0
      %v1373 = vsel %vm918, %v1364, 0
      %s1374 = scalar_lea.vmem %s1, 10
      %v1375 = vld [vmem:[%s1374] sm:$0x3]
      %v1385 = vunpack.c.l.b16 %v1365
      %v1386 = vunpack.c.l.b16 %v1366
      %v1387 = vunpack.c.l.b16 %v1367
      %v1388 = vunpack.c.l.b16 %v1368
      %v1389 = vunpack.c.l.b16 %v1369
      %v1390 = vunpack.c.l.b16 %v1370
      %v1391 = vunpack.c.l.b16 %v1371
      %v1392 = vunpack.c.l.b16 %v1372
      %v1393 = vunpack.c.l.b16 %v1373
      %v1394 = vpack.c.b16 %v1386, %v1385
      %v1395 = vpack.c.b16 %v1388, %v1387
      %v1396 = vpack.c.b16 %v1390, %v1389
      %v1397 = vpack.c.b16 %v1392, %v1391
      %v1398 = vpack.c.b16 %v1393, %v1393
      %v1400 = vshrl.u32 %v1394, 16
      %v1402 = vshll.u32 %v1394, 16
      %v1404 = vrot.slane %v1402, 1
      %v1405 = vor.u32 %v1400, %v1404
      %v1407 = vshll.u32 %v1395, 16
      %v1409 = vrot.slane %v1407, 1
      %v1410 = vsel %vm953, %v1405, %v1409
      %v1411 = vshrl.u32 %v1395, 16
      %v1413 = vor.u32 %v1411, %v1409
      %v1415 = vshll.u32 %v1396, 16
      %v1417 = vrot.slane %v1415, 1
      %v1418 = vsel %vm953, %v1413, %v1417
      %v1419 = vshrl.u32 %v1396, 16
      %v1421 = vor.u32 %v1419, %v1417
      %v1423 = vshll.u32 %v1397, 16
      %v1425 = vrot.slane %v1423, 1
      %v1426 = vsel %vm953, %v1421, %v1425
      %v1427 = vshrl.u32 %v1397, 16
      %v1429 = vor.u32 %v1427, %v1425
      %v1431 = vshll.u32 %v1398, 16
      %v1433 = vrot.slane %v1431, 1
      %v1434 = vsel %vm953, %v1429, %v1433
      %v1436 = vsel %vm565, %v1410, 0
      %v1439 = vsel %vm565, %v1418, 0
      %v1442 = vsel %vm565, %v1426, 0
      %v1445 = vsel %vm565, %v1434, 0
      %v1448 = vsel %vm578, %v1375, 0
      %1450 = vmatprep.subr.bf16.mxu0 0
      %1451 = vmatpush1.bf16.msra.mxu0 0
      %1452 = vmatprep.subr.bf16.mxu0 0
      %1453 = vmatpush1.bf16.msra.mxu0 0
      %1454 = vmatprep.subr.bf16.mxu0 0
      %1455 = vmatpush1.bf16.msra.mxu0 0
      %1456 = vmatprep.subr.bf16.mxu0 0
      %1457 = vmatpush1.bf16.msra.mxu0 0
      %1458 = vmatprep.subr.bf16.mxu0 0
      %1459 = vmatpush1.bf16.msra.mxu0 0
      %1460 = vmatprep.subr.bf16.mxu0 0
      %1461 = vmatpush1.bf16.msra.mxu0 0
      %1462 = vmatprep.subr.bf16.mxu0 0
      %1463 = vmatpush1.bf16.msra.mxu0 0
      %1464 = vmatprep.subr.bf16.mxu0 0
      %1465 = vmatpush1.bf16.msra.mxu0 %v1448
      %1466 = vmatprep.subr.bf16.mxu0 0
      %1467 = vmatpush2.bf16.msra.mxu0 0
      %1468 = vmatprep.subr.bf16.mxu0 0
      %1469 = vmatpush2.bf16.msra.mxu0 0
      %1470 = vmatprep.subr.bf16.mxu0 0
      %1471 = vmatpush2.bf16.msra.mxu0 0
      %1472 = vmatprep.subr.bf16.mxu0 0
      %1473 = vmatpush2.bf16.msra.mxu0 0
      %1474 = vmatprep.subr.bf16.mxu0 0
      %1475 = vmatpush2.bf16.msra.mxu0 0
      %1476 = vmatprep.subr.bf16.mxu0 0
      %1477 = vmatpush2.bf16.msra.mxu0 0
      %1478 = vmatprep.subr.bf16.mxu0 0
      %1479 = vmatpush2.bf16.msra.mxu0 0
      %1480 = vmatprep.subr.bf16.mxu0 0
      %1481 = vmatpush2.bf16.msra.mxu0 0
      %1482 = vmatprep.mubr.bf16.mxu0 0
      %1483 = vmatmul.mubr.bf16.gmra.mxu0 %v1436
      %v1484 = vpop.f32.mrf.mxu0
      %v1485 = vadd.f32 0.0, %v1484
      %v1486 = vpop.f32.mrf.mxu0
      %v1487 = vpop.f32.mrf.mxu0
      %v1488 = vadd.f32 0.0, %v1487
      %v1489 = vpop.f32.mrf.mxu0
      %1490 = vmatprep.mubr.bf16.mxu0 0
      %1491 = vmatmul.mubr.bf16.gmra.mxu0 %v1439
      %v1492 = vpop.f32.mrf.mxu0
      %v1493 = vadd.f32 0.0, %v1492
      %v1494 = vpop.f32.mrf.mxu0
      %v1495 = vpop.f32.mrf.mxu0
      %v1496 = vadd.f32 0.0, %v1495
      %v1497 = vpop.f32.mrf.mxu0
      %1498 = vmatprep.mubr.bf16.mxu0 0
      %1499 = vmatmul.mubr.bf16.gmra.mxu0 %v1442
      %v1500 = vpop.f32.mrf.mxu0
      %v1501 = vadd.f32 0.0, %v1500
      %v1502 = vpop.f32.mrf.mxu0
      %v1503 = vpop.f32.mrf.mxu0
      %v1504 = vadd.f32 0.0, %v1503
      %v1505 = vpop.f32.mrf.mxu0
      %1506 = vmatprep.mubr.bf16.mxu0 0
      %1507 = vmatmul.mubr.bf16.gmra.mxu0 %v1445
      %v1508 = vpop.f32.mrf.mxu0
      %v1509 = vadd.f32 0.0, %v1508
      %v1510 = vpop.f32.mrf.mxu0
      %v1511 = vpop.f32.mrf.mxu0
      %v1512 = vadd.f32 0.0, %v1511
      %v1513 = vpop.f32.mrf.mxu0
      %1514 = vdwg.mxu0
      %v1515 = vadd.f32 %v1348, %v1485
      %v1516 = vadd.f32 %v1349, %v1488
      %v1517 = vadd.f32 %v1350, %v1493
      %v1518 = vadd.f32 %v1351, %v1496
      %v1519 = vadd.f32 %v1352, %v1501
      %v1520 = vadd.f32 %v1353, %v1504
      %v1521 = vadd.f32 %v1354, %v1509
      %v1522 = vadd.f32 %v1355, %v1512
      %v1523 = vld [vmem:[#allocation2 + $0x8] sm:$0x8]
      %v1524 = vld [vmem:[#allocation2 + $0x28] sm:$0xf]
      %v1525 = vsel %vm524, %v1523, 0
      %v1526 = vsel %vm525, %v1357, 0
      %v1527 = vsel %vm526, %v1358, 0
      %v1528 = vsel %vm527, %v1359, 0
      %v1529 = vsel %vm528, %v1360, 0
      %v1530 = vsel %vm529, %v1361, 0
      %v1531 = vsel %vm530, %v1362, 0
      %v1532 = vsel %vm531, %v1363, 0
      %v1533 = vsel %vm532, %v1524, 0
      %s1534 = scalar_lea.vmem %s1, 12
      %v1535 = vld [vmem:[%s1534] sm:$0x3]
      %v1545 = vunpack.c.l.b16 %v1525
      %v1546 = vunpack.c.l.b16 %v1526
      %v1547 = vunpack.c.l.b16 %v1527
      %v1548 = vunpack.c.l.b16 %v1528
      %v1549 = vunpack.c.l.b16 %v1529
      %v1550 = vunpack.c.l.b16 %v1530
      %v1551 = vunpack.c.l.b16 %v1531
      %v1552 = vunpack.c.l.b16 %v1532
      %v1553 = vunpack.c.l.b16 %v1533
      %v1554 = vpack.c.b16 %v1546, %v1545
      %v1555 = vpack.c.b16 %v1548, %v1547
      %v1556 = vpack.c.b16 %v1550, %v1549
      %v1557 = vpack.c.b16 %v1552, %v1551
      %v1558 = vpack.c.b16 %v1553, %v1553
      %v1560 = vshrl.u32 %v1554, 16
      %v1562 = vrot.slane %v1560, 3
      %v1563 = vshll.u32 %v1554, 16
      %v1565 = vrot.slane %v1563, 4
      %v1566 = vor.u32 %v1562, %v1565
      %v1568 = vshrl.u32 %v1555, 16
      %v1570 = vrot.slane %v1568, 3
      %v1571 = vshll.u32 %v1555, 16
      %v1573 = vrot.slane %v1571, 4
      %v1574 = vor.u32 %v1570, %v1573
      %v1575 = vsel %vm670, %v1566, %v1574
      %v1577 = vshrl.u32 %v1556, 16
      %v1579 = vrot.slane %v1577, 3
      %v1580 = vshll.u32 %v1556, 16
      %v1582 = vrot.slane %v1580, 4
      %v1583 = vor.u32 %v1579, %v1582
      %v1584 = vsel %vm670, %v1574, %v1583
      %v1586 = vshrl.u32 %v1557, 16
      %v1588 = vrot.slane %v1586, 3
      %v1589 = vshll.u32 %v1557, 16
      %v1591 = vrot.slane %v1589, 4
      %v1592 = vor.u32 %v1588, %v1591
      %v1593 = vsel %vm670, %v1583, %v1592
      %v1595 = vshrl.u32 %v1558, 16
      %v1597 = vrot.slane %v1595, 3
      %v1598 = vshll.u32 %v1558, 16
      %v1600 = vrot.slane %v1598, 4
      %v1601 = vor.u32 %v1597, %v1600
      %v1602 = vsel %vm670, %v1592, %v1601
      %v1604 = vsel %vm565, %v1575, 0
      %v1607 = vsel %vm565, %v1584, 0
      %v1610 = vsel %vm565, %v1593, 0
      %v1613 = vsel %vm565, %v1602, 0
      %v1616 = vsel %vm578, %v1535, 0
      %1618 = vmatprep.subr.bf16.mxu0 0
      %1619 = vmatpush1.bf16.msra.mxu0 0
      %1620 = vmatprep.subr.bf16.mxu0 0
      %1621 = vmatpush1.bf16.msra.mxu0 0
      %1622 = vmatprep.subr.bf16.mxu0 0
      %1623 = vmatpush1.bf16.msra.mxu0 0
      %1624 = vmatprep.subr.bf16.mxu0 0
      %1625 = vmatpush1.bf16.msra.mxu0 0
      %1626 = vmatprep.subr.bf16.mxu0 0
      %1627 = vmatpush1.bf16.msra.mxu0 0
      %1628 = vmatprep.subr.bf16.mxu0 0
      %1629 = vmatpush1.bf16.msra.mxu0 0
      %1630 = vmatprep.subr.bf16.mxu0 0
      %1631 = vmatpush1.bf16.msra.mxu0 0
      %1632 = vmatprep.subr.bf16.mxu0 0
      %1633 = vmatpush1.bf16.msra.mxu0 %v1616
      %1634 = vmatprep.subr.bf16.mxu0 0
      %1635 = vmatpush2.bf16.msra.mxu0 0
      %1636 = vmatprep.subr.bf16.mxu0 0
      %1637 = vmatpush2.bf16.msra.mxu0 0
      %1638 = vmatprep.subr.bf16.mxu0 0
      %1639 = vmatpush2.bf16.msra.mxu0 0
      %1640 = vmatprep.subr.bf16.mxu0 0
      %1641 = vmatpush2.bf16.msra.mxu0 0
      %1642 = vmatprep.subr.bf16.mxu0 0
      %1643 = vmatpush2.bf16.msra.mxu0 0
      %1644 = vmatprep.subr.bf16.mxu0 0
      %1645 = vmatpush2.bf16.msra.mxu0 0
      %1646 = vmatprep.subr.bf16.mxu0 0
      %1647 = vmatpush2.bf16.msra.mxu0 0
      %1648 = vmatprep.subr.bf16.mxu0 0
      %1649 = vmatpush2.bf16.msra.mxu0 0
      %1650 = vmatprep.mubr.bf16.mxu0 0
      %1651 = vmatmul.mubr.bf16.gmra.mxu0 %v1604
      %v1652 = vpop.f32.mrf.mxu0
      %v1653 = vadd.f32 0.0, %v1652
      %v1654 = vpop.f32.mrf.mxu0
      %v1655 = vpop.f32.mrf.mxu0
      %v1656 = vadd.f32 0.0, %v1655
      %v1657 = vpop.f32.mrf.mxu0
      %1658 = vmatprep.mubr.bf16.mxu0 0
      %1659 = vmatmul.mubr.bf16.gmra.mxu0 %v1607
      %v1660 = vpop.f32.mrf.mxu0
      %v1661 = vadd.f32 0.0, %v1660
      %v1662 = vpop.f32.mrf.mxu0
      %v1663 = vpop.f32.mrf.mxu0
      %v1664 = vadd.f32 0.0, %v1663
      %v1665 = vpop.f32.mrf.mxu0
      %1666 = vmatprep.mubr.bf16.mxu0 0
      %1667 = vmatmul.mubr.bf16.gmra.mxu0 %v1610
      %v1668 = vpop.f32.mrf.mxu0
      %v1669 = vadd.f32 0.0, %v1668
      %v1670 = vpop.f32.mrf.mxu0
      %v1671 = vpop.f32.mrf.mxu0
      %v1672 = vadd.f32 0.0, %v1671
      %v1673 = vpop.f32.mrf.mxu0
      %1674 = vmatprep.mubr.bf16.mxu0 0
      %1675 = vmatmul.mubr.bf16.gmra.mxu0 %v1613
      %v1676 = vpop.f32.mrf.mxu0
      %v1677 = vadd.f32 0.0, %v1676
      %v1678 = vpop.f32.mrf.mxu0
      %v1679 = vpop.f32.mrf.mxu0
      %v1680 = vadd.f32 0.0, %v1679
      %v1681 = vpop.f32.mrf.mxu0
      %1682 = vdwg.mxu0
      %v1683 = vadd.f32 %v1515, %v1653
      %v1684 = vadd.f32 %v1516, %v1656
      %v1685 = vadd.f32 %v1517, %v1661
      %v1686 = vadd.f32 %v1518, %v1664
      %v1687 = vadd.f32 %v1519, %v1669
      %v1688 = vadd.f32 %v1520, %v1672
      %v1689 = vadd.f32 %v1521, %v1677
      %v1690 = vadd.f32 %v1522, %v1680
      %s1691 = scalar_lea.vmem %s1, 14
      %v1692 = vld [vmem:[%s1691] sm:$0x3]
      %v1701 = vunpack.c.l.b16 %v1357
      %v1702 = vunpack.c.l.b16 %v1358
      %v1703 = vunpack.c.l.b16 %v1359
      %v1704 = vunpack.c.l.b16 %v1360
      %v1705 = vunpack.c.l.b16 %v1361
      %v1706 = vunpack.c.l.b16 %v1362
      %v1707 = vunpack.c.l.b16 %v1363
      %v1708 = vunpack.c.l.b16 %v1524
      %v1709 = vpack.c.b16 %v1702, %v1701
      %v1710 = vpack.c.b16 %v1704, %v1703
      %v1711 = vpack.c.b16 %v1706, %v1705
      %v1712 = vpack.c.b16 %v1708, %v1707
      %v1714 = vsel %vm565, %v1709, 0
      %v1717 = vsel %vm565, %v1710, 0
      %v1720 = vsel %vm565, %v1711, 0
      %v1723 = vsel %vm565, %v1712, 0
      %v1726 = vsel %vm578, %v1692, 0
      %1728 = vmatprep.subr.bf16.mxu0 0
      %1729 = vmatpush1.bf16.msra.mxu0 0
      %1730 = vmatprep.subr.bf16.mxu0 0
      %1731 = vmatpush1.bf16.msra.mxu0 0
      %1732 = vmatprep.subr.bf16.mxu0 0
      %1733 = vmatpush1.bf16.msra.mxu0 0
      %1734 = vmatprep.subr.bf16.mxu0 0
      %1735 = vmatpush1.bf16.msra.mxu0 0
      %1736 = vmatprep.subr.bf16.mxu0 0
      %1737 = vmatpush1.bf16.msra.mxu0 0
      %1738 = vmatprep.subr.bf16.mxu0 0
      %1739 = vmatpush1.bf16.msra.mxu0 0
      %1740 = vmatprep.subr.bf16.mxu0 0
      %1741 = vmatpush1.bf16.msra.mxu0 0
      %1742 = vmatprep.subr.bf16.mxu0 0
      %1743 = vmatpush1.bf16.msra.mxu0 %v1726
      %1744 = vmatprep.subr.bf16.mxu0 0
      %1745 = vmatpush2.bf16.msra.mxu0 0
      %1746 = vmatprep.subr.bf16.mxu0 0
      %1747 = vmatpush2.bf16.msra.mxu0 0
      %1748 = vmatprep.subr.bf16.mxu0 0
      %1749 = vmatpush2.bf16.msra.mxu0 0
      %1750 = vmatprep.subr.bf16.mxu0 0
      %1751 = vmatpush2.bf16.msra.mxu0 0
      %1752 = vmatprep.subr.bf16.mxu0 0
      %1753 = vmatpush2.bf16.msra.mxu0 0
      %1754 = vmatprep.subr.bf16.mxu0 0
      %1755 = vmatpush2.bf16.msra.mxu0 0
      %1756 = vmatprep.subr.bf16.mxu0 0
      %1757 = vmatpush2.bf16.msra.mxu0 0
      %1758 = vmatprep.subr.bf16.mxu0 0
      %1759 = vmatpush2.bf16.msra.mxu0 0
      %1760 = vmatprep.mubr.bf16.mxu0 0
      %1761 = vmatmul.mubr.bf16.gmra.mxu0 %v1714
      %v1762 = vpop.f32.mrf.mxu0
      %v1763 = vadd.f32 0.0, %v1762
      %v1764 = vpop.f32.mrf.mxu0
      %v1765 = vpop.f32.mrf.mxu0
      %v1766 = vadd.f32 0.0, %v1765
      %v1767 = vpop.f32.mrf.mxu0
      %1768 = vmatprep.mubr.bf16.mxu0 0
      %1769 = vmatmul.mubr.bf16.gmra.mxu0 %v1717
      %v1770 = vpop.f32.mrf.mxu0
      %v1771 = vadd.f32 0.0, %v1770
      %v1772 = vpop.f32.mrf.mxu0
      %v1773 = vpop.f32.mrf.mxu0
      %v1774 = vadd.f32 0.0, %v1773
      %v1775 = vpop.f32.mrf.mxu0
      %1776 = vmatprep.mubr.bf16.mxu0 0
      %1777 = vmatmul.mubr.bf16.gmra.mxu0 %v1720
      %v1778 = vpop.f32.mrf.mxu0
      %v1779 = vadd.f32 0.0, %v1778
      %v1780 = vpop.f32.mrf.mxu0
      %v1781 = vpop.f32.mrf.mxu0
      %v1782 = vadd.f32 0.0, %v1781
      %v1783 = vpop.f32.mrf.mxu0
      %1784 = vmatprep.mubr.bf16.mxu0 0
      %1785 = vmatmul.mubr.bf16.gmra.mxu0 %v1723
      %v1786 = vpop.f32.mrf.mxu0
      %v1787 = vadd.f32 0.0, %v1786
      %v1788 = vpop.f32.mrf.mxu0
      %v1789 = vpop.f32.mrf.mxu0
      %v1790 = vadd.f32 0.0, %v1789
      %v1791 = vpop.f32.mrf.mxu0
      %1792 = vdwg.mxu0
      %v1793 = vadd.f32 %v1683, %v1763
      %v1794 = vadd.f32 %v1684, %v1766
      %v1795 = vadd.f32 %v1685, %v1771
      %v1796 = vadd.f32 %v1686, %v1774
      %v1797 = vadd.f32 %v1687, %v1779
      %v1798 = vadd.f32 %v1688, %v1782
      %v1799 = vadd.f32 %v1689, %v1787
      %v1800 = vadd.f32 %v1690, %v1790
      %v1801 = vld [vmem:[#allocation2 + $0xc] sm:$0xf]
      %v1802 = vld [vmem:[#allocation2 + $0x10] sm:$0xf]
      %v1803 = vld [vmem:[#allocation2 + $0x14] sm:$0xf]
      %v1804 = vld [vmem:[#allocation2 + $0x18] sm:$0xf]
      %v1805 = vld [vmem:[#allocation2 + $0x1c] sm:$0xf]
      %v1806 = vld [vmem:[#allocation2 + $0x20] sm:$0xf]
      %v1807 = vld [vmem:[#allocation2 + $0x24] sm:$0xf]
      %v1808 = vld [vmem:[#allocation2 + $0x28] sm:$0xf]
      %v1809 = vld [vmem:[#allocation2 + $0x2c] sm:$0x1]
      %v1810 = vsel %vm910, %v1801, 0
      %v1811 = vsel %vm911, %v1802, 0
      %v1812 = vsel %vm912, %v1803, 0
      %v1813 = vsel %vm913, %v1804, 0
      %v1814 = vsel %vm914, %v1805, 0
      %v1815 = vsel %vm915, %v1806, 0
      %v1816 = vsel %vm916, %v1807, 0
      %v1817 = vsel %vm917, %v1808, 0
      %v1818 = vsel %vm918, %v1809, 0
      %s1819 = scalar_lea.vmem %s1, 16
      %v1820 = vld [vmem:[%s1819] sm:$0x3]
      %v1830 = vunpack.c.l.b16 %v1810
      %v1831 = vunpack.c.l.b16 %v1811
      %v1832 = vunpack.c.l.b16 %v1812
      %v1833 = vunpack.c.l.b16 %v1813
      %v1834 = vunpack.c.l.b16 %v1814
      %v1835 = vunpack.c.l.b16 %v1815
      %v1836 = vunpack.c.l.b16 %v1816
      %v1837 = vunpack.c.l.b16 %v1817
      %v1838 = vunpack.c.l.b16 %v1818
      %v1839 = vpack.c.b16 %v1831, %v1830
      %v1840 = vpack.c.b16 %v1833, %v1832
      %v1841 = vpack.c.b16 %v1835, %v1834
      %v1842 = vpack.c.b16 %v1837, %v1836
      %v1843 = vpack.c.b16 %v1838, %v1838
      %v1845 = vshrl.u32 %v1839, 16
      %v1847 = vshll.u32 %v1839, 16
      %v1849 = vrot.slane %v1847, 1
      %v1850 = vor.u32 %v1845, %v1849
      %v1852 = vshll.u32 %v1840, 16
      %v1854 = vrot.slane %v1852, 1
      %v1855 = vsel %vm953, %v1850, %v1854
      %v1856 = vshrl.u32 %v1840, 16
      %v1858 = vor.u32 %v1856, %v1854
      %v1860 = vshll.u32 %v1841, 16
      %v1862 = vrot.slane %v1860, 1
      %v1863 = vsel %vm953, %v1858, %v1862
      %v1864 = vshrl.u32 %v1841, 16
      %v1866 = vor.u32 %v1864, %v1862
      %v1868 = vshll.u32 %v1842, 16
      %v1870 = vrot.slane %v1868, 1
      %v1871 = vsel %vm953, %v1866, %v1870
      %v1872 = vshrl.u32 %v1842, 16
      %v1874 = vor.u32 %v1872, %v1870
      %v1876 = vshll.u32 %v1843, 16
      %v1878 = vrot.slane %v1876, 1
      %v1879 = vsel %vm953, %v1874, %v1878
      %v1881 = vsel %vm565, %v1855, 0
      %v1884 = vsel %vm565, %v1863, 0
      %v1887 = vsel %vm565, %v1871, 0
      %v1890 = vsel %vm565, %v1879, 0
      %v1893 = vsel %vm578, %v1820, 0
      %1895 = vmatprep.subr.bf16.mxu0 0
      %1896 = vmatpush1.bf16.msra.mxu0 0
      %1897 = vmatprep.subr.bf16.mxu0 0
      %1898 = vmatpush1.bf16.msra.mxu0 0
      %1899 = vmatprep.subr.bf16.mxu0 0
      %1900 = vmatpush1.bf16.msra.mxu0 0
      %1901 = vmatprep.subr.bf16.mxu0 0
      %1902 = vmatpush1.bf16.msra.mxu0 0
      %1903 = vmatprep.subr.bf16.mxu0 0
      %1904 = vmatpush1.bf16.msra.mxu0 0
      %1905 = vmatprep.subr.bf16.mxu0 0
      %1906 = vmatpush1.bf16.msra.mxu0 0
      %1907 = vmatprep.subr.bf16.mxu0 0
      %1908 = vmatpush1.bf16.msra.mxu0 0
      %1909 = vmatprep.subr.bf16.mxu0 0
      %1910 = vmatpush1.bf16.msra.mxu0 %v1893
      %1911 = vmatprep.subr.bf16.mxu0 0
      %1912 = vmatpush2.bf16.msra.mxu0 0
      %1913 = vmatprep.subr.bf16.mxu0 0
      %1914 = vmatpush2.bf16.msra.mxu0 0
      %1915 = vmatprep.subr.bf16.mxu0 0
      %1916 = vmatpush2.bf16.msra.mxu0 0
      %1917 = vmatprep.subr.bf16.mxu0 0
      %1918 = vmatpush2.bf16.msra.mxu0 0
      %1919 = vmatprep.subr.bf16.mxu0 0
      %1920 = vmatpush2.bf16.msra.mxu0 0
      %1921 = vmatprep.subr.bf16.mxu0 0
      %1922 = vmatpush2.bf16.msra.mxu0 0
      %1923 = vmatprep.subr.bf16.mxu0 0
      %1924 = vmatpush2.bf16.msra.mxu0 0
      %1925 = vmatprep.subr.bf16.mxu0 0
      %1926 = vmatpush2.bf16.msra.mxu0 0
      %1927 = vmatprep.mubr.bf16.mxu0 0
      %1928 = vmatmul.mubr.bf16.gmra.mxu0 %v1881
      %v1929 = vpop.f32.mrf.mxu0
      %v1930 = vadd.f32 0.0, %v1929
      %v1931 = vpop.f32.mrf.mxu0
      %v1932 = vpop.f32.mrf.mxu0
      %v1933 = vadd.f32 0.0, %v1932
      %v1934 = vpop.f32.mrf.mxu0
      %1935 = vmatprep.mubr.bf16.mxu0 0
      %1936 = vmatmul.mubr.bf16.gmra.mxu0 %v1884
      %v1937 = vpop.f32.mrf.mxu0
      %v1938 = vadd.f32 0.0, %v1937
      %v1939 = vpop.f32.mrf.mxu0
      %v1940 = vpop.f32.mrf.mxu0
      %v1941 = vadd.f32 0.0, %v1940
      %v1942 = vpop.f32.mrf.mxu0
      %1943 = vmatprep.mubr.bf16.mxu0 0
      %1944 = vmatmul.mubr.bf16.gmra.mxu0 %v1887
      %v1945 = vpop.f32.mrf.mxu0
      %v1946 = vadd.f32 0.0, %v1945
      %v1947 = vpop.f32.mrf.mxu0
      %v1948 = vpop.f32.mrf.mxu0
      %v1949 = vadd.f32 0.0, %v1948
      %v1950 = vpop.f32.mrf.mxu0
      %1951 = vmatprep.mubr.bf16.mxu0 0
      %1952 = vmatmul.mubr.bf16.gmra.mxu0 %v1890
      %v1953 = vpop.f32.mrf.mxu0
      %v1954 = vadd.f32 0.0, %v1953
      %v1955 = vpop.f32.mrf.mxu0
      %v1956 = vpop.f32.mrf.mxu0
      %v1957 = vadd.f32 0.0, %v1956
      %v1958 = vpop.f32.mrf.mxu0
      %1959 = vdwg.mxu0
      %v1960 = vadd.f32 %v1793, %v1930
      %v1961 = vadd.f32 %v1794, %v1933
      %v1962 = vadd.f32 %v1795, %v1938
      %v1963 = vadd.f32 %v1796, %v1941
      %v1964 = vadd.f32 %v1797, %v1946
      %v1965 = vadd.f32 %v1798, %v1949
      %v1966 = vadd.f32 %v1799, %v1954
      %v1967 = vadd.f32 %v1800, %v1957
      %v1968 = vmax.f32 %v1960, 0.0
      %v1969 = vmax.f32 %v1961, 0.0
      %v1970 = vmax.f32 %v1962, 0.0
      %v1971 = vmax.f32 %v1963, 0.0
      %v1972 = vmax.f32 %v1964, 0.0
      %v1973 = vmax.f32 %v1965, 0.0
      %v1974 = vmax.f32 %v1966, 0.0
      %v1975 = vmax.f32 %v1967, 0.0
      %v1976 = vpack.c.bf16 %v1969, %v1968
      %v1977 = vpack.c.bf16 %v1971, %v1970
      %v1978 = vpack.c.bf16 %v1973, %v1972
      %v1979 = vpack.c.bf16 %v1975, %v1974
      %v1984 = vunpack.c.l.b16 %v1976
      %v1985 = vunpack.c.h.b16 %v1976
      %v1986 = vunpack.c.l.b16 %v1977
      %v1987 = vunpack.c.h.b16 %v1977
      %v1988 = vunpack.c.l.b16 %v1978
      %v1989 = vunpack.c.h.b16 %v1978
      %v1990 = vunpack.c.l.b16 %v1979
      %v1991 = vunpack.c.h.b16 %v1979
      %v1992 = vpack.c.b16 %v1984, %v1984
      %v1993 = vpack.c.b16 %v1985, %v1985
      %v1994 = vpack.c.b16 %v1986, %v1986
      %v1995 = vpack.c.b16 %v1987, %v1987
      %v1996 = vpack.c.b16 %v1988, %v1988
      %v1997 = vpack.c.b16 %v1989, %v1989
      %v1998 = vpack.c.b16 %v1990, %v1990
      %v1999 = vpack.c.b16 %v1991, %v1991
      %2008 = vst.msk [vmem:[#allocation3 + $0x8] sm:$0xf] %vm267, %v1992
      %2009 = vst.msk [vmem:[#allocation3 + $0xc] sm:$0xf] %vm267, %v1993
      %2010 = vst.msk [vmem:[#allocation3 + $0x10] sm:$0xf] %vm267, %v1994
      %2011 = vst.msk [vmem:[#allocation3 + $0x14] sm:$0xf] %vm267, %v1995
      %2012 = vst.msk [vmem:[#allocation3 + $0x18] sm:$0xf] %vm267, %v1996
      %2013 = vst.msk [vmem:[#allocation3 + $0x1c] sm:$0xf] %vm267, %v1997
      %2014 = vst.msk [vmem:[#allocation3 + $0x20] sm:$0xf] %vm267, %v1998
      %2015 = vst.msk [vmem:[#allocation3 + $0x24] sm:$0xf] %vm267, %v1999
      %v2016 = vld [vmem:[#allocation3] sm:$0x8]
      %v2017 = vld [vmem:[#allocation3 + $0x4] sm:$0xf]
      %v2018 = vld [vmem:[#allocation3 + $0x8] sm:$0xf]
      %v2019 = vld [vmem:[#allocation3 + $0xc] sm:$0xf]
      %v2020 = vld [vmem:[#allocation3 + $0x10] sm:$0xf]
      %v2021 = vld [vmem:[#allocation3 + $0x14] sm:$0xf]
      %v2022 = vld [vmem:[#allocation3 + $0x18] sm:$0xf]
      %v2023 = vld [vmem:[#allocation3 + $0x1c] sm:$0xf]
      %v2024 = vld [vmem:[#allocation3 + $0x20] sm:$0xf]
      %v2025 = vsel %vm524, %v2016, 0
      %v2026 = vsel %vm525, %v2017, 0
      %v2027 = vsel %vm526, %v2018, 0
      %v2028 = vsel %vm527, %v2019, 0
      %v2029 = vsel %vm528, %v2020, 0
      %v2030 = vsel %vm529, %v2021, 0
      %v2031 = vsel %vm530, %v2022, 0
      %v2032 = vsel %vm531, %v2023, 0
      %v2033 = vsel %vm532, %v2024, 0
      %v2034 = vld [vmem:[%s2] sm:$0xf]
      %s2035 = scalar_lea.vmem %s2, 4
      %v2036 = vld [vmem:[%s2035] sm:$0xf]
      %v2045 = vunpack.c.l.b16 %v2017
      %v2046 = vunpack.c.l.b16 %v2018
      %v2047 = vunpack.c.l.b16 %v2019
      %v2048 = vunpack.c.l.b16 %v2020
      %v2049 = vunpack.c.l.b16 %v2021
      %v2050 = vunpack.c.l.b16 %v2022
      %v2051 = vunpack.c.l.b16 %v2023
      %v2052 = vunpack.c.l.b16 %v2024
      %v2053 = vpack.c.b16 %v2046, %v2045
      %v2054 = vpack.c.b16 %v2048, %v2047
      %v2055 = vpack.c.b16 %v2050, %v2049
      %v2056 = vpack.c.b16 %v2052, %v2051
      %vm2057 = vcmask 64512
      %v2059 = vsel %vm2057, %v2053, 0
      %v2062 = vsel %vm2057, %v2054, 0
      %v2065 = vsel %vm2057, %v2055, 0
      %v2068 = vsel %vm2057, %v2056, 0
      %vm2070 = vcmask 1043456
      %v2072 = vsel %vm2070, %v2036, 0
      %2074 = vmatprep.subr.bf16.mxu0 0
      %2075 = vmatpush1.bf16.msra.mxu0 0
      %2076 = vmatprep.subr.bf16.mxu0 0
      %2077 = vmatpush1.bf16.msra.mxu0 0
      %2078 = vmatprep.subr.bf16.mxu0 0
      %2079 = vmatpush1.bf16.msra.mxu0 0
      %2080 = vmatprep.subr.bf16.mxu0 0
      %2081 = vmatpush1.bf16.msra.mxu0 0
      %2082 = vmatprep.subr.bf16.mxu0 0
      %2083 = vmatpush1.bf16.msra.mxu0 0
      %2084 = vmatprep.subr.bf16.mxu0 0
      %2085 = vmatpush1.bf16.msra.mxu0 0
      %2086 = vmatprep.subr.bf16.mxu0 0
      %2087 = vmatpush1.bf16.msra.mxu0 0
      %2088 = vmatprep.subr.bf16.mxu0 0
      %2089 = vmatpush1.bf16.msra.mxu0 %v2072
      %2090 = vmatprep.subr.bf16.mxu0 0
      %2091 = vmatpush2.bf16.msra.mxu0 0
      %2092 = vmatprep.subr.bf16.mxu0 0
      %2093 = vmatpush2.bf16.msra.mxu0 0
      %2094 = vmatprep.subr.bf16.mxu0 0
      %2095 = vmatpush2.bf16.msra.mxu0 0
      %2096 = vmatprep.subr.bf16.mxu0 0
      %2097 = vmatpush2.bf16.msra.mxu0 0
      %2098 = vmatprep.subr.bf16.mxu0 0
      %2099 = vmatpush2.bf16.msra.mxu0 0
      %2100 = vmatprep.subr.bf16.mxu0 0
      %2101 = vmatpush2.bf16.msra.mxu0 0
      %2102 = vmatprep.subr.bf16.mxu0 0
      %2103 = vmatpush2.bf16.msra.mxu0 0
      %2104 = vmatprep.subr.bf16.mxu0 0
      %2105 = vmatpush2.bf16.msra.mxu0 0
      %2106 = vmatprep.mubr.bf16.mxu0 0
      %2107 = vmatmul.mubr.bf16.gmra.mxu0 %v2059
      %v2108 = vpop.f32.mrf.mxu0
      %v2109 = vadd.f32 0.0, %v2108
      %v2110 = vpop.f32.mrf.mxu0
      %v2111 = vpop.f32.mrf.mxu0
      %v2112 = vadd.f32 0.0, %v2111
      %v2113 = vpop.f32.mrf.mxu0
      %2114 = vmatprep.mubr.bf16.mxu0 0
      %2115 = vmatmul.mubr.bf16.gmra.mxu0 %v2062
      %v2116 = vpop.f32.mrf.mxu0
      %v2117 = vadd.f32 0.0, %v2116
      %v2118 = vpop.f32.mrf.mxu0
      %v2119 = vpop.f32.mrf.mxu0
      %v2120 = vadd.f32 0.0, %v2119
      %v2121 = vpop.f32.mrf.mxu0
      %2122 = vmatprep.mubr.bf16.mxu0 0
      %2123 = vmatmul.mubr.bf16.gmra.mxu0 %v2065
      %v2124 = vpop.f32.mrf.mxu0
      %v2125 = vadd.f32 0.0, %v2124
      %v2126 = vpop.f32.mrf.mxu0
      %v2127 = vpop.f32.mrf.mxu0
      %v2128 = vadd.f32 0.0, %v2127
      %v2129 = vpop.f32.mrf.mxu0
      %2130 = vmatprep.mubr.bf16.mxu0 0
      %2131 = vmatmul.mubr.bf16.gmra.mxu0 %v2068
      %v2132 = vpop.f32.mrf.mxu0
      %v2133 = vadd.f32 0.0, %v2132
      %v2134 = vpop.f32.mrf.mxu0
      %v2135 = vpop.f32.mrf.mxu0
      %v2136 = vadd.f32 0.0, %v2135
      %v2137 = vpop.f32.mrf.mxu0
      %2138 = vdwg.mxu0
      %v2148 = vunpack.c.l.b16 %v2025
      %v2149 = vunpack.c.l.b16 %v2026
      %v2150 = vunpack.c.l.b16 %v2027
      %v2151 = vunpack.c.l.b16 %v2028
      %v2152 = vunpack.c.l.b16 %v2029
      %v2153 = vunpack.c.l.b16 %v2030
      %v2154 = vunpack.c.l.b16 %v2031
      %v2155 = vunpack.c.l.b16 %v2032
      %v2156 = vunpack.c.l.b16 %v2033
      %v2157 = vpack.c.b16 %v2149, %v2148
      %v2158 = vpack.c.b16 %v2151, %v2150
      %v2159 = vpack.c.b16 %v2153, %v2152
      %v2160 = vpack.c.b16 %v2155, %v2154
      %v2161 = vpack.c.b16 %v2156, %v2156
      %v2163 = vshrl.u32 %v2157, 16
      %v2165 = vrot.slane %v2163, 3
      %v2166 = vshll.u32 %v2157, 16
      %v2168 = vrot.slane %v2166, 4
      %v2169 = vor.u32 %v2165, %v2168
      %v2171 = vshrl.u32 %v2158, 16
      %v2173 = vrot.slane %v2171, 3
      %v2174 = vshll.u32 %v2158, 16
      %v2176 = vrot.slane %v2174, 4
      %v2177 = vor.u32 %v2173, %v2176
      %v2178 = vsel %vm670, %v2169, %v2177
      %v2180 = vshrl.u32 %v2159, 16
      %v2182 = vrot.slane %v2180, 3
      %v2183 = vshll.u32 %v2159, 16
      %v2185 = vrot.slane %v2183, 4
      %v2186 = vor.u32 %v2182, %v2185
      %v2187 = vsel %vm670, %v2177, %v2186
      %v2189 = vshrl.u32 %v2160, 16
      %v2191 = vrot.slane %v2189, 3
      %v2192 = vshll.u32 %v2160, 16
      %v2194 = vrot.slane %v2192, 4
      %v2195 = vor.u32 %v2191, %v2194
      %v2196 = vsel %vm670, %v2186, %v2195
      %v2198 = vshrl.u32 %v2161, 16
      %v2200 = vrot.slane %v2198, 3
      %v2201 = vshll.u32 %v2161, 16
      %v2203 = vrot.slane %v2201, 4
      %v2204 = vor.u32 %v2200, %v2203
      %v2205 = vsel %vm670, %v2195, %v2204
      %v2207 = vsel %vm2057, %v2178, 0
      %v2210 = vsel %vm2057, %v2187, 0
      %v2213 = vsel %vm2057, %v2196, 0
      %v2216 = vsel %vm2057, %v2205, 0
      %v2219 = vsel %vm2070, %v2034, 0
      %2221 = vmatprep.subr.bf16.mxu0 0
      %2222 = vmatpush1.bf16.msra.mxu0 0
      %2223 = vmatprep.subr.bf16.mxu0 0
      %2224 = vmatpush1.bf16.msra.mxu0 0
      %2225 = vmatprep.subr.bf16.mxu0 0
      %2226 = vmatpush1.bf16.msra.mxu0 0
      %2227 = vmatprep.subr.bf16.mxu0 0
      %2228 = vmatpush1.bf16.msra.mxu0 0
      %2229 = vmatprep.subr.bf16.mxu0 0
      %2230 = vmatpush1.bf16.msra.mxu0 0
      %2231 = vmatprep.subr.bf16.mxu0 0
      %2232 = vmatpush1.bf16.msra.mxu0 0
      %2233 = vmatprep.subr.bf16.mxu0 0
      %2234 = vmatpush1.bf16.msra.mxu0 0
      %2235 = vmatprep.subr.bf16.mxu0 0
      %2236 = vmatpush1.bf16.msra.mxu0 %v2219
      %2237 = vmatprep.subr.bf16.mxu0 0
      %2238 = vmatpush2.bf16.msra.mxu0 0
      %2239 = vmatprep.subr.bf16.mxu0 0
      %2240 = vmatpush2.bf16.msra.mxu0 0
      %2241 = vmatprep.subr.bf16.mxu0 0
      %2242 = vmatpush2.bf16.msra.mxu0 0
      %2243 = vmatprep.subr.bf16.mxu0 0
      %2244 = vmatpush2.bf16.msra.mxu0 0
      %2245 = vmatprep.subr.bf16.mxu0 0
      %2246 = vmatpush2.bf16.msra.mxu0 0
      %2247 = vmatprep.subr.bf16.mxu0 0
      %2248 = vmatpush2.bf16.msra.mxu0 0
      %2249 = vmatprep.subr.bf16.mxu0 0
      %2250 = vmatpush2.bf16.msra.mxu0 0
      %2251 = vmatprep.subr.bf16.mxu0 0
      %2252 = vmatpush2.bf16.msra.mxu0 0
      %2253 = vmatprep.mubr.bf16.mxu0 0
      %2254 = vmatmul.mubr.bf16.gmra.mxu0 %v2207
      %v2255 = vpop.f32.mrf.mxu0
      %v2256 = vadd.f32 %v2109, %v2255
      %v2257 = vpop.f32.mrf.mxu0
      %v2258 = vpop.f32.mrf.mxu0
      %v2259 = vadd.f32 %v2112, %v2258
      %v2260 = vpop.f32.mrf.mxu0
      %2261 = vmatprep.mubr.bf16.mxu0 0
      %2262 = vmatmul.mubr.bf16.gmra.mxu0 %v2210
      %v2263 = vpop.f32.mrf.mxu0
      %v2264 = vadd.f32 %v2117, %v2263
      %v2265 = vpop.f32.mrf.mxu0
      %v2266 = vpop.f32.mrf.mxu0
      %v2267 = vadd.f32 %v2120, %v2266
      %v2268 = vpop.f32.mrf.mxu0
      %2269 = vmatprep.mubr.bf16.mxu0 0
      %2270 = vmatmul.mubr.bf16.gmra.mxu0 %v2213
      %v2271 = vpop.f32.mrf.mxu0
      %v2272 = vadd.f32 %v2125, %v2271
      %v2273 = vpop.f32.mrf.mxu0
      %v2274 = vpop.f32.mrf.mxu0
      %v2275 = vadd.f32 %v2128, %v2274
      %v2276 = vpop.f32.mrf.mxu0
      %2277 = vmatprep.mubr.bf16.mxu0 0
      %2278 = vmatmul.mubr.bf16.gmra.mxu0 %v2216
      %v2279 = vpop.f32.mrf.mxu0
      %v2280 = vadd.f32 %v2133, %v2279
      %v2281 = vpop.f32.mrf.mxu0
      %v2282 = vpop.f32.mrf.mxu0
      %v2283 = vadd.f32 %v2136, %v2282
      %v2284 = vpop.f32.mrf.mxu0
      %2285 = vdwg.mxu0
      %v2286 = vld [vmem:[#allocation3 + $0x4] sm:$0xf]
      %v2287 = vld [vmem:[#allocation3 + $0x8] sm:$0xf]
      %v2288 = vld [vmem:[#allocation3 + $0xc] sm:$0xf]
      %v2289 = vld [vmem:[#allocation3 + $0x10] sm:$0xf]
      %v2290 = vld [vmem:[#allocation3 + $0x14] sm:$0xf]
      %v2291 = vld [vmem:[#allocation3 + $0x18] sm:$0xf]
      %v2292 = vld [vmem:[#allocation3 + $0x1c] sm:$0xf]
      %v2293 = vld [vmem:[#allocation3 + $0x20] sm:$0xf]
      %v2294 = vld [vmem:[#allocation3 + $0x24] sm:$0x1]
      %v2295 = vsel %vm910, %v2286, 0
      %v2296 = vsel %vm911, %v2287, 0
      %v2297 = vsel %vm912, %v2288, 0
      %v2298 = vsel %vm913, %v2289, 0
      %v2299 = vsel %vm914, %v2290, 0
      %v2300 = vsel %vm915, %v2291, 0
      %v2301 = vsel %vm916, %v2292, 0
      %v2302 = vsel %vm917, %v2293, 0
      %v2303 = vsel %vm918, %v2294, 0
      %s2304 = scalar_lea.vmem %s2, 8
      %v2305 = vld [vmem:[%s2304] sm:$0xf]
      %v2315 = vunpack.c.l.b16 %v2295
      %v2316 = vunpack.c.l.b16 %v2296
      %v2317 = vunpack.c.l.b16 %v2297
      %v2318 = vunpack.c.l.b16 %v2298
      %v2319 = vunpack.c.l.b16 %v2299
      %v2320 = vunpack.c.l.b16 %v2300
      %v2321 = vunpack.c.l.b16 %v2301
      %v2322 = vunpack.c.l.b16 %v2302
      %v2323 = vunpack.c.l.b16 %v2303
      %v2324 = vpack.c.b16 %v2316, %v2315
      %v2325 = vpack.c.b16 %v2318, %v2317
      %v2326 = vpack.c.b16 %v2320, %v2319
      %v2327 = vpack.c.b16 %v2322, %v2321
      %v2328 = vpack.c.b16 %v2323, %v2323
      %v2330 = vshrl.u32 %v2324, 16
      %v2332 = vshll.u32 %v2324, 16
      %v2334 = vrot.slane %v2332, 1
      %v2335 = vor.u32 %v2330, %v2334
      %v2337 = vshll.u32 %v2325, 16
      %v2339 = vrot.slane %v2337, 1
      %v2340 = vsel %vm953, %v2335, %v2339
      %v2341 = vshrl.u32 %v2325, 16
      %v2343 = vor.u32 %v2341, %v2339
      %v2345 = vshll.u32 %v2326, 16
      %v2347 = vrot.slane %v2345, 1
      %v2348 = vsel %vm953, %v2343, %v2347
      %v2349 = vshrl.u32 %v2326, 16
      %v2351 = vor.u32 %v2349, %v2347
      %v2353 = vshll.u32 %v2327, 16
      %v2355 = vrot.slane %v2353, 1
      %v2356 = vsel %vm953, %v2351, %v2355
      %v2357 = vshrl.u32 %v2327, 16
      %v2359 = vor.u32 %v2357, %v2355
      %v2361 = vshll.u32 %v2328, 16
      %v2363 = vrot.slane %v2361, 1
      %v2364 = vsel %vm953, %v2359, %v2363
      %v2366 = vsel %vm2057, %v2340, 0
      %v2369 = vsel %vm2057, %v2348, 0
      %v2372 = vsel %vm2057, %v2356, 0
      %v2375 = vsel %vm2057, %v2364, 0
      %v2378 = vsel %vm2070, %v2305, 0
      %2380 = vmatprep.subr.bf16.mxu0 0
      %2381 = vmatpush1.bf16.msra.mxu0 0
      %2382 = vmatprep.subr.bf16.mxu0 0
      %2383 = vmatpush1.bf16.msra.mxu0 0
      %2384 = vmatprep.subr.bf16.mxu0 0
      %2385 = vmatpush1.bf16.msra.mxu0 0
      %2386 = vmatprep.subr.bf16.mxu0 0
      %2387 = vmatpush1.bf16.msra.mxu0 0
      %2388 = vmatprep.subr.bf16.mxu0 0
      %2389 = vmatpush1.bf16.msra.mxu0 0
      %2390 = vmatprep.subr.bf16.mxu0 0
      %2391 = vmatpush1.bf16.msra.mxu0 0
      %2392 = vmatprep.subr.bf16.mxu0 0
      %2393 = vmatpush1.bf16.msra.mxu0 0
      %2394 = vmatprep.subr.bf16.mxu0 0
      %2395 = vmatpush1.bf16.msra.mxu0 %v2378
      %2396 = vmatprep.subr.bf16.mxu0 0
      %2397 = vmatpush2.bf16.msra.mxu0 0
      %2398 = vmatprep.subr.bf16.mxu0 0
      %2399 = vmatpush2.bf16.msra.mxu0 0
      %2400 = vmatprep.subr.bf16.mxu0 0
      %2401 = vmatpush2.bf16.msra.mxu0 0
      %2402 = vmatprep.subr.bf16.mxu0 0
      %2403 = vmatpush2.bf16.msra.mxu0 0
      %2404 = vmatprep.subr.bf16.mxu0 0
      %2405 = vmatpush2.bf16.msra.mxu0 0
      %2406 = vmatprep.subr.bf16.mxu0 0
      %2407 = vmatpush2.bf16.msra.mxu0 0
      %2408 = vmatprep.subr.bf16.mxu0 0
      %2409 = vmatpush2.bf16.msra.mxu0 0
      %2410 = vmatprep.subr.bf16.mxu0 0
      %2411 = vmatpush2.bf16.msra.mxu0 0
      %2412 = vmatprep.mubr.bf16.mxu0 0
      %2413 = vmatmul.mubr.bf16.gmra.mxu0 %v2366
      %v2414 = vpop.f32.mrf.mxu0
      %v2415 = vadd.f32 0.0, %v2414
      %v2416 = vpop.f32.mrf.mxu0
      %v2417 = vpop.f32.mrf.mxu0
      %v2418 = vadd.f32 0.0, %v2417
      %v2419 = vpop.f32.mrf.mxu0
      %2420 = vmatprep.mubr.bf16.mxu0 0
      %2421 = vmatmul.mubr.bf16.gmra.mxu0 %v2369
      %v2422 = vpop.f32.mrf.mxu0
      %v2423 = vadd.f32 0.0, %v2422
      %v2424 = vpop.f32.mrf.mxu0
      %v2425 = vpop.f32.mrf.mxu0
      %v2426 = vadd.f32 0.0, %v2425
      %v2427 = vpop.f32.mrf.mxu0
      %2428 = vmatprep.mubr.bf16.mxu0 0
      %2429 = vmatmul.mubr.bf16.gmra.mxu0 %v2372
      %v2430 = vpop.f32.mrf.mxu0
      %v2431 = vadd.f32 0.0, %v2430
      %v2432 = vpop.f32.mrf.mxu0
      %v2433 = vpop.f32.mrf.mxu0
      %v2434 = vadd.f32 0.0, %v2433
      %v2435 = vpop.f32.mrf.mxu0
      %2436 = vmatprep.mubr.bf16.mxu0 0
      %2437 = vmatmul.mubr.bf16.gmra.mxu0 %v2375
      %v2438 = vpop.f32.mrf.mxu0
      %v2439 = vadd.f32 0.0, %v2438
      %v2440 = vpop.f32.mrf.mxu0
      %v2441 = vpop.f32.mrf.mxu0
      %v2442 = vadd.f32 0.0, %v2441
      %v2443 = vpop.f32.mrf.mxu0
      %2444 = vdwg.mxu0
      %v2445 = vadd.f32 %v2256, %v2415
      %v2446 = vadd.f32 %v2259, %v2418
      %v2447 = vadd.f32 %v2264, %v2423
      %v2448 = vadd.f32 %v2267, %v2426
      %v2449 = vadd.f32 %v2272, %v2431
      %v2450 = vadd.f32 %v2275, %v2434
      %v2451 = vadd.f32 %v2280, %v2439
      %v2452 = vadd.f32 %v2283, %v2442
      %v2453 = vld [vmem:[#allocation3 + $0x4] sm:$0x8]
      %v2454 = vld [vmem:[#allocation3 + $0x24] sm:$0xf]
      %v2455 = vsel %vm524, %v2453, 0
      %v2456 = vsel %vm525, %v2287, 0
      %v2457 = vsel %vm526, %v2288, 0
      %v2458 = vsel %vm527, %v2289, 0
      %v2459 = vsel %vm528, %v2290, 0
      %v2460 = vsel %vm529, %v2291, 0
      %v2461 = vsel %vm530, %v2292, 0
      %v2462 = vsel %vm531, %v2293, 0
      %v2463 = vsel %vm532, %v2454, 0
      %s2464 = scalar_lea.vmem %s2, 12
      %v2465 = vld [vmem:[%s2464] sm:$0xf]
      %v2475 = vunpack.c.l.b16 %v2455
      %v2476 = vunpack.c.l.b16 %v2456
      %v2477 = vunpack.c.l.b16 %v2457
      %v2478 = vunpack.c.l.b16 %v2458
      %v2479 = vunpack.c.l.b16 %v2459
      %v2480 = vunpack.c.l.b16 %v2460
      %v2481 = vunpack.c.l.b16 %v2461
      %v2482 = vunpack.c.l.b16 %v2462
      %v2483 = vunpack.c.l.b16 %v2463
      %v2484 = vpack.c.b16 %v2476, %v2475
      %v2485 = vpack.c.b16 %v2478, %v2477
      %v2486 = vpack.c.b16 %v2480, %v2479
      %v2487 = vpack.c.b16 %v2482, %v2481
      %v2488 = vpack.c.b16 %v2483, %v2483
      %v2490 = vshrl.u32 %v2484, 16
      %v2492 = vrot.slane %v2490, 3
      %v2493 = vshll.u32 %v2484, 16
      %v2495 = vrot.slane %v2493, 4
      %v2496 = vor.u32 %v2492, %v2495
      %v2498 = vshrl.u32 %v2485, 16
      %v2500 = vrot.slane %v2498, 3
      %v2501 = vshll.u32 %v2485, 16
      %v2503 = vrot.slane %v2501, 4
      %v2504 = vor.u32 %v2500, %v2503
      %v2505 = vsel %vm670, %v2496, %v2504
      %v2507 = vshrl.u32 %v2486, 16
      %v2509 = vrot.slane %v2507, 3
      %v2510 = vshll.u32 %v2486, 16
      %v2512 = vrot.slane %v2510, 4
      %v2513 = vor.u32 %v2509, %v2512
      %v2514 = vsel %vm670, %v2504, %v2513
      %v2516 = vshrl.u32 %v2487, 16
      %v2518 = vrot.slane %v2516, 3
      %v2519 = vshll.u32 %v2487, 16
      %v2521 = vrot.slane %v2519, 4
      %v2522 = vor.u32 %v2518, %v2521
      %v2523 = vsel %vm670, %v2513, %v2522
      %v2525 = vshrl.u32 %v2488, 16
      %v2527 = vrot.slane %v2525, 3
      %v2528 = vshll.u32 %v2488, 16
      %v2530 = vrot.slane %v2528, 4
      %v2531 = vor.u32 %v2527, %v2530
      %v2532 = vsel %vm670, %v2522, %v2531
      %v2534 = vsel %vm2057, %v2505, 0
      %v2537 = vsel %vm2057, %v2514, 0
      %v2540 = vsel %vm2057, %v2523, 0
      %v2543 = vsel %vm2057, %v2532, 0
      %v2546 = vsel %vm2070, %v2465, 0
      %2548 = vmatprep.subr.bf16.mxu0 0
      %2549 = vmatpush1.bf16.msra.mxu0 0
      %2550 = vmatprep.subr.bf16.mxu0 0
      %2551 = vmatpush1.bf16.msra.mxu0 0
      %2552 = vmatprep.subr.bf16.mxu0 0
      %2553 = vmatpush1.bf16.msra.mxu0 0
      %2554 = vmatprep.subr.bf16.mxu0 0
      %2555 = vmatpush1.bf16.msra.mxu0 0
      %2556 = vmatprep.subr.bf16.mxu0 0
      %2557 = vmatpush1.bf16.msra.mxu0 0
      %2558 = vmatprep.subr.bf16.mxu0 0
      %2559 = vmatpush1.bf16.msra.mxu0 0
      %2560 = vmatprep.subr.bf16.mxu0 0
      %2561 = vmatpush1.bf16.msra.mxu0 0
      %2562 = vmatprep.subr.bf16.mxu0 0
      %2563 = vmatpush1.bf16.msra.mxu0 %v2546
      %2564 = vmatprep.subr.bf16.mxu0 0
      %2565 = vmatpush2.bf16.msra.mxu0 0
      %2566 = vmatprep.subr.bf16.mxu0 0
      %2567 = vmatpush2.bf16.msra.mxu0 0
      %2568 = vmatprep.subr.bf16.mxu0 0
      %2569 = vmatpush2.bf16.msra.mxu0 0
      %2570 = vmatprep.subr.bf16.mxu0 0
      %2571 = vmatpush2.bf16.msra.mxu0 0
      %2572 = vmatprep.subr.bf16.mxu0 0
      %2573 = vmatpush2.bf16.msra.mxu0 0
      %2574 = vmatprep.subr.bf16.mxu0 0
      %2575 = vmatpush2.bf16.msra.mxu0 0
      %2576 = vmatprep.subr.bf16.mxu0 0
      %2577 = vmatpush2.bf16.msra.mxu0 0
      %2578 = vmatprep.subr.bf16.mxu0 0
      %2579 = vmatpush2.bf16.msra.mxu0 0
      %2580 = vmatprep.mubr.bf16.mxu0 0
      %2581 = vmatmul.mubr.bf16.gmra.mxu0 %v2534
      %v2582 = vpop.f32.mrf.mxu0
      %v2583 = vadd.f32 0.0, %v2582
      %v2584 = vpop.f32.mrf.mxu0
      %v2585 = vpop.f32.mrf.mxu0
      %v2586 = vadd.f32 0.0, %v2585
      %v2587 = vpop.f32.mrf.mxu0
      %2588 = vmatprep.mubr.bf16.mxu0 0
      %2589 = vmatmul.mubr.bf16.gmra.mxu0 %v2537
      %v2590 = vpop.f32.mrf.mxu0
      %v2591 = vadd.f32 0.0, %v2590
      %v2592 = vpop.f32.mrf.mxu0
      %v2593 = vpop.f32.mrf.mxu0
      %v2594 = vadd.f32 0.0, %v2593
      %v2595 = vpop.f32.mrf.mxu0
      %2596 = vmatprep.mubr.bf16.mxu0 0
      %2597 = vmatmul.mubr.bf16.gmra.mxu0 %v2540
      %v2598 = vpop.f32.mrf.mxu0
      %v2599 = vadd.f32 0.0, %v2598
      %v2600 = vpop.f32.mrf.mxu0
      %v2601 = vpop.f32.mrf.mxu0
      %v2602 = vadd.f32 0.0, %v2601
      %v2603 = vpop.f32.mrf.mxu0
      %2604 = vmatprep.mubr.bf16.mxu0 0
      %2605 = vmatmul.mubr.bf16.gmra.mxu0 %v2543
      %v2606 = vpop.f32.mrf.mxu0
      %v2607 = vadd.f32 0.0, %v2606
      %v2608 = vpop.f32.mrf.mxu0
      %v2609 = vpop.f32.mrf.mxu0
      %v2610 = vadd.f32 0.0, %v2609
      %v2611 = vpop.f32.mrf.mxu0
      %2612 = vdwg.mxu0
      %v2613 = vadd.f32 %v2445, %v2583
      %v2614 = vadd.f32 %v2446, %v2586
      %v2615 = vadd.f32 %v2447, %v2591
      %v2616 = vadd.f32 %v2448, %v2594
      %v2617 = vadd.f32 %v2449, %v2599
      %v2618 = vadd.f32 %v2450, %v2602
      %v2619 = vadd.f32 %v2451, %v2607
      %v2620 = vadd.f32 %v2452, %v2610
      %s2621 = scalar_lea.vmem %s2, 16
      %v2622 = vld [vmem:[%s2621] sm:$0xf]
      %v2631 = vunpack.c.l.b16 %v2287
      %v2632 = vunpack.c.l.b16 %v2288
      %v2633 = vunpack.c.l.b16 %v2289
      %v2634 = vunpack.c.l.b16 %v2290
      %v2635 = vunpack.c.l.b16 %v2291
      %v2636 = vunpack.c.l.b16 %v2292
      %v2637 = vunpack.c.l.b16 %v2293
      %v2638 = vunpack.c.l.b16 %v2454
      %v2639 = vpack.c.b16 %v2632, %v2631
      %v2640 = vpack.c.b16 %v2634, %v2633
      %v2641 = vpack.c.b16 %v2636, %v2635
      %v2642 = vpack.c.b16 %v2638, %v2637
      %v2644 = vsel %vm2057, %v2639, 0
      %v2647 = vsel %vm2057, %v2640, 0
      %v2650 = vsel %vm2057, %v2641, 0
      %v2653 = vsel %vm2057, %v2642, 0
      %v2656 = vsel %vm2070, %v2622, 0
      %2658 = vmatprep.subr.bf16.mxu0 0
      %2659 = vmatpush1.bf16.msra.mxu0 0
      %2660 = vmatprep.subr.bf16.mxu0 0
      %2661 = vmatpush1.bf16.msra.mxu0 0
      %2662 = vmatprep.subr.bf16.mxu0 0
      %2663 = vmatpush1.bf16.msra.mxu0 0
      %2664 = vmatprep.subr.bf16.mxu0 0
      %2665 = vmatpush1.bf16.msra.mxu0 0
      %2666 = vmatprep.subr.bf16.mxu0 0
      %2667 = vmatpush1.bf16.msra.mxu0 0
      %2668 = vmatprep.subr.bf16.mxu0 0
      %2669 = vmatpush1.bf16.msra.mxu0 0
      %2670 = vmatprep.subr.bf16.mxu0 0
      %2671 = vmatpush1.bf16.msra.mxu0 0
      %2672 = vmatprep.subr.bf16.mxu0 0
      %2673 = vmatpush1.bf16.msra.mxu0 %v2656
      %2674 = vmatprep.subr.bf16.mxu0 0
      %2675 = vmatpush2.bf16.msra.mxu0 0
      %2676 = vmatprep.subr.bf16.mxu0 0
      %2677 = vmatpush2.bf16.msra.mxu0 0
      %2678 = vmatprep.subr.bf16.mxu0 0
      %2679 = vmatpush2.bf16.msra.mxu0 0
      %2680 = vmatprep.subr.bf16.mxu0 0
      %2681 = vmatpush2.bf16.msra.mxu0 0
      %2682 = vmatprep.subr.bf16.mxu0 0
      %2683 = vmatpush2.bf16.msra.mxu0 0
      %2684 = vmatprep.subr.bf16.mxu0 0
      %2685 = vmatpush2.bf16.msra.mxu0 0
      %2686 = vmatprep.subr.bf16.mxu0 0
      %2687 = vmatpush2.bf16.msra.mxu0 0
      %2688 = vmatprep.subr.bf16.mxu0 0
      %2689 = vmatpush2.bf16.msra.mxu0 0
      %2690 = vmatprep.mubr.bf16.mxu0 0
      %2691 = vmatmul.mubr.bf16.gmra.mxu0 %v2644
      %v2692 = vpop.f32.mrf.mxu0
      %v2693 = vadd.f32 0.0, %v2692
      %v2694 = vpop.f32.mrf.mxu0
      %v2695 = vpop.f32.mrf.mxu0
      %v2696 = vadd.f32 0.0, %v2695
      %v2697 = vpop.f32.mrf.mxu0
      %2698 = vmatprep.mubr.bf16.mxu0 0
      %2699 = vmatmul.mubr.bf16.gmra.mxu0 %v2647
      %v2700 = vpop.f32.mrf.mxu0
      %v2701 = vadd.f32 0.0, %v2700
      %v2702 = vpop.f32.mrf.mxu0
      %v2703 = vpop.f32.mrf.mxu0
      %v2704 = vadd.f32 0.0, %v2703
      %v2705 = vpop.f32.mrf.mxu0
      %2706 = vmatprep.mubr.bf16.mxu0 0
      %2707 = vmatmul.mubr.bf16.gmra.mxu0 %v2650
      %v2708 = vpop.f32.mrf.mxu0
      %v2709 = vadd.f32 0.0, %v2708
      %v2710 = vpop.f32.mrf.mxu0
      %v2711 = vpop.f32.mrf.mxu0
      %v2712 = vadd.f32 0.0, %v2711
      %v2713 = vpop.f32.mrf.mxu0
      %2714 = vmatprep.mubr.bf16.mxu0 0
      %2715 = vmatmul.mubr.bf16.gmra.mxu0 %v2653
      %v2716 = vpop.f32.mrf.mxu0
      %v2717 = vadd.f32 0.0, %v2716
      %v2718 = vpop.f32.mrf.mxu0
      %v2719 = vpop.f32.mrf.mxu0
      %v2720 = vadd.f32 0.0, %v2719
      %v2721 = vpop.f32.mrf.mxu0
      %2722 = vdwg.mxu0
      %v2723 = vadd.f32 %v2613, %v2693
      %v2724 = vadd.f32 %v2614, %v2696
      %v2725 = vadd.f32 %v2615, %v2701
      %v2726 = vadd.f32 %v2616, %v2704
      %v2727 = vadd.f32 %v2617, %v2709
      %v2728 = vadd.f32 %v2618, %v2712
      %v2729 = vadd.f32 %v2619, %v2717
      %v2730 = vadd.f32 %v2620, %v2720
      %v2731 = vld [vmem:[#allocation3 + $0x8] sm:$0xf]
      %v2732 = vld [vmem:[#allocation3 + $0xc] sm:$0xf]
      %v2733 = vld [vmem:[#allocation3 + $0x10] sm:$0xf]
      %v2734 = vld [vmem:[#allocation3 + $0x14] sm:$0xf]
      %v2735 = vld [vmem:[#allocation3 + $0x18] sm:$0xf]
      %v2736 = vld [vmem:[#allocation3 + $0x1c] sm:$0xf]
      %v2737 = vld [vmem:[#allocation3 + $0x20] sm:$0xf]
      %v2738 = vld [vmem:[#allocation3 + $0x24] sm:$0xf]
      %v2739 = vld [vmem:[#allocation3 + $0x28] sm:$0x1]
      %v2740 = vsel %vm910, %v2731, 0
      %v2741 = vsel %vm911, %v2732, 0
      %v2742 = vsel %vm912, %v2733, 0
      %v2743 = vsel %vm913, %v2734, 0
      %v2744 = vsel %vm914, %v2735, 0
      %v2745 = vsel %vm915, %v2736, 0
      %v2746 = vsel %vm916, %v2737, 0
      %v2747 = vsel %vm917, %v2738, 0
      %v2748 = vsel %vm918, %v2739, 0
      %s2749 = scalar_lea.vmem %s2, 20
      %v2750 = vld [vmem:[%s2749] sm:$0xf]
      %v2760 = vunpack.c.l.b16 %v2740
      %v2761 = vunpack.c.l.b16 %v2741
      %v2762 = vunpack.c.l.b16 %v2742
      %v2763 = vunpack.c.l.b16 %v2743
      %v2764 = vunpack.c.l.b16 %v2744
      %v2765 = vunpack.c.l.b16 %v2745
      %v2766 = vunpack.c.l.b16 %v2746
      %v2767 = vunpack.c.l.b16 %v2747
      %v2768 = vunpack.c.l.b16 %v2748
      %v2769 = vpack.c.b16 %v2761, %v2760
      %v2770 = vpack.c.b16 %v2763, %v2762
      %v2771 = vpack.c.b16 %v2765, %v2764
      %v2772 = vpack.c.b16 %v2767, %v2766
      %v2773 = vpack.c.b16 %v2768, %v2768
      %v2775 = vshrl.u32 %v2769, 16
      %v2777 = vshll.u32 %v2769, 16
      %v2779 = vrot.slane %v2777, 1
      %v2780 = vor.u32 %v2775, %v2779
      %v2782 = vshll.u32 %v2770, 16
      %v2784 = vrot.slane %v2782, 1
      %v2785 = vsel %vm953, %v2780, %v2784
      %v2786 = vshrl.u32 %v2770, 16
      %v2788 = vor.u32 %v2786, %v2784
      %v2790 = vshll.u32 %v2771, 16
      %v2792 = vrot.slane %v2790, 1
      %v2793 = vsel %vm953, %v2788, %v2792
      %v2794 = vshrl.u32 %v2771, 16
      %v2796 = vor.u32 %v2794, %v2792
      %v2798 = vshll.u32 %v2772, 16
      %v2800 = vrot.slane %v2798, 1
      %v2801 = vsel %vm953, %v2796, %v2800
      %v2802 = vshrl.u32 %v2772, 16
      %v2804 = vor.u32 %v2802, %v2800
      %v2806 = vshll.u32 %v2773, 16
      %v2808 = vrot.slane %v2806, 1
      %v2809 = vsel %vm953, %v2804, %v2808
      %v2811 = vsel %vm2057, %v2785, 0
      %v2814 = vsel %vm2057, %v2793, 0
      %v2817 = vsel %vm2057, %v2801, 0
      %v2820 = vsel %vm2057, %v2809, 0
      %v2823 = vsel %vm2070, %v2750, 0
      %2825 = vmatprep.subr.bf16.mxu0 0
      %2826 = vmatpush1.bf16.msra.mxu0 0
      %2827 = vmatprep.subr.bf16.mxu0 0
      %2828 = vmatpush1.bf16.msra.mxu0 0
      %2829 = vmatprep.subr.bf16.mxu0 0
      %2830 = vmatpush1.bf16.msra.mxu0 0
      %2831 = vmatprep.subr.bf16.mxu0 0
      %2832 = vmatpush1.bf16.msra.mxu0 0
      %2833 = vmatprep.subr.bf16.mxu0 0
      %2834 = vmatpush1.bf16.msra.mxu0 0
      %2835 = vmatprep.subr.bf16.mxu0 0
      %2836 = vmatpush1.bf16.msra.mxu0 0
      %2837 = vmatprep.subr.bf16.mxu0 0
      %2838 = vmatpush1.bf16.msra.mxu0 0
      %2839 = vmatprep.subr.bf16.mxu0 0
      %2840 = vmatpush1.bf16.msra.mxu0 %v2823
      %2841 = vmatprep.subr.bf16.mxu0 0
      %2842 = vmatpush2.bf16.msra.mxu0 0
      %2843 = vmatprep.subr.bf16.mxu0 0
      %2844 = vmatpush2.bf16.msra.mxu0 0
      %2845 = vmatprep.subr.bf16.mxu0 0
      %2846 = vmatpush2.bf16.msra.mxu0 0
      %2847 = vmatprep.subr.bf16.mxu0 0
      %2848 = vmatpush2.bf16.msra.mxu0 0
      %2849 = vmatprep.subr.bf16.mxu0 0
      %2850 = vmatpush2.bf16.msra.mxu0 0
      %2851 = vmatprep.subr.bf16.mxu0 0
      %2852 = vmatpush2.bf16.msra.mxu0 0
      %2853 = vmatprep.subr.bf16.mxu0 0
      %2854 = vmatpush2.bf16.msra.mxu0 0
      %2855 = vmatprep.subr.bf16.mxu0 0
      %2856 = vmatpush2.bf16.msra.mxu0 0
      %2857 = vmatprep.mubr.bf16.mxu0 0
      %2858 = vmatmul.mubr.bf16.gmra.mxu0 %v2811
      %v2859 = vpop.f32.mrf.mxu0
      %v2860 = vadd.f32 0.0, %v2859
      %v2861 = vpop.f32.mrf.mxu0
      %v2862 = vpop.f32.mrf.mxu0
      %v2863 = vadd.f32 0.0, %v2862
      %v2864 = vpop.f32.mrf.mxu0
      %2865 = vmatprep.mubr.bf16.mxu0 0
      %2866 = vmatmul.mubr.bf16.gmra.mxu0 %v2814
      %v2867 = vpop.f32.mrf.mxu0
      %v2868 = vadd.f32 0.0, %v2867
      %v2869 = vpop.f32.mrf.mxu0
      %v2870 = vpop.f32.mrf.mxu0
      %v2871 = vadd.f32 0.0, %v2870
      %v2872 = vpop.f32.mrf.mxu0
      %2873 = vmatprep.mubr.bf16.mxu0 0
      %2874 = vmatmul.mubr.bf16.gmra.mxu0 %v2817
      %v2875 = vpop.f32.mrf.mxu0
      %v2876 = vadd.f32 0.0, %v2875
      %v2877 = vpop.f32.mrf.mxu0
      %v2878 = vpop.f32.mrf.mxu0
      %v2879 = vadd.f32 0.0, %v2878
      %v2880 = vpop.f32.mrf.mxu0
      %2881 = vmatprep.mubr.bf16.mxu0 0
      %2882 = vmatmul.mubr.bf16.gmra.mxu0 %v2820
      %v2883 = vpop.f32.mrf.mxu0
      %v2884 = vadd.f32 0.0, %v2883
      %v2885 = vpop.f32.mrf.mxu0
      %v2886 = vpop.f32.mrf.mxu0
      %v2887 = vadd.f32 0.0, %v2886
      %v2888 = vpop.f32.mrf.mxu0
      %2889 = vdwg.mxu0
      %v2890 = vadd.f32 %v2723, %v2860
      %v2891 = vadd.f32 %v2724, %v2863
      %v2892 = vadd.f32 %v2725, %v2868
      %v2893 = vadd.f32 %v2726, %v2871
      %v2894 = vadd.f32 %v2727, %v2876
      %v2895 = vadd.f32 %v2728, %v2879
      %v2896 = vadd.f32 %v2729, %v2884
      %v2897 = vadd.f32 %v2730, %v2887
      %v2898 = vld [vmem:[#allocation3 + $0x8] sm:$0x8]
      %v2899 = vld [vmem:[#allocation3 + $0x28] sm:$0xf]
      %v2900 = vsel %vm524, %v2898, 0
      %v2901 = vsel %vm525, %v2732, 0
      %v2902 = vsel %vm526, %v2733, 0
      %v2903 = vsel %vm527, %v2734, 0
      %v2904 = vsel %vm528, %v2735, 0
      %v2905 = vsel %vm529, %v2736, 0
      %v2906 = vsel %vm530, %v2737, 0
      %v2907 = vsel %vm531, %v2738, 0
      %v2908 = vsel %vm532, %v2899, 0
      %s2909 = scalar_lea.vmem %s2, 24
      %v2910 = vld [vmem:[%s2909] sm:$0xf]
      %v2920 = vunpack.c.l.b16 %v2900
      %v2921 = vunpack.c.l.b16 %v2901
      %v2922 = vunpack.c.l.b16 %v2902
      %v2923 = vunpack.c.l.b16 %v2903
      %v2924 = vunpack.c.l.b16 %v2904
      %v2925 = vunpack.c.l.b16 %v2905
      %v2926 = vunpack.c.l.b16 %v2906
      %v2927 = vunpack.c.l.b16 %v2907
      %v2928 = vunpack.c.l.b16 %v2908
      %v2929 = vpack.c.b16 %v2921, %v2920
      %v2930 = vpack.c.b16 %v2923, %v2922
      %v2931 = vpack.c.b16 %v2925, %v2924
      %v2932 = vpack.c.b16 %v2927, %v2926
      %v2933 = vpack.c.b16 %v2928, %v2928
      %v2935 = vshrl.u32 %v2929, 16
      %v2937 = vrot.slane %v2935, 3
      %v2938 = vshll.u32 %v2929, 16
      %v2940 = vrot.slane %v2938, 4
      %v2941 = vor.u32 %v2937, %v2940
      %v2943 = vshrl.u32 %v2930, 16
      %v2945 = vrot.slane %v2943, 3
      %v2946 = vshll.u32 %v2930, 16
      %v2948 = vrot.slane %v2946, 4
      %v2949 = vor.u32 %v2945, %v2948
      %v2950 = vsel %vm670, %v2941, %v2949
      %v2952 = vshrl.u32 %v2931, 16
      %v2954 = vrot.slane %v2952, 3
      %v2955 = vshll.u32 %v2931, 16
      %v2957 = vrot.slane %v2955, 4
      %v2958 = vor.u32 %v2954, %v2957
      %v2959 = vsel %vm670, %v2949, %v2958
      %v2961 = vshrl.u32 %v2932, 16
      %v2963 = vrot.slane %v2961, 3
      %v2964 = vshll.u32 %v2932, 16
      %v2966 = vrot.slane %v2964, 4
      %v2967 = vor.u32 %v2963, %v2966
      %v2968 = vsel %vm670, %v2958, %v2967
      %v2970 = vshrl.u32 %v2933, 16
      %v2972 = vrot.slane %v2970, 3
      %v2973 = vshll.u32 %v2933, 16
      %v2975 = vrot.slane %v2973, 4
      %v2976 = vor.u32 %v2972, %v2975
      %v2977 = vsel %vm670, %v2967, %v2976
      %v2979 = vsel %vm2057, %v2950, 0
      %v2982 = vsel %vm2057, %v2959, 0
      %v2985 = vsel %vm2057, %v2968, 0
      %v2988 = vsel %vm2057, %v2977, 0
      %v2991 = vsel %vm2070, %v2910, 0
      %2993 = vmatprep.subr.bf16.mxu0 0
      %2994 = vmatpush1.bf16.msra.mxu0 0
      %2995 = vmatprep.subr.bf16.mxu0 0
      %2996 = vmatpush1.bf16.msra.mxu0 0
      %2997 = vmatprep.subr.bf16.mxu0 0
      %2998 = vmatpush1.bf16.msra.mxu0 0
      %2999 = vmatprep.subr.bf16.mxu0 0
      %3000 = vmatpush1.bf16.msra.mxu0 0
      %3001 = vmatprep.subr.bf16.mxu0 0
      %3002 = vmatpush1.bf16.msra.mxu0 0
      %3003 = vmatprep.subr.bf16.mxu0 0
      %3004 = vmatpush1.bf16.msra.mxu0 0
      %3005 = vmatprep.subr.bf16.mxu0 0
      %3006 = vmatpush1.bf16.msra.mxu0 0
      %3007 = vmatprep.subr.bf16.mxu0 0
      %3008 = vmatpush1.bf16.msra.mxu0 %v2991
      %3009 = vmatprep.subr.bf16.mxu0 0
      %3010 = vmatpush2.bf16.msra.mxu0 0
      %3011 = vmatprep.subr.bf16.mxu0 0
      %3012 = vmatpush2.bf16.msra.mxu0 0
      %3013 = vmatprep.subr.bf16.mxu0 0
      %3014 = vmatpush2.bf16.msra.mxu0 0
      %3015 = vmatprep.subr.bf16.mxu0 0
      %3016 = vmatpush2.bf16.msra.mxu0 0
      %3017 = vmatprep.subr.bf16.mxu0 0
      %3018 = vmatpush2.bf16.msra.mxu0 0
      %3019 = vmatprep.subr.bf16.mxu0 0
      %3020 = vmatpush2.bf16.msra.mxu0 0
      %3021 = vmatprep.subr.bf16.mxu0 0
      %3022 = vmatpush2.bf16.msra.mxu0 0
      %3023 = vmatprep.subr.bf16.mxu0 0
      %3024 = vmatpush2.bf16.msra.mxu0 0
      %3025 = vmatprep.mubr.bf16.mxu0 0
      %3026 = vmatmul.mubr.bf16.gmra.mxu0 %v2979
      %v3027 = vpop.f32.mrf.mxu0
      %v3028 = vadd.f32 0.0, %v3027
      %v3029 = vpop.f32.mrf.mxu0
      %v3030 = vpop.f32.mrf.mxu0
      %v3031 = vadd.f32 0.0, %v3030
      %v3032 = vpop.f32.mrf.mxu0
      %3033 = vmatprep.mubr.bf16.mxu0 0
      %3034 = vmatmul.mubr.bf16.gmra.mxu0 %v2982
      %v3035 = vpop.f32.mrf.mxu0
      %v3036 = vadd.f32 0.0, %v3035
      %v3037 = vpop.f32.mrf.mxu0
      %v3038 = vpop.f32.mrf.mxu0
      %v3039 = vadd.f32 0.0, %v3038
      %v3040 = vpop.f32.mrf.mxu0
      %3041 = vmatprep.mubr.bf16.mxu0 0
      %3042 = vmatmul.mubr.bf16.gmra.mxu0 %v2985
      %v3043 = vpop.f32.mrf.mxu0
      %v3044 = vadd.f32 0.0, %v3043
      %v3045 = vpop.f32.mrf.mxu0
      %v3046 = vpop.f32.mrf.mxu0
      %v3047 = vadd.f32 0.0, %v3046
      %v3048 = vpop.f32.mrf.mxu0
      %3049 = vmatprep.mubr.bf16.mxu0 0
      %3050 = vmatmul.mubr.bf16.gmra.mxu0 %v2988
      %v3051 = vpop.f32.mrf.mxu0
      %v3052 = vadd.f32 0.0, %v3051
      %v3053 = vpop.f32.mrf.mxu0
      %v3054 = vpop.f32.mrf.mxu0
      %v3055 = vadd.f32 0.0, %v3054
      %v3056 = vpop.f32.mrf.mxu0
      %3057 = vdwg.mxu0
      %v3058 = vadd.f32 %v2890, %v3028
      %v3059 = vadd.f32 %v2891, %v3031
      %v3060 = vadd.f32 %v2892, %v3036
      %v3061 = vadd.f32 %v2893, %v3039
      %v3062 = vadd.f32 %v2894, %v3044
      %v3063 = vadd.f32 %v2895, %v3047
      %v3064 = vadd.f32 %v2896, %v3052
      %v3065 = vadd.f32 %v2897, %v3055
      %s3066 = scalar_lea.vmem %s2, 28
      %v3067 = vld [vmem:[%s3066] sm:$0xf]
      %v3076 = vunpack.c.l.b16 %v2732
      %v3077 = vunpack.c.l.b16 %v2733
      %v3078 = vunpack.c.l.b16 %v2734
      %v3079 = vunpack.c.l.b16 %v2735
      %v3080 = vunpack.c.l.b16 %v2736
      %v3081 = vunpack.c.l.b16 %v2737
      %v3082 = vunpack.c.l.b16 %v2738
      %v3083 = vunpack.c.l.b16 %v2899
      %v3084 = vpack.c.b16 %v3077, %v3076
      %v3085 = vpack.c.b16 %v3079, %v3078
      %v3086 = vpack.c.b16 %v3081, %v3080
      %v3087 = vpack.c.b16 %v3083, %v3082
      %v3089 = vsel %vm2057, %v3084, 0
      %v3092 = vsel %vm2057, %v3085, 0
      %v3095 = vsel %vm2057, %v3086, 0
      %v3098 = vsel %vm2057, %v3087, 0
      %v3101 = vsel %vm2070, %v3067, 0
      %3103 = vmatprep.subr.bf16.mxu0 0
      %3104 = vmatpush1.bf16.msra.mxu0 0
      %3105 = vmatprep.subr.bf16.mxu0 0
      %3106 = vmatpush1.bf16.msra.mxu0 0
      %3107 = vmatprep.subr.bf16.mxu0 0
      %3108 = vmatpush1.bf16.msra.mxu0 0
      %3109 = vmatprep.subr.bf16.mxu0 0
      %3110 = vmatpush1.bf16.msra.mxu0 0
      %3111 = vmatprep.subr.bf16.mxu0 0
      %3112 = vmatpush1.bf16.msra.mxu0 0
      %3113 = vmatprep.subr.bf16.mxu0 0
      %3114 = vmatpush1.bf16.msra.mxu0 0
      %3115 = vmatprep.subr.bf16.mxu0 0
      %3116 = vmatpush1.bf16.msra.mxu0 0
      %3117 = vmatprep.subr.bf16.mxu0 0
      %3118 = vmatpush1.bf16.msra.mxu0 %v3101
      %3119 = vmatprep.subr.bf16.mxu0 0
      %3120 = vmatpush2.bf16.msra.mxu0 0
      %3121 = vmatprep.subr.bf16.mxu0 0
      %3122 = vmatpush2.bf16.msra.mxu0 0
      %3123 = vmatprep.subr.bf16.mxu0 0
      %3124 = vmatpush2.bf16.msra.mxu0 0
      %3125 = vmatprep.subr.bf16.mxu0 0
      %3126 = vmatpush2.bf16.msra.mxu0 0
      %3127 = vmatprep.subr.bf16.mxu0 0
      %3128 = vmatpush2.bf16.msra.mxu0 0
      %3129 = vmatprep.subr.bf16.mxu0 0
      %3130 = vmatpush2.bf16.msra.mxu0 0
      %3131 = vmatprep.subr.bf16.mxu0 0
      %3132 = vmatpush2.bf16.msra.mxu0 0
      %3133 = vmatprep.subr.bf16.mxu0 0
      %3134 = vmatpush2.bf16.msra.mxu0 0
      %3135 = vmatprep.mubr.bf16.mxu0 0
      %3136 = vmatmul.mubr.bf16.gmra.mxu0 %v3089
      %v3137 = vpop.f32.mrf.mxu0
      %v3138 = vadd.f32 0.0, %v3137
      %v3139 = vpop.f32.mrf.mxu0
      %v3140 = vpop.f32.mrf.mxu0
      %v3141 = vadd.f32 0.0, %v3140
      %v3142 = vpop.f32.mrf.mxu0
      %3143 = vmatprep.mubr.bf16.mxu0 0
      %3144 = vmatmul.mubr.bf16.gmra.mxu0 %v3092
      %v3145 = vpop.f32.mrf.mxu0
      %v3146 = vadd.f32 0.0, %v3145
      %v3147 = vpop.f32.mrf.mxu0
      %v3148 = vpop.f32.mrf.mxu0
      %v3149 = vadd.f32 0.0, %v3148
      %v3150 = vpop.f32.mrf.mxu0
      %3151 = vmatprep.mubr.bf16.mxu0 0
      %3152 = vmatmul.mubr.bf16.gmra.mxu0 %v3095
      %v3153 = vpop.f32.mrf.mxu0
      %v3154 = vadd.f32 0.0, %v3153
      %v3155 = vpop.f32.mrf.mxu0
      %v3156 = vpop.f32.mrf.mxu0
      %v3157 = vadd.f32 0.0, %v3156
      %v3158 = vpop.f32.mrf.mxu0
      %3159 = vmatprep.mubr.bf16.mxu0 0
      %3160 = vmatmul.mubr.bf16.gmra.mxu0 %v3098
      %v3161 = vpop.f32.mrf.mxu0
      %v3162 = vadd.f32 0.0, %v3161
      %v3163 = vpop.f32.mrf.mxu0
      %v3164 = vpop.f32.mrf.mxu0
      %v3165 = vadd.f32 0.0, %v3164
      %v3166 = vpop.f32.mrf.mxu0
      %3167 = vdwg.mxu0
      %v3168 = vadd.f32 %v3058, %v3138
      %v3169 = vadd.f32 %v3059, %v3141
      %v3170 = vadd.f32 %v3060, %v3146
      %v3171 = vadd.f32 %v3061, %v3149
      %v3172 = vadd.f32 %v3062, %v3154
      %v3173 = vadd.f32 %v3063, %v3157
      %v3174 = vadd.f32 %v3064, %v3162
      %v3175 = vadd.f32 %v3065, %v3165
      %v3176 = vld [vmem:[#allocation3 + $0xc] sm:$0xf]
      %v3177 = vld [vmem:[#allocation3 + $0x10] sm:$0xf]
      %v3178 = vld [vmem:[#allocation3 + $0x14] sm:$0xf]
      %v3179 = vld [vmem:[#allocation3 + $0x18] sm:$0xf]
      %v3180 = vld [vmem:[#allocation3 + $0x1c] sm:$0xf]
      %v3181 = vld [vmem:[#allocation3 + $0x20] sm:$0xf]
      %v3182 = vld [vmem:[#allocation3 + $0x24] sm:$0xf]
      %v3183 = vld [vmem:[#allocation3 + $0x28] sm:$0xf]
      %v3184 = vld [vmem:[#allocation3 + $0x2c] sm:$0x1]
      %v3185 = vsel %vm910, %v3176, 0
      %v3186 = vsel %vm911, %v3177, 0
      %v3187 = vsel %vm912, %v3178, 0
      %v3188 = vsel %vm913, %v3179, 0
      %v3189 = vsel %vm914, %v3180, 0
      %v3190 = vsel %vm915, %v3181, 0
      %v3191 = vsel %vm916, %v3182, 0
      %v3192 = vsel %vm917, %v3183, 0
      %v3193 = vsel %vm918, %v3184, 0
      %s3194 = scalar_lea.vmem %s2, 32
      %v3195 = vld [vmem:[%s3194] sm:$0xf]
      %v3205 = vunpack.c.l.b16 %v3185
      %v3206 = vunpack.c.l.b16 %v3186
      %v3207 = vunpack.c.l.b16 %v3187
      %v3208 = vunpack.c.l.b16 %v3188
      %v3209 = vunpack.c.l.b16 %v3189
      %v3210 = vunpack.c.l.b16 %v3190
      %v3211 = vunpack.c.l.b16 %v3191
      %v3212 = vunpack.c.l.b16 %v3192
      %v3213 = vunpack.c.l.b16 %v3193
      %v3214 = vpack.c.b16 %v3206, %v3205
      %v3215 = vpack.c.b16 %v3208, %v3207
      %v3216 = vpack.c.b16 %v3210, %v3209
      %v3217 = vpack.c.b16 %v3212, %v3211
      %v3218 = vpack.c.b16 %v3213, %v3213
      %v3220 = vshrl.u32 %v3214, 16
      %v3222 = vshll.u32 %v3214, 16
      %v3224 = vrot.slane %v3222, 1
      %v3225 = vor.u32 %v3220, %v3224
      %v3227 = vshll.u32 %v3215, 16
      %v3229 = vrot.slane %v3227, 1
      %v3230 = vsel %vm953, %v3225, %v3229
      %v3231 = vshrl.u32 %v3215, 16
      %v3233 = vor.u32 %v3231, %v3229
      %v3235 = vshll.u32 %v3216, 16
      %v3237 = vrot.slane %v3235, 1
      %v3238 = vsel %vm953, %v3233, %v3237
      %v3239 = vshrl.u32 %v3216, 16
      %v3241 = vor.u32 %v3239, %v3237
      %v3243 = vshll.u32 %v3217, 16
      %v3245 = vrot.slane %v3243, 1
      %v3246 = vsel %vm953, %v3241, %v3245
      %v3247 = vshrl.u32 %v3217, 16
      %v3249 = vor.u32 %v3247, %v3245
      %v3251 = vshll.u32 %v3218, 16
      %v3253 = vrot.slane %v3251, 1
      %v3254 = vsel %vm953, %v3249, %v3253
      %v3256 = vsel %vm2057, %v3230, 0
      %v3259 = vsel %vm2057, %v3238, 0
      %v3262 = vsel %vm2057, %v3246, 0
      %v3265 = vsel %vm2057, %v3254, 0
      %v3268 = vsel %vm2070, %v3195, 0
      %3270 = vmatprep.subr.bf16.mxu0 0
      %3271 = vmatpush1.bf16.msra.mxu0 0
      %3272 = vmatprep.subr.bf16.mxu0 0
      %3273 = vmatpush1.bf16.msra.mxu0 0
      %3274 = vmatprep.subr.bf16.mxu0 0
      %3275 = vmatpush1.bf16.msra.mxu0 0
      %3276 = vmatprep.subr.bf16.mxu0 0
      %3277 = vmatpush1.bf16.msra.mxu0 0
      %3278 = vmatprep.subr.bf16.mxu0 0
      %3279 = vmatpush1.bf16.msra.mxu0 0
      %3280 = vmatprep.subr.bf16.mxu0 0
      %3281 = vmatpush1.bf16.msra.mxu0 0
      %3282 = vmatprep.subr.bf16.mxu0 0
      %3283 = vmatpush1.bf16.msra.mxu0 0
      %3284 = vmatprep.subr.bf16.mxu0 0
      %3285 = vmatpush1.bf16.msra.mxu0 %v3268
      %3286 = vmatprep.subr.bf16.mxu0 0
      %3287 = vmatpush2.bf16.msra.mxu0 0
      %3288 = vmatprep.subr.bf16.mxu0 0
      %3289 = vmatpush2.bf16.msra.mxu0 0
      %3290 = vmatprep.subr.bf16.mxu0 0
      %3291 = vmatpush2.bf16.msra.mxu0 0
      %3292 = vmatprep.subr.bf16.mxu0 0
      %3293 = vmatpush2.bf16.msra.mxu0 0
      %3294 = vmatprep.subr.bf16.mxu0 0
      %3295 = vmatpush2.bf16.msra.mxu0 0
      %3296 = vmatprep.subr.bf16.mxu0 0
      %3297 = vmatpush2.bf16.msra.mxu0 0
      %3298 = vmatprep.subr.bf16.mxu0 0
      %3299 = vmatpush2.bf16.msra.mxu0 0
      %3300 = vmatprep.subr.bf16.mxu0 0
      %3301 = vmatpush2.bf16.msra.mxu0 0
      %3302 = vmatprep.mubr.bf16.mxu0 0
      %3303 = vmatmul.mubr.bf16.gmra.mxu0 %v3256
      %v3304 = vpop.f32.mrf.mxu0
      %v3305 = vadd.f32 0.0, %v3304
      %v3306 = vpop.f32.mrf.mxu0
      %v3307 = vpop.f32.mrf.mxu0
      %v3308 = vadd.f32 0.0, %v3307
      %v3309 = vpop.f32.mrf.mxu0
      %3310 = vmatprep.mubr.bf16.mxu0 0
      %3311 = vmatmul.mubr.bf16.gmra.mxu0 %v3259
      %v3312 = vpop.f32.mrf.mxu0
      %v3313 = vadd.f32 0.0, %v3312
      %v3314 = vpop.f32.mrf.mxu0
      %v3315 = vpop.f32.mrf.mxu0
      %v3316 = vadd.f32 0.0, %v3315
      %v3317 = vpop.f32.mrf.mxu0
      %3318 = vmatprep.mubr.bf16.mxu0 0
      %3319 = vmatmul.mubr.bf16.gmra.mxu0 %v3262
      %v3320 = vpop.f32.mrf.mxu0
      %v3321 = vadd.f32 0.0, %v3320
      %v3322 = vpop.f32.mrf.mxu0
      %v3323 = vpop.f32.mrf.mxu0
      %v3324 = vadd.f32 0.0, %v3323
      %v3325 = vpop.f32.mrf.mxu0
      %3326 = vmatprep.mubr.bf16.mxu0 0
      %3327 = vmatmul.mubr.bf16.gmra.mxu0 %v3265
      %v3328 = vpop.f32.mrf.mxu0
      %v3329 = vadd.f32 0.0, %v3328
      %v3330 = vpop.f32.mrf.mxu0
      %v3331 = vpop.f32.mrf.mxu0
      %v3332 = vadd.f32 0.0, %v3331
      %v3333 = vpop.f32.mrf.mxu0
      %3334 = vdwg.mxu0
      %v3335 = vadd.f32 %v3168, %v3305
      %v3336 = vadd.f32 %v3169, %v3308
      %v3337 = vadd.f32 %v3170, %v3313
      %v3338 = vadd.f32 %v3171, %v3316
      %v3339 = vadd.f32 %v3172, %v3321
      %v3340 = vadd.f32 %v3173, %v3324
      %v3341 = vadd.f32 %v3174, %v3329
      %v3342 = vadd.f32 %v3175, %v3332
      %v3343 = vmax.f32 %v3335, 0.0
      %v3344 = vmax.f32 %v3336, 0.0
      %v3345 = vmax.f32 %v3337, 0.0
      %v3346 = vmax.f32 %v3338, 0.0
      %v3347 = vmax.f32 %v3339, 0.0
      %v3348 = vmax.f32 %v3340, 0.0
      %v3349 = vmax.f32 %v3341, 0.0
      %v3350 = vmax.f32 %v3342, 0.0
      %3351 = vst.msk [vmem:[%s170] sm:$0xff] %vm2057, %v3343
      %3352 = vst.msk [vmem:[%s170 + $0x8] sm:$0xff] %vm2057, %v3344
      %3353 = vst.msk [vmem:[%s170 + $0x10] sm:$0xff] %vm2057, %v3345
      %3354 = vst.msk [vmem:[%s170 + $0x18] sm:$0xff] %vm2057, %v3346
      %3355 = vst.msk [vmem:[%s170 + $0x20] sm:$0xff] %vm2057, %v3347
      %3356 = vst.msk [vmem:[%s170 + $0x28] sm:$0xff] %vm2057, %v3348
      %3357 = vst.msk [vmem:[%s170 + $0x30] sm:$0xff] %vm2057, %v3349
      %3358 = vst.msk [vmem:[%s170 + $0x38] sm:$0xff] %vm2057, %v3350
      %p3359 = scmp.lt.s32.totalorder %s14, 1
      %s3360 = scalar_select %p3359, %s14, 1
      %s3361 = smul.addr %s3360, 8
      %s3362 = smul.addr %s3361, 8
      %s3363 = scalar_lea.vmem %s3, %s3362
      // Predicated region
      $region33: #{down_forward.1} parent=31 // pred_check
        %p3364 = pneg %p100
      $region34: #{down_forward.1} parent=31 // pred_check_branch
        %3366 = sbr.rel (%p3364) target = $region36
      $region35: #{down_forward.1} parent=31 // pred_region
        _
      $region36: #{down_forward.1} parent=31 // pred_fallthru
        _
    $region32: #{down_forward.1} parent=5 // pred_fallthru
      _
    %p3367 = scmp.le.s32.totalorder 2, %s9
    // Predicated region
    $region37: #{down_forward.1} parent=5 // pred_check
      %p3368 = pneg %p3367
    $region38: #{down_forward.1} parent=5 // pred_check_branch
      %3370 = sbr.rel (%p3368) target = $region40
    $region39: #{down_forward.1} parent=5 // pred_region
      %s3371 = ssub.s32 %s9, 2
      // Predicated region
      $region41: #{down_forward.1} parent=39 // pred_check
        %p3372 = pneg %p106
      $region42: #{down_forward.1} parent=39 // pred_check_branch
        %3374 = sbr.rel (%p3372) target = $region44
      $region43: #{down_forward.1} parent=39 // pred_region
        %p3375 = scmp.lt.s32.totalorder %s15, 1
        %s3376 = scalar_select %p3375, %s15, 1
        %s3377 = smul.addr %s3376, 8
        %s3378 = smul.addr %s3377, 8
        %s3379 = scalar_lea.vmem %s3, %s3378
      $region44: #{down_forward.1} parent=39 // pred_fallthru
        _
    $region40: #{down_forward.1} parent=5 // pred_fallthru
      _
  $region6: #{down_forward.1} parent=0 // loop_footer
    %s13 = sadd.s32 1, %s9
  $region7: #{down_forward.1} parent=0 // loop_footer_branch
    %8 = sbr.rel target = $region3
  $region8: #{down_forward.1} parent=0 // loop_exit
    _

</llo_original>
